<compile_context>
chip_gen: v7x
topology: tpu7x:2x2x1
jax: 0.10.0
libtpu: 0.0.40
codegen_flags: <defaults>
</compile_context>

<pallas_src>
import functools

import jax
import jax.numpy as jnp
from jax.experimental import pallas as pl
from jax.experimental.pallas import tpu as pltpu


def _round_up(x, m):
    return (x + m - 1) // m * m


def _fused_conv_kernel(x2_ref, x6_ref, x5_ref, mask_ref,
                       w2_ref, b2_ref, w1_ref, b1_ref,
                       out_ref, stack_ref, *, Wp, C_in, K):
    """Fused: out = conv1(relu(conv2(x2)+x6)) + x5, all on padded canvases."""
    L = x2_ref.shape[1]          # flattened padded spatial, multiple of 128
    PAD = (K - 1) // 2
    C_out = b2_ref.shape[0]

    def conv(x_canvas, w_ref, b_ref):
        # (1) kw sub-stack: K small lane-rolls of the full canvas, stored as
        #     sublane-aligned C_in-row blocks (K*C_in rows total).
        for kw in range(K):
            s = kw - PAD
            if s == 0:
                shifted = x_canvas
            else:
                shifted = pltpu.roll(x_canvas, shift=(-s) % L, axis=1)
            stack_ref[kw * C_in:(kw + 1) * C_in, :] = shifted

        # (2) kh factored out: per-row-offset partial matmul (contraction
        #     K*C_in = 112), rolled by the row offset and accumulated in f32.
        acc = None
        for kh in range(K):
            w_kh = w_ref[kh * C_out:(kh + 1) * C_out, :]      # (C_out, K*C_in)
            partial = jnp.dot(w_kh, stack_ref[...],
                              preferred_element_type=jnp.float32)
            dh = (kh - PAD) * Wp
            if dh != 0:
                partial = pltpu.roll(partial, shift=(-dh) % L, axis=1)
            acc = partial if acc is None else acc + partial
        return acc + b_ref[...]                                # (C_out,1) bcast

    v1 = conv(x2_ref[...], w2_ref, b2_ref)            # conv2(x2)
    v3 = jnp.maximum(v1 + x6_ref[...], 0.0)           # relu(v1 + x6)
    v3 = v3 * mask_ref[...]                            # re-zero the halo
    v4 = conv(v3, w1_ref, b1_ref)                      # conv1(v3)
    out_ref[...] = v4 + x5_ref[...]                    # + x5 (lane-dense store)


def model_forward(x6, x2, x5, params):
    """Forward of the PyTorch Model.  Inputs are NCHW (1, C, H, W) float32."""
    N, C, H, W = x2.shape
    assert N == 1
    K = params["w1"].shape[-1]
    PAD = (K - 1) // 2

    # Lane-dense padded canvas: Wp multiple of 16, Hp multiple of 8 so the
    # flattened length L = Hp*Wp is a multiple of 128 (full lane tiles).
    Wp = _round_up(W + 2 * PAD, 16)
    Hp = _round_up(H + 2 * PAD, 8)
    L = Hp * Wp
    # The circular rolls are only exact for interior outputs because the halo
    # is >= PAD wide on every side; protect that invariant.
    assert Wp >= W + 2 * PAD and Hp >= H + 2 * PAD
    assert L % 128 == 0

    def to_canvas(x_chw):
        xp = jnp.pad(x_chw, ((0, 0), (PAD, Hp - H - PAD), (PAD, Wp - W - PAD)))
        return xp.reshape(x_chw.shape[0], L)

    x2c = to_canvas(x2[0])
    x6c = to_canvas(x6[0])
    x5c = to_canvas(x5[0])
    maskc = to_canvas(jnp.ones((1, H, W), jnp.float32))   # 1 inside, 0 in halo

    def prep_w(w):
        # (C_out, C_in, K, K) -> (K*C_out, K*C_in): per-kh slabs, kw-major,
        # so slab kh satisfies W_kh[o, kw*C_in + c] = w[o, c, kh, kw].
        co, ci, kh, kw = w.shape
        return jnp.transpose(w, (2, 0, 3, 1)).reshape(kh * co, kw * ci)

    w2m = prep_w(params["w2"])
    w1m = prep_w(params["w1"])
    b2c = params["b2"].reshape(-1, 1)
    b1c = params["b1"].reshape(-1, 1)
    C_out = params["w1"].shape[0]

    kernel = functools.partial(_fused_conv_kernel, Wp=Wp, C_in=C, K=K)
    # TODO(synk): only if H*W grows well beyond 64x64, add a grid over canvas
    # row-bands (with PAD-row halo overlap) so v7x's two TensorCores share the
    # work; at these sizes the per-step overhead would eat the win.
    out_canvas = pl.pallas_call(
        kernel,
        out_shape=jax.ShapeDtypeStruct((C_out, L), jnp.float32),
        in_specs=[pl.BlockSpec(memory_space=pltpu.MemorySpace.VMEM)] * 8,
        out_specs=pl.BlockSpec(memory_space=pltpu.MemorySpace.VMEM),
        scratch_shapes=[pltpu.VMEM((K * C, L), jnp.float32)],
    )(x2c, x6c, x5c, maskc, w2m, b2c, w1m, b1c)

    v5 = out_canvas.reshape(C_out, Hp, Wp)[:, PAD:PAD + H, PAD:PAD + W]
    return v5[None]                                    # back to (1, C, H, W)


def ref_forward(x6, x2, x5, params):
    """Pure-JAX NCHW reference for correctness checking."""
    def conv(x, w, b):
        y = jax.lax.conv_general_dilated(
            x, w, window_strides=(1, 1), padding=((3, 3), (3, 3)),
            dimension_numbers=("NCHW", "OIHW", "NCHW"))
        return y + b[None, :, None, None]
    v3 = jnp.maximum(conv(x2, params["w2"], params["b2"]) + x6, 0.0)
    return conv(v3, params["w1"], params["b1"]) + x5


def init_params(key, c_in=16, c_out=16, k=7):
    bound = 1.0 / (c_in * k * k) ** 0.5   # PyTorch-style uniform init bound
    ks = jax.random.split(key, 4)
    return {
        "w1": jax.random.uniform(ks[0], (c_out, c_in, k, k), jnp.float32,
                                 -bound, bound),
        "b1": jax.random.uniform(ks[1], (c_out,), jnp.float32, -bound, bound),
        "w2": jax.random.uniform(ks[2], (c_out, c_in, k, k), jnp.float32,
                                 -bound, bound),
        "b2": jax.random.uniform(ks[3], (c_out,), jnp.float32, -bound, bound),
    }


if __name__ == "__main__":
    key = jax.random.PRNGKey(0)
    kx2, kx5, kx6, kp = jax.random.split(key, 4)
    # Small shapes consistent with the module: N=1, C=16 (fixed by the convs),
    # spatial 16x16.
    N, C, H, W = 1, 16, 16, 16
    x2 = jax.random.normal(kx2, (N, C, H, W), jnp.float32)
    x5 = jax.random.normal(kx5, (N, C, H, W), jnp.float32)
    x6 = jax.random.normal(kx6, (N, C, H, W), jnp.float32)
    params = init_params(kp)

    fwd = jax.jit(model_forward)
    out = jax.block_until_ready(fwd(x6, x2, x5, params))
    ref = jax.block_until_ready(ref_forward(x6, x2, x5, params))

    assert out.shape == (N, C, H, W), out.shape
    max_err = float(jnp.max(jnp.abs(out - ref)))
    assert jnp.allclose(out, ref, atol=2e-3, rtol=2e-3), max_err
    print("KERNEL_OK")
</pallas_src>

<mosaic_0001>
module attributes {stable_mosaic.version = 11 : i64} {
  func.func @_fused_conv_kernel(%arg0: memref<16x768xf32, #tpu.memory_space<vmem>>, %arg1: memref<16x768xf32, #tpu.memory_space<vmem>>, %arg2: memref<16x768xf32, #tpu.memory_space<vmem>>, %arg3: memref<1x768xf32, #tpu.memory_space<vmem>>, %arg4: memref<112x112xf32, #tpu.memory_space<vmem>>, %arg5: memref<16x1xf32, #tpu.memory_space<vmem>>, %arg6: memref<112x112xf32, #tpu.memory_space<vmem>>, %arg7: memref<16x1xf32, #tpu.memory_space<vmem>>, %arg8: memref<16x768xf32, #tpu.memory_space<vmem>>, %arg9: memref<112x768xf32, #tpu.memory_space<vmem>>) attributes {dimension_semantics = [], scalar_prefetch = 0 : i64, scratch_operands = 1 : i64, tpu.core_type = #tpu.core_type<tc>} {
    %c0 = arith.constant 0 : index
    %c0_0 = arith.constant 0 : index
    %0 = vector.load %arg0[%c0, %c0_0] : memref<16x768xf32, #tpu.memory_space<vmem>>, vector<16x768xf32>
    %c3_i32 = arith.constant 3 : i32
    %1 = tpu.dynamic_rotate %0 by %c3_i32 dim 1 : vector<16x768xf32>, i32 -> vector<16x768xf32>
    %c0_1 = arith.constant 0 : index
    %c0_2 = arith.constant 0 : index
    %2 = vector.load %arg9[%c0_1, %c0_2] : memref<112x768xf32, #tpu.memory_space<vmem>>, vector<16x768xf32>
    tpu.vector_store %arg9[%c0_1, %c0_2], %1 {strides = array<i32>} : memref<112x768xf32, #tpu.memory_space<vmem>>, vector<16x768xf32>,
    %c2_i32 = arith.constant 2 : i32
    %3 = tpu.dynamic_rotate %0 by %c2_i32 dim 1 : vector<16x768xf32>, i32 -> vector<16x768xf32>
    %c16 = arith.constant 16 : index
    %c0_3 = arith.constant 0 : index
    %4 = vector.load %arg9[%c16, %c0_3] : memref<112x768xf32, #tpu.memory_space<vmem>>, vector<16x768xf32>
    tpu.vector_store %arg9[%c16, %c0_3], %3 {strides = array<i32>} : memref<112x768xf32, #tpu.memory_space<vmem>>, vector<16x768xf32>,
    %c1_i32 = arith.constant 1 : i32
    %5 = tpu.dynamic_rotate %0 by %c1_i32 dim 1 : vector<16x768xf32>, i32 -> vector<16x768xf32>
    %c32 = arith.constant 32 : index
    %c0_4 = arith.constant 0 : index
    %6 = vector.load %arg9[%c32, %c0_4] : memref<112x768xf32, #tpu.memory_space<vmem>>, vector<16x768xf32>
    tpu.vector_store %arg9[%c32, %c0_4], %5 {strides = array<i32>} : memref<112x768xf32, #tpu.memory_space<vmem>>, vector<16x768xf32>,
    %c48 = arith.constant 48 : index
    %c0_5 = arith.constant 0 : index
    %7 = vector.load %arg9[%c48, %c0_5] : memref<112x768xf32, #tpu.memory_space<vmem>>, vector<16x768xf32>
    tpu.vector_store %arg9[%c48, %c0_5], %0 {strides = array<i32>} : memref<112x768xf32, #tpu.memory_space<vmem>>, vector<16x768xf32>,
    %c767_i32 = arith.constant 767 : i32
    %8 = tpu.dynamic_rotate %0 by %c767_i32 dim 1 : vector<16x768xf32>, i32 -> vector<16x768xf32>
    %c64 = arith.constant 64 : index
    %c0_6 = arith.constant 0 : index
    %9 = vector.load %arg9[%c64, %c0_6] : memref<112x768xf32, #tpu.memory_space<vmem>>, vector<16x768xf32>
    tpu.vector_store %arg9[%c64, %c0_6], %8 {strides = array<i32>} : memref<112x768xf32, #tpu.memory_space<vmem>>, vector<16x768xf32>,
    %c766_i32 = arith.constant 766 : i32
    %10 = tpu.dynamic_rotate %0 by %c766_i32 dim 1 : vector<16x768xf32>, i32 -> vector<16x768xf32>
    %c80 = arith.constant 80 : index
    %c0_7 = arith.constant 0 : index
    %11 = vector.load %arg9[%c80, %c0_7] : memref<112x768xf32, #tpu.memory_space<vmem>>, vector<16x768xf32>
    tpu.vector_store %arg9[%c80, %c0_7], %10 {strides = array<i32>} : memref<112x768xf32, #tpu.memory_space<vmem>>, vector<16x768xf32>,
    %c765_i32 = arith.constant 765 : i32
    %12 = tpu.dynamic_rotate %0 by %c765_i32 dim 1 : vector<16x768xf32>, i32 -> vector<16x768xf32>
    %c96 = arith.constant 96 : index
    %c0_8 = arith.constant 0 : index
    %13 = vector.load %arg9[%c96, %c0_8] : memref<112x768xf32, #tpu.memory_space<vmem>>, vector<16x768xf32>
    tpu.vector_store %arg9[%c96, %c0_8], %12 {strides = array<i32>} : memref<112x768xf32, #tpu.memory_space<vmem>>, vector<16x768xf32>,
    %c0_9 = arith.constant 0 : index
    %c0_10 = arith.constant 0 : index
    %14 = vector.load %arg4[%c0_9, %c0_10] : memref<112x112xf32, #tpu.memory_space<vmem>>, vector<16x112xf32>
    %c0_11 = arith.constant 0 : index
    %c0_12 = arith.constant 0 : index
    %15 = vector.load %arg9[%c0_11, %c0_12] : memref<112x768xf32, #tpu.memory_space<vmem>>, vector<112x768xf32>
    %cst = arith.constant dense<0.000000e+00> : vector<16x768xf32>
    %16 = tpu.matmul %14, %15, %cst {dimension_numbers = #tpu.dot_dimension_numbers<[1], [0], [0], [1], [0, 0, 1, 1], [], []>} : vector<16x112xf32>, vector<112x768xf32>, vector<16x768xf32> -> vector<16x768xf32>
    %c96_i32 = arith.constant 96 : i32
    %17 = tpu.dynamic_rotate %16 by %c96_i32 dim 1 : vector<16x768xf32>, i32 -> vector<16x768xf32>
    %c16_13 = arith.constant 16 : index
    %c0_14 = arith.constant 0 : index
    %18 = vector.load %arg4[%c16_13, %c0_14] : memref<112x112xf32, #tpu.memory_space<vmem>>, vector<16x112xf32>
    %c0_15 = arith.constant 0 : index
    %c0_16 = arith.constant 0 : index
    %19 = vector.load %arg9[%c0_15, %c0_16] : memref<112x768xf32, #tpu.memory_space<vmem>>, vector<112x768xf32>
    %cst_17 = arith.constant dense<0.000000e+00> : vector<16x768xf32>
    %20 = tpu.matmul %18, %19, %cst_17 {dimension_numbers = #tpu.dot_dimension_numbers<[1], [0], [0], [1], [0, 0, 1, 1], [], []>} : vector<16x112xf32>, vector<112x768xf32>, vector<16x768xf32> -> vector<16x768xf32>
    %c64_i32 = arith.constant 64 : i32
    %21 = tpu.dynamic_rotate %20 by %c64_i32 dim 1 : vector<16x768xf32>, i32 -> vector<16x768xf32>
    %22 = arith.addf %17, %21 : vector<16x768xf32>
    %c32_18 = arith.constant 32 : index
    %c0_19 = arith.constant 0 : index
    %23 = vector.load %arg4[%c32_18, %c0_19] : memref<112x112xf32, #tpu.memory_space<vmem>>, vector<16x112xf32>
    %c0_20 = arith.constant 0 : index
    %c0_21 = arith.constant 0 : index
    %24 = vector.load %arg9[%c0_20, %c0_21] : memref<112x768xf32, #tpu.memory_space<vmem>>, vector<112x768xf32>
    %cst_22 = arith.constant dense<0.000000e+00> : vector<16x768xf32>
    %25 = tpu.matmul %23, %24, %cst_22 {dimension_numbers = #tpu.dot_dimension_numbers<[1], [0], [0], [1], [0, 0, 1, 1], [], []>} : vector<16x112xf32>, vector<112x768xf32>, vector<16x768xf32> -> vector<16x768xf32>
    %c32_i32 = arith.constant 32 : i32
    %26 = tpu.dynamic_rotate %25 by %c32_i32 dim 1 : vector<16x768xf32>, i32 -> vector<16x768xf32>
    %27 = arith.addf %22, %26 : vector<16x768xf32>
    %c48_23 = arith.constant 48 : index
    %c0_24 = arith.constant 0 : index
    %28 = vector.load %arg4[%c48_23, %c0_24] : memref<112x112xf32, #tpu.memory_space<vmem>>, vector<16x112xf32>
    %c0_25 = arith.constant 0 : index
    %c0_26 = arith.constant 0 : index
    %29 = vector.load %arg9[%c0_25, %c0_26] : memref<112x768xf32, #tpu.memory_space<vmem>>, vector<112x768xf32>
    %cst_27 = arith.constant dense<0.000000e+00> : vector<16x768xf32>
    %30 = tpu.matmul %28, %29, %cst_27 {dimension_numbers = #tpu.dot_dimension_numbers<[1], [0], [0], [1], [0, 0, 1, 1], [], []>} : vector<16x112xf32>, vector<112x768xf32>, vector<16x768xf32> -> vector<16x768xf32>
    %31 = arith.addf %27, %30 : vector<16x768xf32>
    %c64_28 = arith.constant 64 : index
    %c0_29 = arith.constant 0 : index
    %32 = vector.load %arg4[%c64_28, %c0_29] : memref<112x112xf32, #tpu.memory_space<vmem>>, vector<16x112xf32>
    %c0_30 = arith.constant 0 : index
    %c0_31 = arith.constant 0 : index
    %33 = vector.load %arg9[%c0_30, %c0_31] : memref<112x768xf32, #tpu.memory_space<vmem>>, vector<112x768xf32>
    %cst_32 = arith.constant dense<0.000000e+00> : vector<16x768xf32>
    %34 = tpu.matmul %32, %33, %cst_32 {dimension_numbers = #tpu.dot_dimension_numbers<[1], [0], [0], [1], [0, 0, 1, 1], [], []>} : vector<16x112xf32>, vector<112x768xf32>, vector<16x768xf32> -> vector<16x768xf32>
    %c736_i32 = arith.constant 736 : i32
    %35 = tpu.dynamic_rotate %34 by %c736_i32 dim 1 : vector<16x768xf32>, i32 -> vector<16x768xf32>
    %36 = arith.addf %31, %35 : vector<16x768xf32>
    %c80_33 = arith.constant 80 : index
    %c0_34 = arith.constant 0 : index
    %37 = vector.load %arg4[%c80_33, %c0_34] : memref<112x112xf32, #tpu.memory_space<vmem>>, vector<16x112xf32>
    %c0_35 = arith.constant 0 : index
    %c0_36 = arith.constant 0 : index
    %38 = vector.load %arg9[%c0_35, %c0_36] : memref<112x768xf32, #tpu.memory_space<vmem>>, vector<112x768xf32>
    %cst_37 = arith.constant dense<0.000000e+00> : vector<16x768xf32>
    %39 = tpu.matmul %37, %38, %cst_37 {dimension_numbers = #tpu.dot_dimension_numbers<[1], [0], [0], [1], [0, 0, 1, 1], [], []>} : vector<16x112xf32>, vector<112x768xf32>, vector<16x768xf32> -> vector<16x768xf32>
    %c704_i32 = arith.constant 704 : i32
    %40 = tpu.dynamic_rotate %39 by %c704_i32 dim 1 : vector<16x768xf32>, i32 -> vector<16x768xf32>
    %41 = arith.addf %36, %40 : vector<16x768xf32>
    %c96_38 = arith.constant 96 : index
    %c0_39 = arith.constant 0 : index
    %42 = vector.load %arg4[%c96_38, %c0_39] : memref<112x112xf32, #tpu.memory_space<vmem>>, vector<16x112xf32>
    %c0_40 = arith.constant 0 : index
    %c0_41 = arith.constant 0 : index
    %43 = vector.load %arg9[%c0_40, %c0_41] : memref<112x768xf32, #tpu.memory_space<vmem>>, vector<112x768xf32>
    %cst_42 = arith.constant dense<0.000000e+00> : vector<16x768xf32>
    %44 = tpu.matmul %42, %43, %cst_42 {dimension_numbers = #tpu.dot_dimension_numbers<[1], [0], [0], [1], [0, 0, 1, 1], [], []>} : vector<16x112xf32>, vector<112x768xf32>, vector<16x768xf32> -> vector<16x768xf32>
    %c672_i32 = arith.constant 672 : i32
    %45 = tpu.dynamic_rotate %44 by %c672_i32 dim 1 : vector<16x768xf32>, i32 -> vector<16x768xf32>
    %46 = arith.addf %41, %45 : vector<16x768xf32>
    %c0_43 = arith.constant 0 : index
    %c0_44 = arith.constant 0 : index
    %47 = vector.load %arg5[%c0_43, %c0_44] : memref<16x1xf32, #tpu.memory_space<vmem>>, vector<16x1xf32>
    %48 = vector.broadcast %47 : vector<16x1xf32> to vector<16x768xf32>
    %49 = arith.addf %46, %48 : vector<16x768xf32>
    %c0_45 = arith.constant 0 : index
    %c0_46 = arith.constant 0 : index
    %50 = vector.load %arg1[%c0_45, %c0_46] : memref<16x768xf32, #tpu.memory_space<vmem>>, vector<16x768xf32>
    %51 = arith.addf %49, %50 : vector<16x768xf32>
    %cst_47 = arith.constant 0.000000e+00 : f32
    %52 = vector.broadcast %cst_47 : f32 to vector<16x768xf32>
    %53 = arith.maximumf %51, %52 : vector<16x768xf32>
    %c0_48 = arith.constant 0 : index
    %c0_49 = arith.constant 0 : index
    %54 = vector.load %arg3[%c0_48, %c0_49] : memref<1x768xf32, #tpu.memory_space<vmem>>, vector<1x768xf32>
    %55 = vector.broadcast %54 : vector<1x768xf32> to vector<16x768xf32>
    %56 = arith.mulf %53, %55 : vector<16x768xf32>
    %c3_i32_50 = arith.constant 3 : i32
    %57 = tpu.dynamic_rotate %56 by %c3_i32_50 dim 1 : vector<16x768xf32>, i32 -> vector<16x768xf32>
    %c0_51 = arith.constant 0 : index
    %c0_52 = arith.constant 0 : index
    %58 = vector.load %arg9[%c0_51, %c0_52] : memref<112x768xf32, #tpu.memory_space<vmem>>, vector<16x768xf32>
    tpu.vector_store %arg9[%c0_51, %c0_52], %57 {strides = array<i32>} : memref<112x768xf32, #tpu.memory_space<vmem>>, vector<16x768xf32>,
    %c2_i32_53 = arith.constant 2 : i32
    %59 = tpu.dynamic_rotate %56 by %c2_i32_53 dim 1 : vector<16x768xf32>, i32 -> vector<16x768xf32>
    %c16_54 = arith.constant 16 : index
    %c0_55 = arith.constant 0 : index
    %60 = vector.load %arg9[%c16_54, %c0_55] : memref<112x768xf32, #tpu.memory_space<vmem>>, vector<16x768xf32>
    tpu.vector_store %arg9[%c16_54, %c0_55], %59 {strides = array<i32>} : memref<112x768xf32, #tpu.memory_space<vmem>>, vector<16x768xf32>,
    %c1_i32_56 = arith.constant 1 : i32
    %61 = tpu.dynamic_rotate %56 by %c1_i32_56 dim 1 : vector<16x768xf32>, i32 -> vector<16x768xf32>
    %c32_57 = arith.constant 32 : index
    %c0_58 = arith.constant 0 : index
    %62 = vector.load %arg9[%c32_57, %c0_58] : memref<112x768xf32, #tpu.memory_space<vmem>>, vector<16x768xf32>
    tpu.vector_store %arg9[%c32_57, %c0_58], %61 {strides = array<i32>} : memref<112x768xf32, #tpu.memory_space<vmem>>, vector<16x768xf32>,
    %c48_59 = arith.constant 48 : index
    %c0_60 = arith.constant 0 : index
    %63 = vector.load %arg9[%c48_59, %c0_60] : memref<112x768xf32, #tpu.memory_space<vmem>>, vector<16x768xf32>
    tpu.vector_store %arg9[%c48_59, %c0_60], %56 {strides = array<i32>} : memref<112x768xf32, #tpu.memory_space<vmem>>, vector<16x768xf32>,
    %c767_i32_61 = arith.constant 767 : i32
    %64 = tpu.dynamic_rotate %56 by %c767_i32_61 dim 1 : vector<16x768xf32>, i32 -> vector<16x768xf32>
    %c64_62 = arith.constant 64 : index
    %c0_63 = arith.constant 0 : index
    %65 = vector.load %arg9[%c64_62, %c0_63] : memref<112x768xf32, #tpu.memory_space<vmem>>, vector<16x768xf32>
    tpu.vector_store %arg9[%c64_62, %c0_63], %64 {strides = array<i32>} : memref<112x768xf32, #tpu.memory_space<vmem>>, vector<16x768xf32>,
    %c766_i32_64 = arith.constant 766 : i32
    %66 = tpu.dynamic_rotate %56 by %c766_i32_64 dim 1 : vector<16x768xf32>, i32 -> vector<16x768xf32>
    %c80_65 = arith.constant 80 : index
    %c0_66 = arith.constant 0 : index
    %67 = vector.load %arg9[%c80_65, %c0_66] : memref<112x768xf32, #tpu.memory_space<vmem>>, vector<16x768xf32>
    tpu.vector_store %arg9[%c80_65, %c0_66], %66 {strides = array<i32>} : memref<112x768xf32, #tpu.memory_space<vmem>>, vector<16x768xf32>,
    %c765_i32_67 = arith.constant 765 : i32
    %68 = tpu.dynamic_rotate %56 by %c765_i32_67 dim 1 : vector<16x768xf32>, i32 -> vector<16x768xf32>
    %c96_68 = arith.constant 96 : index
    %c0_69 = arith.constant 0 : index
    %69 = vector.load %arg9[%c96_68, %c0_69] : memref<112x768xf32, #tpu.memory_space<vmem>>, vector<16x768xf32>
    tpu.vector_store %arg9[%c96_68, %c0_69], %68 {strides = array<i32>} : memref<112x768xf32, #tpu.memory_space<vmem>>, vector<16x768xf32>,
    %c0_70 = arith.constant 0 : index
    %c0_71 = arith.constant 0 : index
    %70 = vector.load %arg6[%c0_70, %c0_71] : memref<112x112xf32, #tpu.memory_space<vmem>>, vector<16x112xf32>
    %c0_72 = arith.constant 0 : index
    %c0_73 = arith.constant 0 : index
    %71 = vector.load %arg9[%c0_72, %c0_73] : memref<112x768xf32, #tpu.memory_space<vmem>>, vector<112x768xf32>
    %cst_74 = arith.constant dense<0.000000e+00> : vector<16x768xf32>
    %72 = tpu.matmul %70, %71, %cst_74 {dimension_numbers = #tpu.dot_dimension_numbers<[1], [0], [0], [1], [0, 0, 1, 1], [], []>} : vector<16x112xf32>, vector<112x768xf32>, vector<16x768xf32> -> vector<16x768xf32>
    %c96_i32_75 = arith.constant 96 : i32
    %73 = tpu.dynamic_rotate %72 by %c96_i32_75 dim 1 : vector<16x768xf32>, i32 -> vector<16x768xf32>
    %c16_76 = arith.constant 16 : index
    %c0_77 = arith.constant 0 : index
    %74 = vector.load %arg6[%c16_76, %c0_77] : memref<112x112xf32, #tpu.memory_space<vmem>>, vector<16x112xf32>
    %c0_78 = arith.constant 0 : index
    %c0_79 = arith.constant 0 : index
    %75 = vector.load %arg9[%c0_78, %c0_79] : memref<112x768xf32, #tpu.memory_space<vmem>>, vector<112x768xf32>
    %cst_80 = arith.constant dense<0.000000e+00> : vector<16x768xf32>
    %76 = tpu.matmul %74, %75, %cst_80 {dimension_numbers = #tpu.dot_dimension_numbers<[1], [0], [0], [1], [0, 0, 1, 1], [], []>} : vector<16x112xf32>, vector<112x768xf32>, vector<16x768xf32> -> vector<16x768xf32>
    %c64_i32_81 = arith.constant 64 : i32
    %77 = tpu.dynamic_rotate %76 by %c64_i32_81 dim 1 : vector<16x768xf32>, i32 -> vector<16x768xf32>
    %78 = arith.addf %73, %77 : vector<16x768xf32>
    %c32_82 = arith.constant 32 : index
    %c0_83 = arith.constant 0 : index
    %79 = vector.load %arg6[%c32_82, %c0_83] : memref<112x112xf32, #tpu.memory_space<vmem>>, vector<16x112xf32>
    %c0_84 = arith.constant 0 : index
    %c0_85 = arith.constant 0 : index
    %80 = vector.load %arg9[%c0_84, %c0_85] : memref<112x768xf32, #tpu.memory_space<vmem>>, vector<112x768xf32>
    %cst_86 = arith.constant dense<0.000000e+00> : vector<16x768xf32>
    %81 = tpu.matmul %79, %80, %cst_86 {dimension_numbers = #tpu.dot_dimension_numbers<[1], [0], [0], [1], [0, 0, 1, 1], [], []>} : vector<16x112xf32>, vector<112x768xf32>, vector<16x768xf32> -> vector<16x768xf32>
    %c32_i32_87 = arith.constant 32 : i32
    %82 = tpu.dynamic_rotate %81 by %c32_i32_87 dim 1 : vector<16x768xf32>, i32 -> vector<16x768xf32>
    %83 = arith.addf %78, %82 : vector<16x768xf32>
    %c48_88 = arith.constant 48 : index
    %c0_89 = arith.constant 0 : index
    %84 = vector.load %arg6[%c48_88, %c0_89] : memref<112x112xf32, #tpu.memory_space<vmem>>, vector<16x112xf32>
    %c0_90 = arith.constant 0 : index
    %c0_91 = arith.constant 0 : index
    %85 = vector.load %arg9[%c0_90, %c0_91] : memref<112x768xf32, #tpu.memory_space<vmem>>, vector<112x768xf32>
    %cst_92 = arith.constant dense<0.000000e+00> : vector<16x768xf32>
    %86 = tpu.matmul %84, %85, %cst_92 {dimension_numbers = #tpu.dot_dimension_numbers<[1], [0], [0], [1], [0, 0, 1, 1], [], []>} : vector<16x112xf32>, vector<112x768xf32>, vector<16x768xf32> -> vector<16x768xf32>
    %87 = arith.addf %83, %86 : vector<16x768xf32>
    %c64_93 = arith.constant 64 : index
    %c0_94 = arith.constant 0 : index
    %88 = vector.load %arg6[%c64_93, %c0_94] : memref<112x112xf32, #tpu.memory_space<vmem>>, vector<16x112xf32>
    %c0_95 = arith.constant 0 : index
    %c0_96 = arith.constant 0 : index
    %89 = vector.load %arg9[%c0_95, %c0_96] : memref<112x768xf32, #tpu.memory_space<vmem>>, vector<112x768xf32>
    %cst_97 = arith.constant dense<0.000000e+00> : vector<16x768xf32>
    %90 = tpu.matmul %88, %89, %cst_97 {dimension_numbers = #tpu.dot_dimension_numbers<[1], [0], [0], [1], [0, 0, 1, 1], [], []>} : vector<16x112xf32>, vector<112x768xf32>, vector<16x768xf32> -> vector<16x768xf32>
    %c736_i32_98 = arith.constant 736 : i32
    %91 = tpu.dynamic_rotate %90 by %c736_i32_98 dim 1 : vector<16x768xf32>, i32 -> vector<16x768xf32>
    %92 = arith.addf %87, %91 : vector<16x768xf32>
    %c80_99 = arith.constant 80 : index
    %c0_100 = arith.constant 0 : index
    %93 = vector.load %arg6[%c80_99, %c0_100] : memref<112x112xf32, #tpu.memory_space<vmem>>, vector<16x112xf32>
    %c0_101 = arith.constant 0 : index
    %c0_102 = arith.constant 0 : index
    %94 = vector.load %arg9[%c0_101, %c0_102] : memref<112x768xf32, #tpu.memory_space<vmem>>, vector<112x768xf32>
    %cst_103 = arith.constant dense<0.000000e+00> : vector<16x768xf32>
    %95 = tpu.matmul %93, %94, %cst_103 {dimension_numbers = #tpu.dot_dimension_numbers<[1], [0], [0], [1], [0, 0, 1, 1], [], []>} : vector<16x112xf32>, vector<112x768xf32>, vector<16x768xf32> -> vector<16x768xf32>
    %c704_i32_104 = arith.constant 704 : i32
    %96 = tpu.dynamic_rotate %95 by %c704_i32_104 dim 1 : vector<16x768xf32>, i32 -> vector<16x768xf32>
    %97 = arith.addf %92, %96 : vector<16x768xf32>
    %c96_105 = arith.constant 96 : index
    %c0_106 = arith.constant 0 : index
    %98 = vector.load %arg6[%c96_105, %c0_106] : memref<112x112xf32, #tpu.memory_space<vmem>>, vector<16x112xf32>
    %c0_107 = arith.constant 0 : index
    %c0_108 = arith.constant 0 : index
    %99 = vector.load %arg9[%c0_107, %c0_108] : memref<112x768xf32, #tpu.memory_space<vmem>>, vector<112x768xf32>
    %cst_109 = arith.constant dense<0.000000e+00> : vector<16x768xf32>
    %100 = tpu.matmul %98, %99, %cst_109 {dimension_numbers = #tpu.dot_dimension_numbers<[1], [0], [0], [1], [0, 0, 1, 1], [], []>} : vector<16x112xf32>, vector<112x768xf32>, vector<16x768xf32> -> vector<16x768xf32>
    %c672_i32_110 = arith.constant 672 : i32
    %101 = tpu.dynamic_rotate %100 by %c672_i32_110 dim 1 : vector<16x768xf32>, i32 -> vector<16x768xf32>
    %102 = arith.addf %97, %101 : vector<16x768xf32>
    %c0_111 = arith.constant 0 : index
    %c0_112 = arith.constant 0 : index
    %103 = vector.load %arg7[%c0_111, %c0_112] : memref<16x1xf32, #tpu.memory_space<vmem>>, vector<16x1xf32>
    %104 = vector.broadcast %103 : vector<16x1xf32> to vector<16x768xf32>
    %105 = arith.addf %102, %104 : vector<16x768xf32>
    %c0_113 = arith.constant 0 : index
    %c0_114 = arith.constant 0 : index
    %106 = vector.load %arg2[%c0_113, %c0_114] : memref<16x768xf32, #tpu.memory_space<vmem>>, vector<16x768xf32>
    %107 = arith.addf %105, %106 : vector<16x768xf32>
    %c0_115 = arith.constant 0 : index
    %c0_116 = arith.constant 0 : index
    %108 = vector.load %arg8[%c0_115, %c0_116] : memref<16x768xf32, #tpu.memory_space<vmem>>, vector<16x768xf32>
    tpu.vector_store %arg8[%c0_115, %c0_116], %107 {strides = array<i32>} : memref<16x768xf32, #tpu.memory_space<vmem>>, vector<16x768xf32>,
    return
  }
}

</mosaic_0001>

<llo_original>
// kernel: model_forward.1
$region0: #{model_forward.1}
  #allocation0 [shape = 'u32[]', space=smem, size = 0x4, offset = 0x4, fixed_abs, tag = 'smem constant byte address 0x4 - core index']
  #allocation1 [shape = 'u32[144,128]{1,0:T(1,128)}', space=vmem, size = 0x12000, scoped, tag = 'internal scratch']
  #allocation2 [shape = 'f32[112,768]{1,0:T(8,128)}', space=vmem, size = 0x54000, scoped, tag = 'scratch operand']
  %s0 = inlined_call_operand.vmem [shape: f32[16,768], index: 0, kind: input, shape index: {}]
  %s1 = inlined_call_operand.vmem [shape: f32[16,768], index: 1, kind: input, shape index: {}]
  %s2 = inlined_call_operand.vmem [shape: f32[16,768], index: 2, kind: input, shape index: {}]
  %s3 = inlined_call_operand.vmem [shape: f32[1,768], index: 3, kind: input, shape index: {}]
  %s4 = inlined_call_operand.vmem [shape: f32[112,112], index: 4, kind: input, shape index: {}]
  %s5 = inlined_call_operand.vmem [shape: f32[16,1], index: 5, kind: input, shape index: {}]
  %s6 = inlined_call_operand.vmem [shape: f32[112,112], index: 6, kind: input, shape index: {}]
  %s7 = inlined_call_operand.vmem [shape: f32[16,1], index: 7, kind: input, shape index: {}]
  %s8 = inlined_call_operand.vmem [shape: f32[16,768], index: 8, kind: output, shape index: {}]
  %s9 = sld [smem:[#allocation0]]
  $region42: #{model_forward.1} parent=0
    _
  %s11 = ssub.s32 1, %s9
  %s12 = scalar_select 0, %s11, %s9
  // Predicated region
  $region2: #{model_forward.1} parent=0 // pred_check
    _
  $region3: #{model_forward.1} parent=0 // pred_check_branch
    %14 = sbr.rel (0) target = $region5
  $region4: #{model_forward.1} parent=0 // pred_region
    _
  $region5: #{model_forward.1} parent=0 // pred_fallthru
    _
  // Predicated region
  $region6: #{model_forward.1} parent=0 // pred_check
    _
  $region7: #{model_forward.1} parent=0 // pred_check_branch
    %16 = sbr.rel (0) target = $region9
  $region8: #{model_forward.1} parent=0 // pred_region
    _
  $region9: #{model_forward.1} parent=0 // pred_fallthru
    _
  // Predicated region
  $region10: #{model_forward.1} parent=0 // pred_check
    _
  $region11: #{model_forward.1} parent=0 // pred_check_branch
    %18 = sbr.rel (0) target = $region13
  $region12: #{model_forward.1} parent=0 // pred_region
    _
  $region13: #{model_forward.1} parent=0 // pred_fallthru
    _
  // Predicated region
  $region14: #{model_forward.1} parent=0 // pred_check
    _
  $region15: #{model_forward.1} parent=0 // pred_check_branch
    %20 = sbr.rel (0) target = $region17
  $region16: #{model_forward.1} parent=0 // pred_region
    _
  $region17: #{model_forward.1} parent=0 // pred_fallthru
    _
  // Predicated region
  $region18: #{model_forward.1} parent=0 // pred_check
    _
  $region19: #{model_forward.1} parent=0 // pred_check_branch
    %22 = sbr.rel (0) target = $region21
  $region20: #{model_forward.1} parent=0 // pred_region
    _
  $region21: #{model_forward.1} parent=0 // pred_fallthru
    _
  // Predicated region
  $region22: #{model_forward.1} parent=0 // pred_check
    _
  $region23: #{model_forward.1} parent=0 // pred_check_branch
    %24 = sbr.rel (0) target = $region25
  $region24: #{model_forward.1} parent=0 // pred_region
    _
  $region25: #{model_forward.1} parent=0 // pred_fallthru
    _
  // Predicated region
  $region26: #{model_forward.1} parent=0 // pred_check
    _
  $region27: #{model_forward.1} parent=0 // pred_check_branch
    %26 = sbr.rel (0) target = $region29
  $region28: #{model_forward.1} parent=0 // pred_region
    _
  $region29: #{model_forward.1} parent=0 // pred_fallthru
    _
  // Predicated region
  $region30: #{model_forward.1} parent=0 // pred_check
    _
  $region31: #{model_forward.1} parent=0 // pred_check_branch
    %28 = sbr.rel (0) target = $region33
  $region32: #{model_forward.1} parent=0 // pred_region
    _
  $region33: #{model_forward.1} parent=0 // pred_fallthru
    _
  %v29 = vld [vmem:[%s0] sm:$0xff]
  %v30 = vld [vmem:[%s0 + $0x8] sm:$0xff]
  %v31 = vld [vmem:[%s0 + $0x10] sm:$0xff]
  %v32 = vld [vmem:[%s0 + $0x18] sm:$0xff]
  %v33 = vld [vmem:[%s0 + $0x20] sm:$0xff]
  %v34 = vld [vmem:[%s0 + $0x28] sm:$0xff]
  %v35 = vld [vmem:[%s0 + $0x30] sm:$0xff]
  %v36 = vld [vmem:[%s0 + $0x38] sm:$0xff]
  %v37 = vld [vmem:[%s0 + $0x40] sm:$0xff]
  %v38 = vld [vmem:[%s0 + $0x48] sm:$0xff]
  %v39 = vld [vmem:[%s0 + $0x50] sm:$0xff]
  %v40 = vld [vmem:[%s0 + $0x58] sm:$0xff]
  %41 = vrot.lane.b32.xlu0 %v29, 3
  %v42 = vpop.permute.xlu0 %41
  %43 = vrot.lane.b32.xlu0 %v35, 3
  %v44 = vpop.permute.xlu0 %43
  %45 = vrot.lane.b32.xlu0 %v30, 3
  %v46 = vpop.permute.xlu0 %45
  %47 = vrot.lane.b32.xlu0 %v36, 3
  %v48 = vpop.permute.xlu0 %47
  %49 = vrot.lane.b32.xlu0 %v31, 3
  %v50 = vpop.permute.xlu0 %49
  %51 = vrot.lane.b32.xlu0 %v37, 3
  %v52 = vpop.permute.xlu0 %51
  %53 = vrot.lane.b32.xlu0 %v32, 3
  %v54 = vpop.permute.xlu0 %53
  %55 = vrot.lane.b32.xlu0 %v38, 3
  %v56 = vpop.permute.xlu0 %55
  %57 = vrot.lane.b32.xlu0 %v33, 3
  %v58 = vpop.permute.xlu0 %57
  %59 = vrot.lane.b32.xlu0 %v39, 3
  %v60 = vpop.permute.xlu0 %59
  %61 = vrot.lane.b32.xlu0 %v34, 3
  %v62 = vpop.permute.xlu0 %61
  %63 = vrot.lane.b32.xlu0 %v40, 3
  %v64 = vpop.permute.xlu0 %63
  %v65 = vlaneseq
  %v66 = vand.u32 %v65, 127
  %vm67 = vcmp.lt.s32.totalorder %v66, 3
  %v68 = vsel %vm67, %v58, %v62
  %v69 = vsel %vm67, %v60, %v64
  %v70 = vsel %vm67, %v54, %v58
  %v71 = vsel %vm67, %v56, %v60
  %v72 = vsel %vm67, %v50, %v54
  %v73 = vsel %vm67, %v52, %v56
  %v74 = vsel %vm67, %v46, %v50
  %v75 = vsel %vm67, %v48, %v52
  %v76 = vsel %vm67, %v42, %v46
  %v77 = vsel %vm67, %v44, %v48
  %v78 = vsel %vm67, %v62, %v42
  %v79 = vsel %vm67, %v64, %v44
  %80 = vst [vmem:[#allocation2] sm:$0xff] %v78
  %81 = vst [vmem:[#allocation2 + $0x8] sm:$0xff] %v76
  %82 = vst [vmem:[#allocation2 + $0x10] sm:$0xff] %v74
  %83 = vst [vmem:[#allocation2 + $0x18] sm:$0xff] %v72
  %84 = vst [vmem:[#allocation2 + $0x20] sm:$0xff] %v70
  %85 = vst [vmem:[#allocation2 + $0x28] sm:$0xff] %v68
  %86 = vst [vmem:[#allocation2 + $0x30] sm:$0xff] %v79
  %87 = vst [vmem:[#allocation2 + $0x38] sm:$0xff] %v77
  %88 = vst [vmem:[#allocation2 + $0x40] sm:$0xff] %v75
  %89 = vst [vmem:[#allocation2 + $0x48] sm:$0xff] %v73
  %90 = vst [vmem:[#allocation2 + $0x50] sm:$0xff] %v71
  %91 = vst [vmem:[#allocation2 + $0x58] sm:$0xff] %v69
  %92 = vrot.lane.b32.xlu0 %v29, 2
  %v93 = vpop.permute.xlu0 %92
  %94 = vrot.lane.b32.xlu0 %v35, 2
  %v95 = vpop.permute.xlu0 %94
  %96 = vrot.lane.b32.xlu0 %v30, 2
  %v97 = vpop.permute.xlu0 %96
  %98 = vrot.lane.b32.xlu0 %v36, 2
  %v99 = vpop.permute.xlu0 %98
  %100 = vrot.lane.b32.xlu0 %v31, 2
  %v101 = vpop.permute.xlu0 %100
  %102 = vrot.lane.b32.xlu0 %v37, 2
  %v103 = vpop.permute.xlu0 %102
  %104 = vrot.lane.b32.xlu0 %v32, 2
  %v105 = vpop.permute.xlu0 %104
  %106 = vrot.lane.b32.xlu0 %v38, 2
  %v107 = vpop.permute.xlu0 %106
  %108 = vrot.lane.b32.xlu0 %v33, 2
  %v109 = vpop.permute.xlu0 %108
  %110 = vrot.lane.b32.xlu0 %v39, 2
  %v111 = vpop.permute.xlu0 %110
  %112 = vrot.lane.b32.xlu0 %v34, 2
  %v113 = vpop.permute.xlu0 %112
  %114 = vrot.lane.b32.xlu0 %v40, 2
  %v115 = vpop.permute.xlu0 %114
  %vm116 = vcmp.lt.s32.totalorder %v66, 2
  %v117 = vsel %vm116, %v109, %v113
  %v118 = vsel %vm116, %v111, %v115
  %v119 = vsel %vm116, %v105, %v109
  %v120 = vsel %vm116, %v107, %v111
  %v121 = vsel %vm116, %v101, %v105
  %v122 = vsel %vm116, %v103, %v107
  %v123 = vsel %vm116, %v97, %v101
  %v124 = vsel %vm116, %v99, %v103
  %v125 = vsel %vm116, %v93, %v97
  %v126 = vsel %vm116, %v95, %v99
  %v127 = vsel %vm116, %v113, %v93
  %v128 = vsel %vm116, %v115, %v95
  %129 = vst [vmem:[#allocation2 + $0x60] sm:$0xff] %v127
  %130 = vst [vmem:[#allocation2 + $0x68] sm:$0xff] %v125
  %131 = vst [vmem:[#allocation2 + $0x70] sm:$0xff] %v123
  %132 = vst [vmem:[#allocation2 + $0x78] sm:$0xff] %v121
  %133 = vst [vmem:[#allocation2 + $0x80] sm:$0xff] %v119
  %134 = vst [vmem:[#allocation2 + $0x88] sm:$0xff] %v117
  %135 = vst [vmem:[#allocation2 + $0x90] sm:$0xff] %v128
  %136 = vst [vmem:[#allocation2 + $0x98] sm:$0xff] %v126
  %137 = vst [vmem:[#allocation2 + $0xa0] sm:$0xff] %v124
  %138 = vst [vmem:[#allocation2 + $0xa8] sm:$0xff] %v122
  %139 = vst [vmem:[#allocation2 + $0xb0] sm:$0xff] %v120
  %140 = vst [vmem:[#allocation2 + $0xb8] sm:$0xff] %v118
  %141 = vrot.lane.b32.xlu0 %v29, 1
  %v142 = vpop.permute.xlu0 %141
  %143 = vrot.lane.b32.xlu0 %v35, 1
  %v144 = vpop.permute.xlu0 %143
  %145 = vrot.lane.b32.xlu0 %v30, 1
  %v146 = vpop.permute.xlu0 %145
  %147 = vrot.lane.b32.xlu0 %v36, 1
  %v148 = vpop.permute.xlu0 %147
  %149 = vrot.lane.b32.xlu0 %v31, 1
  %v150 = vpop.permute.xlu0 %149
  %151 = vrot.lane.b32.xlu0 %v37, 1
  %v152 = vpop.permute.xlu0 %151
  %153 = vrot.lane.b32.xlu0 %v32, 1
  %v154 = vpop.permute.xlu0 %153
  %155 = vrot.lane.b32.xlu0 %v38, 1
  %v156 = vpop.permute.xlu0 %155
  %157 = vrot.lane.b32.xlu0 %v33, 1
  %v158 = vpop.permute.xlu0 %157
  %159 = vrot.lane.b32.xlu0 %v39, 1
  %v160 = vpop.permute.xlu0 %159
  %161 = vrot.lane.b32.xlu0 %v34, 1
  %v162 = vpop.permute.xlu0 %161
  %163 = vrot.lane.b32.xlu0 %v40, 1
  %v164 = vpop.permute.xlu0 %163
  %vm165 = vcmp.lt.s32.totalorder %v66, 1
  %v166 = vsel %vm165, %v158, %v162
  %v167 = vsel %vm165, %v160, %v164
  %v168 = vsel %vm165, %v154, %v158
  %v169 = vsel %vm165, %v156, %v160
  %v170 = vsel %vm165, %v150, %v154
  %v171 = vsel %vm165, %v152, %v156
  %v172 = vsel %vm165, %v146, %v150
  %v173 = vsel %vm165, %v148, %v152
  %v174 = vsel %vm165, %v142, %v146
  %v175 = vsel %vm165, %v144, %v148
  %v176 = vsel %vm165, %v162, %v142
  %v177 = vsel %vm165, %v164, %v144
  %178 = vst [vmem:[#allocation2 + $0xc0] sm:$0xff] %v176
  %179 = vst [vmem:[#allocation2 + $0xc8] sm:$0xff] %v174
  %180 = vst [vmem:[#allocation2 + $0xd0] sm:$0xff] %v172
  %181 = vst [vmem:[#allocation2 + $0xd8] sm:$0xff] %v170
  %182 = vst [vmem:[#allocation2 + $0xe0] sm:$0xff] %v168
  %183 = vst [vmem:[#allocation2 + $0xe8] sm:$0xff] %v166
  %184 = vst [vmem:[#allocation2 + $0xf0] sm:$0xff] %v177
  %185 = vst [vmem:[#allocation2 + $0xf8] sm:$0xff] %v175
  %186 = vst [vmem:[#allocation2 + $0x100] sm:$0xff] %v173
  %187 = vst [vmem:[#allocation2 + $0x108] sm:$0xff] %v171
  %188 = vst [vmem:[#allocation2 + $0x110] sm:$0xff] %v169
  %189 = vst [vmem:[#allocation2 + $0x118] sm:$0xff] %v167
  %190 = vst [vmem:[#allocation2 + $0x120] sm:$0xff] %v29
  %191 = vst [vmem:[#allocation2 + $0x128] sm:$0xff] %v30
  %192 = vst [vmem:[#allocation2 + $0x130] sm:$0xff] %v31
  %193 = vst [vmem:[#allocation2 + $0x138] sm:$0xff] %v32
  %194 = vst [vmem:[#allocation2 + $0x140] sm:$0xff] %v33
  %195 = vst [vmem:[#allocation2 + $0x148] sm:$0xff] %v34
  %196 = vst [vmem:[#allocation2 + $0x150] sm:$0xff] %v35
  %197 = vst [vmem:[#allocation2 + $0x158] sm:$0xff] %v36
  %198 = vst [vmem:[#allocation2 + $0x160] sm:$0xff] %v37
  %199 = vst [vmem:[#allocation2 + $0x168] sm:$0xff] %v38
  %200 = vst [vmem:[#allocation2 + $0x170] sm:$0xff] %v39
  %201 = vst [vmem:[#allocation2 + $0x178] sm:$0xff] %v40
  %202 = vrot.lane.b32.xlu0 %v29, 127
  %v203 = vpop.permute.xlu0 %202
  %204 = vrot.lane.b32.xlu0 %v35, 127
  %v205 = vpop.permute.xlu0 %204
  %206 = vrot.lane.b32.xlu0 %v30, 127
  %v207 = vpop.permute.xlu0 %206
  %208 = vrot.lane.b32.xlu0 %v36, 127
  %v209 = vpop.permute.xlu0 %208
  %210 = vrot.lane.b32.xlu0 %v31, 127
  %v211 = vpop.permute.xlu0 %210
  %212 = vrot.lane.b32.xlu0 %v37, 127
  %v213 = vpop.permute.xlu0 %212
  %214 = vrot.lane.b32.xlu0 %v32, 127
  %v215 = vpop.permute.xlu0 %214
  %216 = vrot.lane.b32.xlu0 %v38, 127
  %v217 = vpop.permute.xlu0 %216
  %218 = vrot.lane.b32.xlu0 %v33, 127
  %v219 = vpop.permute.xlu0 %218
  %220 = vrot.lane.b32.xlu0 %v39, 127
  %v221 = vpop.permute.xlu0 %220
  %222 = vrot.lane.b32.xlu0 %v34, 127
  %v223 = vpop.permute.xlu0 %222
  %224 = vrot.lane.b32.xlu0 %v40, 127
  %v225 = vpop.permute.xlu0 %224
  %vm226 = vcmp.lt.s32.totalorder %v66, 127
  %v227 = vsel %vm226, %v219, %v223
  %v228 = vsel %vm226, %v221, %v225
  %v229 = vsel %vm226, %v215, %v219
  %v230 = vsel %vm226, %v217, %v221
  %v231 = vsel %vm226, %v211, %v215
  %v232 = vsel %vm226, %v213, %v217
  %v233 = vsel %vm226, %v207, %v211
  %v234 = vsel %vm226, %v209, %v213
  %v235 = vsel %vm226, %v203, %v207
  %v236 = vsel %vm226, %v205, %v209
  %v237 = vsel %vm226, %v223, %v203
  %v238 = vsel %vm226, %v225, %v205
  %239 = vst [vmem:[#allocation2 + $0x180] sm:$0xff] %v235
  %240 = vst [vmem:[#allocation2 + $0x188] sm:$0xff] %v233
  %241 = vst [vmem:[#allocation2 + $0x190] sm:$0xff] %v231
  %242 = vst [vmem:[#allocation2 + $0x198] sm:$0xff] %v229
  %243 = vst [vmem:[#allocation2 + $0x1a0] sm:$0xff] %v227
  %244 = vst [vmem:[#allocation2 + $0x1a8] sm:$0xff] %v237
  %245 = vst [vmem:[#allocation2 + $0x1b0] sm:$0xff] %v236
  %246 = vst [vmem:[#allocation2 + $0x1b8] sm:$0xff] %v234
  %247 = vst [vmem:[#allocation2 + $0x1c0] sm:$0xff] %v232
  %248 = vst [vmem:[#allocation2 + $0x1c8] sm:$0xff] %v230
  %249 = vst [vmem:[#allocation2 + $0x1d0] sm:$0xff] %v228
  %250 = vst [vmem:[#allocation2 + $0x1d8] sm:$0xff] %v238
  %251 = vrot.lane.b32.xlu0 %v29, 126
  %v252 = vpop.permute.xlu0 %251
  %253 = vrot.lane.b32.xlu0 %v35, 126
  %v254 = vpop.permute.xlu0 %253
  %255 = vrot.lane.b32.xlu0 %v30, 126
  %v256 = vpop.permute.xlu0 %255
  %257 = vrot.lane.b32.xlu0 %v36, 126
  %v258 = vpop.permute.xlu0 %257
  %259 = vrot.lane.b32.xlu0 %v31, 126
  %v260 = vpop.permute.xlu0 %259
  %261 = vrot.lane.b32.xlu0 %v37, 126
  %v262 = vpop.permute.xlu0 %261
  %263 = vrot.lane.b32.xlu0 %v32, 126
  %v264 = vpop.permute.xlu0 %263
  %265 = vrot.lane.b32.xlu0 %v38, 126
  %v266 = vpop.permute.xlu0 %265
  %267 = vrot.lane.b32.xlu0 %v33, 126
  %v268 = vpop.permute.xlu0 %267
  %269 = vrot.lane.b32.xlu0 %v39, 126
  %v270 = vpop.permute.xlu0 %269
  %271 = vrot.lane.b32.xlu0 %v34, 126
  %v272 = vpop.permute.xlu0 %271
  %273 = vrot.lane.b32.xlu0 %v40, 126
  %v274 = vpop.permute.xlu0 %273
  %vm275 = vcmp.lt.s32.totalorder %v66, 126
  %v276 = vsel %vm275, %v268, %v272
  %v277 = vsel %vm275, %v270, %v274
  %v278 = vsel %vm275, %v264, %v268
  %v279 = vsel %vm275, %v266, %v270
  %v280 = vsel %vm275, %v260, %v264
  %v281 = vsel %vm275, %v262, %v266
  %v282 = vsel %vm275, %v256, %v260
  %v283 = vsel %vm275, %v258, %v262
  %v284 = vsel %vm275, %v252, %v256
  %v285 = vsel %vm275, %v254, %v258
  %v286 = vsel %vm275, %v272, %v252
  %v287 = vsel %vm275, %v274, %v254
  %288 = vst [vmem:[#allocation2 + $0x1e0] sm:$0xff] %v284
  %289 = vst [vmem:[#allocation2 + $0x1e8] sm:$0xff] %v282
  %290 = vst [vmem:[#allocation2 + $0x1f0] sm:$0xff] %v280
  %291 = vst [vmem:[#allocation2 + $0x1f8] sm:$0xff] %v278
  %292 = vst [vmem:[#allocation2 + $0x200] sm:$0xff] %v276
  %293 = vst [vmem:[#allocation2 + $0x208] sm:$0xff] %v286
  %294 = vst [vmem:[#allocation2 + $0x210] sm:$0xff] %v285
  %295 = vst [vmem:[#allocation2 + $0x218] sm:$0xff] %v283
  %296 = vst [vmem:[#allocation2 + $0x220] sm:$0xff] %v281
  %297 = vst [vmem:[#allocation2 + $0x228] sm:$0xff] %v279
  %298 = vst [vmem:[#allocation2 + $0x230] sm:$0xff] %v277
  %299 = vst [vmem:[#allocation2 + $0x238] sm:$0xff] %v287
  %300 = vrot.lane.b32.xlu0 %v29, 125
  %v301 = vpop.permute.xlu0 %300
  %302 = vrot.lane.b32.xlu0 %v35, 125
  %v303 = vpop.permute.xlu0 %302
  %304 = vrot.lane.b32.xlu0 %v30, 125
  %v305 = vpop.permute.xlu0 %304
  %306 = vrot.lane.b32.xlu0 %v36, 125
  %v307 = vpop.permute.xlu0 %306
  %308 = vrot.lane.b32.xlu0 %v31, 125
  %v309 = vpop.permute.xlu0 %308
  %310 = vrot.lane.b32.xlu0 %v37, 125
  %v311 = vpop.permute.xlu0 %310
  %312 = vrot.lane.b32.xlu0 %v32, 125
  %v313 = vpop.permute.xlu0 %312
  %314 = vrot.lane.b32.xlu0 %v38, 125
  %v315 = vpop.permute.xlu0 %314
  %316 = vrot.lane.b32.xlu0 %v33, 125
  %v317 = vpop.permute.xlu0 %316
  %318 = vrot.lane.b32.xlu0 %v39, 125
  %v319 = vpop.permute.xlu0 %318
  %320 = vrot.lane.b32.xlu0 %v34, 125
  %v321 = vpop.permute.xlu0 %320
  %322 = vrot.lane.b32.xlu0 %v40, 125
  %v323 = vpop.permute.xlu0 %322
  %vm324 = vcmp.lt.s32.totalorder %v66, 125
  %v325 = vsel %vm324, %v317, %v321
  %v326 = vsel %vm324, %v319, %v323
  %v327 = vsel %vm324, %v313, %v317
  %v328 = vsel %vm324, %v315, %v319
  %v329 = vsel %vm324, %v309, %v313
  %v330 = vsel %vm324, %v311, %v315
  %v331 = vsel %vm324, %v305, %v309
  %v332 = vsel %vm324, %v307, %v311
  %v333 = vsel %vm324, %v301, %v305
  %v334 = vsel %vm324, %v303, %v307
  %v335 = vsel %vm324, %v321, %v301
  %v336 = vsel %vm324, %v323, %v303
  %337 = vst [vmem:[#allocation2 + $0x240] sm:$0xff] %v333
  %338 = vst [vmem:[#allocation2 + $0x248] sm:$0xff] %v331
  %339 = vst [vmem:[#allocation2 + $0x250] sm:$0xff] %v329
  %340 = vst [vmem:[#allocation2 + $0x258] sm:$0xff] %v327
  %341 = vst [vmem:[#allocation2 + $0x260] sm:$0xff] %v325
  %342 = vst [vmem:[#allocation2 + $0x268] sm:$0xff] %v335
  %343 = vst [vmem:[#allocation2 + $0x270] sm:$0xff] %v334
  %344 = vst [vmem:[#allocation2 + $0x278] sm:$0xff] %v332
  %345 = vst [vmem:[#allocation2 + $0x280] sm:$0xff] %v330
  %346 = vst [vmem:[#allocation2 + $0x288] sm:$0xff] %v328
  %347 = vst [vmem:[#allocation2 + $0x290] sm:$0xff] %v326
  %348 = vst [vmem:[#allocation2 + $0x298] sm:$0xff] %v336
  %v349 = vld [vmem:[%s4] sm:$0xff]
  %v350 = vld [vmem:[%s4 + $0x8] sm:$0xff]
  %v351 = vld [vmem:[#allocation2] sm:$0xff]
  %v352 = vld [vmem:[#allocation2 + $0x8] sm:$0xff]
  %v353 = vld [vmem:[#allocation2 + $0x10] sm:$0xff]
  %v354 = vld [vmem:[#allocation2 + $0x18] sm:$0xff]
  %v355 = vld [vmem:[#allocation2 + $0x20] sm:$0xff]
  %v356 = vld [vmem:[#allocation2 + $0x28] sm:$0xff]
  %v357 = vld [vmem:[#allocation2 + $0x30] sm:$0xff]
  %v358 = vld [vmem:[#allocation2 + $0x38] sm:$0xff]
  %v359 = vld [vmem:[#allocation2 + $0x40] sm:$0xff]
  %v360 = vld [vmem:[#allocation2 + $0x48] sm:$0xff]
  %v361 = vld [vmem:[#allocation2 + $0x50] sm:$0xff]
  %v362 = vld [vmem:[#allocation2 + $0x58] sm:$0xff]
  %v363 = vld [vmem:[#allocation2 + $0x60] sm:$0xff]
  %v364 = vld [vmem:[#allocation2 + $0x68] sm:$0xff]
  %v365 = vld [vmem:[#allocation2 + $0x70] sm:$0xff]
  %v366 = vld [vmem:[#allocation2 + $0x78] sm:$0xff]
  %v367 = vld [vmem:[#allocation2 + $0x80] sm:$0xff]
  %v368 = vld [vmem:[#allocation2 + $0x88] sm:$0xff]
  %v369 = vld [vmem:[#allocation2 + $0x90] sm:$0xff]
  %v370 = vld [vmem:[#allocation2 + $0x98] sm:$0xff]
  %v371 = vld [vmem:[#allocation2 + $0xa0] sm:$0xff]
  %v372 = vld [vmem:[#allocation2 + $0xa8] sm:$0xff]
  %v373 = vld [vmem:[#allocation2 + $0xb0] sm:$0xff]
  %v374 = vld [vmem:[#allocation2 + $0xb8] sm:$0xff]
  %v375 = vld [vmem:[#allocation2 + $0xc0] sm:$0xff]
  %v376 = vld [vmem:[#allocation2 + $0xc8] sm:$0xff]
  %v377 = vld [vmem:[#allocation2 + $0xd0] sm:$0xff]
  %v378 = vld [vmem:[#allocation2 + $0xd8] sm:$0xff]
  %v379 = vld [vmem:[#allocation2 + $0xe0] sm:$0xff]
  %v380 = vld [vmem:[#allocation2 + $0xe8] sm:$0xff]
  %v381 = vld [vmem:[#allocation2 + $0xf0] sm:$0xff]
  %v382 = vld [vmem:[#allocation2 + $0xf8] sm:$0xff]
  %v383 = vld [vmem:[#allocation2 + $0x100] sm:$0xff]
  %v384 = vld [vmem:[#allocation2 + $0x108] sm:$0xff]
  %v385 = vld [vmem:[#allocation2 + $0x110] sm:$0xff]
  %v386 = vld [vmem:[#allocation2 + $0x118] sm:$0xff]
  %v387 = vld [vmem:[#allocation2 + $0x120] sm:$0xff]
  %v388 = vld [vmem:[#allocation2 + $0x128] sm:$0xff]
  %v389 = vld [vmem:[#allocation2 + $0x130] sm:$0xff]
  %v390 = vld [vmem:[#allocation2 + $0x138] sm:$0xff]
  %v391 = vld [vmem:[#allocation2 + $0x140] sm:$0xff]
  %v392 = vld [vmem:[#allocation2 + $0x148] sm:$0xff]
  %v393 = vld [vmem:[#allocation2 + $0x150] sm:$0xff]
  %v394 = vld [vmem:[#allocation2 + $0x158] sm:$0xff]
  %v395 = vld [vmem:[#allocation2 + $0x160] sm:$0xff]
  %v396 = vld [vmem:[#allocation2 + $0x168] sm:$0xff]
  %v397 = vld [vmem:[#allocation2 + $0x170] sm:$0xff]
  %v398 = vld [vmem:[#allocation2 + $0x178] sm:$0xff]
  %v399 = vld [vmem:[#allocation2 + $0x180] sm:$0xff]
  %v400 = vld [vmem:[#allocation2 + $0x188] sm:$0xff]
  %v401 = vld [vmem:[#allocation2 + $0x190] sm:$0xff]
  %v402 = vld [vmem:[#allocation2 + $0x198] sm:$0xff]
  %v403 = vld [vmem:[#allocation2 + $0x1a0] sm:$0xff]
  %v404 = vld [vmem:[#allocation2 + $0x1a8] sm:$0xff]
  %v405 = vld [vmem:[#allocation2 + $0x1b0] sm:$0xff]
  %v406 = vld [vmem:[#allocation2 + $0x1b8] sm:$0xff]
  %v407 = vld [vmem:[#allocation2 + $0x1c0] sm:$0xff]
  %v408 = vld [vmem:[#allocation2 + $0x1c8] sm:$0xff]
  %v409 = vld [vmem:[#allocation2 + $0x1d0] sm:$0xff]
  %v410 = vld [vmem:[#allocation2 + $0x1d8] sm:$0xff]
  %v411 = vld [vmem:[#allocation2 + $0x1e0] sm:$0xff]
  %v412 = vld [vmem:[#allocation2 + $0x1e8] sm:$0xff]
  %v413 = vld [vmem:[#allocation2 + $0x1f0] sm:$0xff]
  %v414 = vld [vmem:[#allocation2 + $0x1f8] sm:$0xff]
  %v415 = vld [vmem:[#allocation2 + $0x200] sm:$0xff]
  %v416 = vld [vmem:[#allocation2 + $0x208] sm:$0xff]
  %v417 = vld [vmem:[#allocation2 + $0x210] sm:$0xff]
  %v418 = vld [vmem:[#allocation2 + $0x218] sm:$0xff]
  %v419 = vld [vmem:[#allocation2 + $0x220] sm:$0xff]
  %v420 = vld [vmem:[#allocation2 + $0x228] sm:$0xff]
  %v421 = vld [vmem:[#allocation2 + $0x230] sm:$0xff]
  %v422 = vld [vmem:[#allocation2 + $0x238] sm:$0xff]
  %v423 = vld [vmem:[#allocation2 + $0x240] sm:$0xff]
  %v424 = vld [vmem:[#allocation2 + $0x248] sm:$0xff]
  %v425 = vld [vmem:[#allocation2 + $0x250] sm:$0xff]
  %v426 = vld [vmem:[#allocation2 + $0x258] sm:$0xff]
  %v427 = vld [vmem:[#allocation2 + $0x260] sm:$0xff]
  %v428 = vld [vmem:[#allocation2 + $0x268] sm:$0xff]
  %v429 = vld [vmem:[#allocation2 + $0x270] sm:$0xff]
  %v430 = vld [vmem:[#allocation2 + $0x278] sm:$0xff]
  %v431 = vld [vmem:[#allocation2 + $0x280] sm:$0xff]
  %v432 = vld [vmem:[#allocation2 + $0x288] sm:$0xff]
  %v433 = vld [vmem:[#allocation2 + $0x290] sm:$0xff]
  %v434 = vld [vmem:[#allocation2 + $0x298] sm:$0xff]
  %vm435 = vcmask 916480
  %v437 = vsel %vm435, %v349, 0
  %v440 = vsel %vm435, %v350, 0
  %442 = vmatprep.subr.mxu0 %v352
  %443 = vmatpush1.msra.mxu0 %v351
  %444 = vmatprep.subr.mxu0 %v358
  %445 = vmatpush1.msra.mxu0 %v357
  %446 = vmatprep.subr.mxu0 %v364
  %447 = vmatpush1.msra.mxu0 %v363
  %448 = vmatprep.subr.mxu0 %v370
  %449 = vmatpush1.msra.mxu0 %v369
  %450 = vmatprep.subr.mxu0 %v376
  %451 = vmatpush1.msra.mxu0 %v375
  %452 = vmatprep.subr.mxu0 %v382
  %453 = vmatpush1.msra.mxu0 %v381
  %454 = vmatprep.subr.mxu0 %v388
  %455 = vmatpush1.msra.mxu0 %v387
  %456 = vmatprep.subr.mxu0 %v394
  %457 = vmatpush1.msra.mxu0 %v393
  %458 = vmatprep.subr.mxu0 %v400
  %459 = vmatpush1.msra.mxu0 %v399
  %460 = vmatprep.subr.mxu0 %v406
  %461 = vmatpush1.msra.mxu0 %v405
  %462 = vmatprep.subr.mxu0 %v412
  %463 = vmatpush1.msra.mxu0 %v411
  %464 = vmatprep.subr.mxu0 %v418
  %465 = vmatpush1.msra.mxu0 %v417
  %466 = vmatprep.subr.mxu0 %v424
  %467 = vmatpush1.msra.mxu0 %v423
  %468 = vmatprep.subr.mxu0 %v430
  %469 = vmatpush1.msra.mxu0 %v429
  %470 = vmatprep.subr.mxu0 0.0
  %471 = vmatpush1.msra.mxu0 0.0
  %472 = vmatprep.subr.mxu0 0.0
  %473 = vmatpush1.msra.mxu0 0.0
  %474 = vmatprep.subr.mxu0 0.0
  %475 = vmatpush1.msra.mxu0 0.0
  %476 = vmatprep.subr.mxu0 0.0
  %477 = vmatpush1.msra.mxu0 0.0
  %478 = vmatprep.subr.mxu0 0.0
  %479 = vmatpush1.msra.mxu0 0.0
  %480 = vmatprep.subr.mxu0 0.0
  %481 = vmatpush1.msra.mxu0 0.0
  %482 = vmatprep.subr.mxu0 0.0
  %483 = vmatpush1.msra.mxu0 0.0
  %484 = vmatprep.subr.mxu0 0.0
  %485 = vmatpush1.msra.mxu0 0.0
  %486 = vmatprep.subr.mxu0 0.0
  %487 = vmatpush1.msra.mxu0 0.0
  %488 = vmatprep.subr.mxu0 0.0
  %489 = vmatpush1.msra.mxu0 0.0
  %490 = vmatprep.subr.mxu0 0.0
  %491 = vmatpush1.msra.mxu0 0.0
  %492 = vmatprep.subr.mxu0 0.0
  %493 = vmatpush1.msra.mxu0 0.0
  %494 = vmatprep.subr.mxu0 0.0
  %495 = vmatpush1.msra.mxu0 0.0
  %496 = vmatprep.subr.mxu0 0.0
  %497 = vmatpush1.msra.mxu0 0.0
  %498 = vmatprep.subr.mxu0 0.0
  %499 = vmatpush1.msra.mxu0 0.0
  %500 = vmatprep.subr.mxu0 0.0
  %501 = vmatpush1.msra.mxu0 0.0
  %502 = vmatprep.subr.mxu0 0.0
  %503 = vmatpush1.msra.mxu0 0.0
  %504 = vmatprep.subr.mxu0 0.0
  %505 = vmatpush1.msra.mxu0 0.0
  %506 = vmatprep.mubr.f32.mxu0 0.0
  %507 = vmatmul.mubr.f32.gmra.mrb[0].mxu0 %v437
  %v508 = vpop.f32.mrb[0].mxu0
  %v509 = vadd.f32 0.0, %v508
  %v510 = vpop.f32.mrb[0].mxu0
  %v511 = vadd.f32 0.0, %v510
  %512 = vmatprep.mubr.f32.mxu0 0.0
  %513 = vmatmul.mubr.f32.gmra.mrb[0].mxu0 %v440
  %v514 = vpop.f32.mrb[0].mxu0
  %v515 = vadd.f32 0.0, %v514
  %v516 = vpop.f32.mrb[0].mxu0
  %v517 = vadd.f32 0.0, %v516
  %518 = vdwg.mxu0
  %519 = vmatprep.subr.mxu0 %v354
  %520 = vmatpush1.msra.mxu0 %v353
  %521 = vmatprep.subr.mxu0 %v360
  %522 = vmatpush1.msra.mxu0 %v359
  %523 = vmatprep.subr.mxu0 %v366
  %524 = vmatpush1.msra.mxu0 %v365
  %525 = vmatprep.subr.mxu0 %v372
  %526 = vmatpush1.msra.mxu0 %v371
  %527 = vmatprep.subr.mxu0 %v378
  %528 = vmatpush1.msra.mxu0 %v377
  %529 = vmatprep.subr.mxu0 %v384
  %530 = vmatpush1.msra.mxu0 %v383
  %531 = vmatprep.subr.mxu0 %v390
  %532 = vmatpush1.msra.mxu0 %v389
  %533 = vmatprep.subr.mxu0 %v396
  %534 = vmatpush1.msra.mxu0 %v395
  %535 = vmatprep.subr.mxu0 %v402
  %536 = vmatpush1.msra.mxu0 %v401
  %537 = vmatprep.subr.mxu0 %v408
  %538 = vmatpush1.msra.mxu0 %v407
  %539 = vmatprep.subr.mxu0 %v414
  %540 = vmatpush1.msra.mxu0 %v413
  %541 = vmatprep.subr.mxu0 %v420
  %542 = vmatpush1.msra.mxu0 %v419
  %543 = vmatprep.subr.mxu0 %v426
  %544 = vmatpush1.msra.mxu0 %v425
  %545 = vmatprep.subr.mxu0 %v432
  %546 = vmatpush1.msra.mxu0 %v431
  %547 = vmatprep.subr.mxu0 0.0
  %548 = vmatpush1.msra.mxu0 0.0
  %549 = vmatprep.subr.mxu0 0.0
  %550 = vmatpush1.msra.mxu0 0.0
  %551 = vmatprep.subr.mxu0 0.0
  %552 = vmatpush1.msra.mxu0 0.0
  %553 = vmatprep.subr.mxu0 0.0
  %554 = vmatpush1.msra.mxu0 0.0
  %555 = vmatprep.subr.mxu0 0.0
  %556 = vmatpush1.msra.mxu0 0.0
  %557 = vmatprep.subr.mxu0 0.0
  %558 = vmatpush1.msra.mxu0 0.0
  %559 = vmatprep.subr.mxu0 0.0
  %560 = vmatpush1.msra.mxu0 0.0
  %561 = vmatprep.subr.mxu0 0.0
  %562 = vmatpush1.msra.mxu0 0.0
  %563 = vmatprep.subr.mxu0 0.0
  %564 = vmatpush1.msra.mxu0 0.0
  %565 = vmatprep.subr.mxu0 0.0
  %566 = vmatpush1.msra.mxu0 0.0
  %567 = vmatprep.subr.mxu0 0.0
  %568 = vmatpush1.msra.mxu0 0.0
  %569 = vmatprep.subr.mxu0 0.0
  %570 = vmatpush1.msra.mxu0 0.0
  %571 = vmatprep.subr.mxu0 0.0
  %572 = vmatpush1.msra.mxu0 0.0
  %573 = vmatprep.subr.mxu0 0.0
  %574 = vmatpush1.msra.mxu0 0.0
  %575 = vmatprep.subr.mxu0 0.0
  %576 = vmatpush1.msra.mxu0 0.0
  %577 = vmatprep.subr.mxu0 0.0
  %578 = vmatpush1.msra.mxu0 0.0
  %579 = vmatprep.subr.mxu0 0.0
  %580 = vmatpush1.msra.mxu0 0.0
  %581 = vmatprep.subr.mxu0 0.0
  %582 = vmatpush1.msra.mxu0 0.0
  %583 = vmatprep.mubr.f32.mxu0 0.0
  %584 = vmatmul.mubr.f32.gmra.mrb[0].mxu0 %v437
  %v585 = vpop.f32.mrb[0].mxu0
  %v586 = vadd.f32 0.0, %v585
  %v587 = vpop.f32.mrb[0].mxu0
  %v588 = vadd.f32 0.0, %v587
  %589 = vmatprep.mubr.f32.mxu0 0.0
  %590 = vmatmul.mubr.f32.gmra.mrb[0].mxu0 %v440
  %v591 = vpop.f32.mrb[0].mxu0
  %v592 = vadd.f32 0.0, %v591
  %v593 = vpop.f32.mrb[0].mxu0
  %v594 = vadd.f32 0.0, %v593
  %595 = vdwg.mxu0
  %596 = vmatprep.subr.mxu0 %v356
  %597 = vmatpush1.msra.mxu0 %v355
  %598 = vmatprep.subr.mxu0 %v362
  %599 = vmatpush1.msra.mxu0 %v361
  %600 = vmatprep.subr.mxu0 %v368
  %601 = vmatpush1.msra.mxu0 %v367
  %602 = vmatprep.subr.mxu0 %v374
  %603 = vmatpush1.msra.mxu0 %v373
  %604 = vmatprep.subr.mxu0 %v380
  %605 = vmatpush1.msra.mxu0 %v379
  %606 = vmatprep.subr.mxu0 %v386
  %607 = vmatpush1.msra.mxu0 %v385
  %608 = vmatprep.subr.mxu0 %v392
  %609 = vmatpush1.msra.mxu0 %v391
  %610 = vmatprep.subr.mxu0 %v398
  %611 = vmatpush1.msra.mxu0 %v397
  %612 = vmatprep.subr.mxu0 %v404
  %613 = vmatpush1.msra.mxu0 %v403
  %614 = vmatprep.subr.mxu0 %v410
  %615 = vmatpush1.msra.mxu0 %v409
  %616 = vmatprep.subr.mxu0 %v416
  %617 = vmatpush1.msra.mxu0 %v415
  %618 = vmatprep.subr.mxu0 %v422
  %619 = vmatpush1.msra.mxu0 %v421
  %620 = vmatprep.subr.mxu0 %v428
  %621 = vmatpush1.msra.mxu0 %v427
  %622 = vmatprep.subr.mxu0 %v434
  %623 = vmatpush1.msra.mxu0 %v433
  %624 = vmatprep.subr.mxu0 0.0
  %625 = vmatpush1.msra.mxu0 0.0
  %626 = vmatprep.subr.mxu0 0.0
  %627 = vmatpush1.msra.mxu0 0.0
  %628 = vmatprep.subr.mxu0 0.0
  %629 = vmatpush1.msra.mxu0 0.0
  %630 = vmatprep.subr.mxu0 0.0
  %631 = vmatpush1.msra.mxu0 0.0
  %632 = vmatprep.subr.mxu0 0.0
  %633 = vmatpush1.msra.mxu0 0.0
  %634 = vmatprep.subr.mxu0 0.0
  %635 = vmatpush1.msra.mxu0 0.0
  %636 = vmatprep.subr.mxu0 0.0
  %637 = vmatpush1.msra.mxu0 0.0
  %638 = vmatprep.subr.mxu0 0.0
  %639 = vmatpush1.msra.mxu0 0.0
  %640 = vmatprep.subr.mxu0 0.0
  %641 = vmatpush1.msra.mxu0 0.0
  %642 = vmatprep.subr.mxu0 0.0
  %643 = vmatpush1.msra.mxu0 0.0
  %644 = vmatprep.subr.mxu0 0.0
  %645 = vmatpush1.msra.mxu0 0.0
  %646 = vmatprep.subr.mxu0 0.0
  %647 = vmatpush1.msra.mxu0 0.0
  %648 = vmatprep.subr.mxu0 0.0
  %649 = vmatpush1.msra.mxu0 0.0
  %650 = vmatprep.subr.mxu0 0.0
  %651 = vmatpush1.msra.mxu0 0.0
  %652 = vmatprep.subr.mxu0 0.0
  %653 = vmatpush1.msra.mxu0 0.0
  %654 = vmatprep.subr.mxu0 0.0
  %655 = vmatpush1.msra.mxu0 0.0
  %656 = vmatprep.subr.mxu0 0.0
  %657 = vmatpush1.msra.mxu0 0.0
  %658 = vmatprep.subr.mxu0 0.0
  %659 = vmatpush1.msra.mxu0 0.0
  %660 = vmatprep.mubr.f32.mxu0 0.0
  %661 = vmatmul.mubr.f32.gmra.mrb[0].mxu0 %v437
  %v662 = vpop.f32.mrb[0].mxu0
  %v663 = vadd.f32 0.0, %v662
  %v664 = vpop.f32.mrb[0].mxu0
  %v665 = vadd.f32 0.0, %v664
  %666 = vmatprep.mubr.f32.mxu0 0.0
  %667 = vmatmul.mubr.f32.gmra.mrb[0].mxu0 %v440
  %v668 = vpop.f32.mrb[0].mxu0
  %v669 = vadd.f32 0.0, %v668
  %v670 = vpop.f32.mrb[0].mxu0
  %v671 = vadd.f32 0.0, %v670
  %672 = vdwg.mxu0
  %673 = vrot.lane.b32.xlu0 %v509, 96
  %v674 = vpop.permute.xlu0 %673
  %675 = vrot.lane.b32.xlu0 %v515, 96
  %v676 = vpop.permute.xlu0 %675
  %677 = vrot.lane.b32.xlu0 %v511, 96
  %v678 = vpop.permute.xlu0 %677
  %679 = vrot.lane.b32.xlu0 %v517, 96
  %v680 = vpop.permute.xlu0 %679
  %681 = vrot.lane.b32.xlu0 %v586, 96
  %v682 = vpop.permute.xlu0 %681
  %683 = vrot.lane.b32.xlu0 %v592, 96
  %v684 = vpop.permute.xlu0 %683
  %685 = vrot.lane.b32.xlu0 %v588, 96
  %v686 = vpop.permute.xlu0 %685
  %687 = vrot.lane.b32.xlu0 %v594, 96
  %v688 = vpop.permute.xlu0 %687
  %689 = vrot.lane.b32.xlu0 %v663, 96
  %v690 = vpop.permute.xlu0 %689
  %691 = vrot.lane.b32.xlu0 %v669, 96
  %v692 = vpop.permute.xlu0 %691
  %693 = vrot.lane.b32.xlu0 %v665, 96
  %v694 = vpop.permute.xlu0 %693
  %695 = vrot.lane.b32.xlu0 %v671, 96
  %v696 = vpop.permute.xlu0 %695
  %vm697 = vcmp.lt.s32.totalorder %v66, 96
  %v698 = vsel %vm697, %v690, %v694
  %v699 = vsel %vm697, %v692, %v696
  %v700 = vsel %vm697, %v686, %v690
  %v701 = vsel %vm697, %v688, %v692
  %v702 = vsel %vm697, %v682, %v686
  %v703 = vsel %vm697, %v684, %v688
  %v704 = vsel %vm697, %v678, %v682
  %v705 = vsel %vm697, %v680, %v684
  %v706 = vsel %vm697, %v674, %v678
  %v707 = vsel %vm697, %v676, %v680
  %v708 = vsel %vm697, %v694, %v674
  %v709 = vsel %vm697, %v696, %v676
  %v710 = vld [vmem:[%s4 + $0x10] sm:$0xff]
  %v711 = vld [vmem:[%s4 + $0x18] sm:$0xff]
  %v713 = vsel %vm435, %v710, 0
  %v716 = vsel %vm435, %v711, 0
  %718 = vmatprep.subr.mxu0 %v352
  %719 = vmatpush1.msra.mxu0 %v351
  %720 = vmatprep.subr.mxu0 %v358
  %721 = vmatpush1.msra.mxu0 %v357
  %722 = vmatprep.subr.mxu0 %v364
  %723 = vmatpush1.msra.mxu0 %v363
  %724 = vmatprep.subr.mxu0 %v370
  %725 = vmatpush1.msra.mxu0 %v369
  %726 = vmatprep.subr.mxu0 %v376
  %727 = vmatpush1.msra.mxu0 %v375
  %728 = vmatprep.subr.mxu0 %v382
  %729 = vmatpush1.msra.mxu0 %v381
  %730 = vmatprep.subr.mxu0 %v388
  %731 = vmatpush1.msra.mxu0 %v387
  %732 = vmatprep.subr.mxu0 %v394
  %733 = vmatpush1.msra.mxu0 %v393
  %734 = vmatprep.subr.mxu0 %v400
  %735 = vmatpush1.msra.mxu0 %v399
  %736 = vmatprep.subr.mxu0 %v406
  %737 = vmatpush1.msra.mxu0 %v405
  %738 = vmatprep.subr.mxu0 %v412
  %739 = vmatpush1.msra.mxu0 %v411
  %740 = vmatprep.subr.mxu0 %v418
  %741 = vmatpush1.msra.mxu0 %v417
  %742 = vmatprep.subr.mxu0 %v424
  %743 = vmatpush1.msra.mxu0 %v423
  %744 = vmatprep.subr.mxu0 %v430
  %745 = vmatpush1.msra.mxu0 %v429
  %746 = vmatprep.subr.mxu0 0.0
  %747 = vmatpush1.msra.mxu0 0.0
  %748 = vmatprep.subr.mxu0 0.0
  %749 = vmatpush1.msra.mxu0 0.0
  %750 = vmatprep.subr.mxu0 0.0
  %751 = vmatpush1.msra.mxu0 0.0
  %752 = vmatprep.subr.mxu0 0.0
  %753 = vmatpush1.msra.mxu0 0.0
  %754 = vmatprep.subr.mxu0 0.0
  %755 = vmatpush1.msra.mxu0 0.0
  %756 = vmatprep.subr.mxu0 0.0
  %757 = vmatpush1.msra.mxu0 0.0
  %758 = vmatprep.subr.mxu0 0.0
  %759 = vmatpush1.msra.mxu0 0.0
  %760 = vmatprep.subr.mxu0 0.0
  %761 = vmatpush1.msra.mxu0 0.0
  %762 = vmatprep.subr.mxu0 0.0
  %763 = vmatpush1.msra.mxu0 0.0
  %764 = vmatprep.subr.mxu0 0.0
  %765 = vmatpush1.msra.mxu0 0.0
  %766 = vmatprep.subr.mxu0 0.0
  %767 = vmatpush1.msra.mxu0 0.0
  %768 = vmatprep.subr.mxu0 0.0
  %769 = vmatpush1.msra.mxu0 0.0
  %770 = vmatprep.subr.mxu0 0.0
  %771 = vmatpush1.msra.mxu0 0.0
  %772 = vmatprep.subr.mxu0 0.0
  %773 = vmatpush1.msra.mxu0 0.0
  %774 = vmatprep.subr.mxu0 0.0
  %775 = vmatpush1.msra.mxu0 0.0
  %776 = vmatprep.subr.mxu0 0.0
  %777 = vmatpush1.msra.mxu0 0.0
  %778 = vmatprep.subr.mxu0 0.0
  %779 = vmatpush1.msra.mxu0 0.0
  %780 = vmatprep.subr.mxu0 0.0
  %781 = vmatpush1.msra.mxu0 0.0
  %782 = vmatprep.mubr.f32.mxu0 0.0
  %783 = vmatmul.mubr.f32.gmra.mrb[0].mxu0 %v713
  %v784 = vpop.f32.mrb[0].mxu0
  %v785 = vadd.f32 0.0, %v784
  %v786 = vpop.f32.mrb[0].mxu0
  %v787 = vadd.f32 0.0, %v786
  %788 = vmatprep.mubr.f32.mxu0 0.0
  %789 = vmatmul.mubr.f32.gmra.mrb[0].mxu0 %v716
  %v790 = vpop.f32.mrb[0].mxu0
  %v791 = vadd.f32 0.0, %v790
  %v792 = vpop.f32.mrb[0].mxu0
  %v793 = vadd.f32 0.0, %v792
  %794 = vdwg.mxu0
  %795 = vmatprep.subr.mxu0 %v354
  %796 = vmatpush1.msra.mxu0 %v353
  %797 = vmatprep.subr.mxu0 %v360
  %798 = vmatpush1.msra.mxu0 %v359
  %799 = vmatprep.subr.mxu0 %v366
  %800 = vmatpush1.msra.mxu0 %v365
  %801 = vmatprep.subr.mxu0 %v372
  %802 = vmatpush1.msra.mxu0 %v371
  %803 = vmatprep.subr.mxu0 %v378
  %804 = vmatpush1.msra.mxu0 %v377
  %805 = vmatprep.subr.mxu0 %v384
  %806 = vmatpush1.msra.mxu0 %v383
  %807 = vmatprep.subr.mxu0 %v390
  %808 = vmatpush1.msra.mxu0 %v389
  %809 = vmatprep.subr.mxu0 %v396
  %810 = vmatpush1.msra.mxu0 %v395
  %811 = vmatprep.subr.mxu0 %v402
  %812 = vmatpush1.msra.mxu0 %v401
  %813 = vmatprep.subr.mxu0 %v408
  %814 = vmatpush1.msra.mxu0 %v407
  %815 = vmatprep.subr.mxu0 %v414
  %816 = vmatpush1.msra.mxu0 %v413
  %817 = vmatprep.subr.mxu0 %v420
  %818 = vmatpush1.msra.mxu0 %v419
  %819 = vmatprep.subr.mxu0 %v426
  %820 = vmatpush1.msra.mxu0 %v425
  %821 = vmatprep.subr.mxu0 %v432
  %822 = vmatpush1.msra.mxu0 %v431
  %823 = vmatprep.subr.mxu0 0.0
  %824 = vmatpush1.msra.mxu0 0.0
  %825 = vmatprep.subr.mxu0 0.0
  %826 = vmatpush1.msra.mxu0 0.0
  %827 = vmatprep.subr.mxu0 0.0
  %828 = vmatpush1.msra.mxu0 0.0
  %829 = vmatprep.subr.mxu0 0.0
  %830 = vmatpush1.msra.mxu0 0.0
  %831 = vmatprep.subr.mxu0 0.0
  %832 = vmatpush1.msra.mxu0 0.0
  %833 = vmatprep.subr.mxu0 0.0
  %834 = vmatpush1.msra.mxu0 0.0
  %835 = vmatprep.subr.mxu0 0.0
  %836 = vmatpush1.msra.mxu0 0.0
  %837 = vmatprep.subr.mxu0 0.0
  %838 = vmatpush1.msra.mxu0 0.0
  %839 = vmatprep.subr.mxu0 0.0
  %840 = vmatpush1.msra.mxu0 0.0
  %841 = vmatprep.subr.mxu0 0.0
  %842 = vmatpush1.msra.mxu0 0.0
  %843 = vmatprep.subr.mxu0 0.0
  %844 = vmatpush1.msra.mxu0 0.0
  %845 = vmatprep.subr.mxu0 0.0
  %846 = vmatpush1.msra.mxu0 0.0
  %847 = vmatprep.subr.mxu0 0.0
  %848 = vmatpush1.msra.mxu0 0.0
  %849 = vmatprep.subr.mxu0 0.0
  %850 = vmatpush1.msra.mxu0 0.0
  %851 = vmatprep.subr.mxu0 0.0
  %852 = vmatpush1.msra.mxu0 0.0
  %853 = vmatprep.subr.mxu0 0.0
  %854 = vmatpush1.msra.mxu0 0.0
  %855 = vmatprep.subr.mxu0 0.0
  %856 = vmatpush1.msra.mxu0 0.0
  %857 = vmatprep.subr.mxu0 0.0
  %858 = vmatpush1.msra.mxu0 0.0
  %859 = vmatprep.mubr.f32.mxu0 0.0
  %860 = vmatmul.mubr.f32.gmra.mrb[0].mxu0 %v713
  %v861 = vpop.f32.mrb[0].mxu0
  %v862 = vadd.f32 0.0, %v861
  %v863 = vpop.f32.mrb[0].mxu0
  %v864 = vadd.f32 0.0, %v863
  %865 = vmatprep.mubr.f32.mxu0 0.0
  %866 = vmatmul.mubr.f32.gmra.mrb[0].mxu0 %v716
  %v867 = vpop.f32.mrb[0].mxu0
  %v868 = vadd.f32 0.0, %v867
  %v869 = vpop.f32.mrb[0].mxu0
  %v870 = vadd.f32 0.0, %v869
  %871 = vdwg.mxu0
  %872 = vmatprep.subr.mxu0 %v356
  %873 = vmatpush1.msra.mxu0 %v355
  %874 = vmatprep.subr.mxu0 %v362
  %875 = vmatpush1.msra.mxu0 %v361
  %876 = vmatprep.subr.mxu0 %v368
  %877 = vmatpush1.msra.mxu0 %v367
  %878 = vmatprep.subr.mxu0 %v374
  %879 = vmatpush1.msra.mxu0 %v373
  %880 = vmatprep.subr.mxu0 %v380
  %881 = vmatpush1.msra.mxu0 %v379
  %882 = vmatprep.subr.mxu0 %v386
  %883 = vmatpush1.msra.mxu0 %v385
  %884 = vmatprep.subr.mxu0 %v392
  %885 = vmatpush1.msra.mxu0 %v391
  %886 = vmatprep.subr.mxu0 %v398
  %887 = vmatpush1.msra.mxu0 %v397
  %888 = vmatprep.subr.mxu0 %v404
  %889 = vmatpush1.msra.mxu0 %v403
  %890 = vmatprep.subr.mxu0 %v410
  %891 = vmatpush1.msra.mxu0 %v409
  %892 = vmatprep.subr.mxu0 %v416
  %893 = vmatpush1.msra.mxu0 %v415
  %894 = vmatprep.subr.mxu0 %v422
  %895 = vmatpush1.msra.mxu0 %v421
  %896 = vmatprep.subr.mxu0 %v428
  %897 = vmatpush1.msra.mxu0 %v427
  %898 = vmatprep.subr.mxu0 %v434
  %899 = vmatpush1.msra.mxu0 %v433
  %900 = vmatprep.subr.mxu0 0.0
  %901 = vmatpush1.msra.mxu0 0.0
  %902 = vmatprep.subr.mxu0 0.0
  %903 = vmatpush1.msra.mxu0 0.0
  %904 = vmatprep.subr.mxu0 0.0
  %905 = vmatpush1.msra.mxu0 0.0
  %906 = vmatprep.subr.mxu0 0.0
  %907 = vmatpush1.msra.mxu0 0.0
  %908 = vmatprep.subr.mxu0 0.0
  %909 = vmatpush1.msra.mxu0 0.0
  %910 = vmatprep.subr.mxu0 0.0
  %911 = vmatpush1.msra.mxu0 0.0
  %912 = vmatprep.subr.mxu0 0.0
  %913 = vmatpush1.msra.mxu0 0.0
  %914 = vmatprep.subr.mxu0 0.0
  %915 = vmatpush1.msra.mxu0 0.0
  %916 = vmatprep.subr.mxu0 0.0
  %917 = vmatpush1.msra.mxu0 0.0
  %918 = vmatprep.subr.mxu0 0.0
  %919 = vmatpush1.msra.mxu0 0.0
  %920 = vmatprep.subr.mxu0 0.0
  %921 = vmatpush1.msra.mxu0 0.0
  %922 = vmatprep.subr.mxu0 0.0
  %923 = vmatpush1.msra.mxu0 0.0
  %924 = vmatprep.subr.mxu0 0.0
  %925 = vmatpush1.msra.mxu0 0.0
  %926 = vmatprep.subr.mxu0 0.0
  %927 = vmatpush1.msra.mxu0 0.0
  %928 = vmatprep.subr.mxu0 0.0
  %929 = vmatpush1.msra.mxu0 0.0
  %930 = vmatprep.subr.mxu0 0.0
  %931 = vmatpush1.msra.mxu0 0.0
  %932 = vmatprep.subr.mxu0 0.0
  %933 = vmatpush1.msra.mxu0 0.0
  %934 = vmatprep.subr.mxu0 0.0
  %935 = vmatpush1.msra.mxu0 0.0
  %936 = vmatprep.mubr.f32.mxu0 0.0
  %937 = vmatmul.mubr.f32.gmra.mrb[0].mxu0 %v713
  %v938 = vpop.f32.mrb[0].mxu0
  %v939 = vadd.f32 0.0, %v938
  %v940 = vpop.f32.mrb[0].mxu0
  %v941 = vadd.f32 0.0, %v940
  %942 = vmatprep.mubr.f32.mxu0 0.0
  %943 = vmatmul.mubr.f32.gmra.mrb[0].mxu0 %v716
  %v944 = vpop.f32.mrb[0].mxu0
  %v945 = vadd.f32 0.0, %v944
  %v946 = vpop.f32.mrb[0].mxu0
  %v947 = vadd.f32 0.0, %v946
  %948 = vdwg.mxu0
  %949 = vrot.lane.b32.xlu0 %v785, 64
  %v950 = vpop.permute.xlu0 %949
  %951 = vrot.lane.b32.xlu0 %v791, 64
  %v952 = vpop.permute.xlu0 %951
  %953 = vrot.lane.b32.xlu0 %v787, 64
  %v954 = vpop.permute.xlu0 %953
  %955 = vrot.lane.b32.xlu0 %v793, 64
  %v956 = vpop.permute.xlu0 %955
  %957 = vrot.lane.b32.xlu0 %v862, 64
  %v958 = vpop.permute.xlu0 %957
  %959 = vrot.lane.b32.xlu0 %v868, 64
  %v960 = vpop.permute.xlu0 %959
  %961 = vrot.lane.b32.xlu0 %v864, 64
  %v962 = vpop.permute.xlu0 %961
  %963 = vrot.lane.b32.xlu0 %v870, 64
  %v964 = vpop.permute.xlu0 %963
  %965 = vrot.lane.b32.xlu0 %v939, 64
  %v966 = vpop.permute.xlu0 %965
  %967 = vrot.lane.b32.xlu0 %v945, 64
  %v968 = vpop.permute.xlu0 %967
  %969 = vrot.lane.b32.xlu0 %v941, 64
  %v970 = vpop.permute.xlu0 %969
  %971 = vrot.lane.b32.xlu0 %v947, 64
  %v972 = vpop.permute.xlu0 %971
  %vm973 = vcmp.lt.s32.totalorder %v66, 64
  %v974 = vsel %vm973, %v966, %v970
  %v975 = vsel %vm973, %v968, %v972
  %v976 = vsel %vm973, %v962, %v966
  %v977 = vsel %vm973, %v964, %v968
  %v978 = vsel %vm973, %v958, %v962
  %v979 = vsel %vm973, %v960, %v964
  %v980 = vsel %vm973, %v954, %v958
  %v981 = vsel %vm973, %v956, %v960
  %v982 = vsel %vm973, %v950, %v954
  %v983 = vsel %vm973, %v952, %v956
  %v984 = vsel %vm973, %v970, %v950
  %v985 = vsel %vm973, %v972, %v952
  %v986 = vadd.f32 %v708, %v984
  %v987 = vadd.f32 %v706, %v982
  %v988 = vadd.f32 %v704, %v980
  %v989 = vadd.f32 %v702, %v978
  %v990 = vadd.f32 %v700, %v976
  %v991 = vadd.f32 %v698, %v974
  %v992 = vadd.f32 %v709, %v985
  %v993 = vadd.f32 %v707, %v983
  %v994 = vadd.f32 %v705, %v981
  %v995 = vadd.f32 %v703, %v979
  %v996 = vadd.f32 %v701, %v977
  %v997 = vadd.f32 %v699, %v975
  %v998 = vld [vmem:[%s4 + $0x20] sm:$0xff]
  %v999 = vld [vmem:[%s4 + $0x28] sm:$0xff]
  %v1001 = vsel %vm435, %v998, 0
  %v1004 = vsel %vm435, %v999, 0
  %1006 = vmatprep.subr.mxu0 %v352
  %1007 = vmatpush1.msra.mxu0 %v351
  %1008 = vmatprep.subr.mxu0 %v358
  %1009 = vmatpush1.msra.mxu0 %v357
  %1010 = vmatprep.subr.mxu0 %v364
  %1011 = vmatpush1.msra.mxu0 %v363
  %1012 = vmatprep.subr.mxu0 %v370
  %1013 = vmatpush1.msra.mxu0 %v369
  %1014 = vmatprep.subr.mxu0 %v376
  %1015 = vmatpush1.msra.mxu0 %v375
  %1016 = vmatprep.subr.mxu0 %v382
  %1017 = vmatpush1.msra.mxu0 %v381
  %1018 = vmatprep.subr.mxu0 %v388
  %1019 = vmatpush1.msra.mxu0 %v387
  %1020 = vmatprep.subr.mxu0 %v394
  %1021 = vmatpush1.msra.mxu0 %v393
  %1022 = vmatprep.subr.mxu0 %v400
  %1023 = vmatpush1.msra.mxu0 %v399
  %1024 = vmatprep.subr.mxu0 %v406
  %1025 = vmatpush1.msra.mxu0 %v405
  %1026 = vmatprep.subr.mxu0 %v412
  %1027 = vmatpush1.msra.mxu0 %v411
  %1028 = vmatprep.subr.mxu0 %v418
  %1029 = vmatpush1.msra.mxu0 %v417
  %1030 = vmatprep.subr.mxu0 %v424
  %1031 = vmatpush1.msra.mxu0 %v423
  %1032 = vmatprep.subr.mxu0 %v430
  %1033 = vmatpush1.msra.mxu0 %v429
  %1034 = vmatprep.subr.mxu0 0.0
  %1035 = vmatpush1.msra.mxu0 0.0
  %1036 = vmatprep.subr.mxu0 0.0
  %1037 = vmatpush1.msra.mxu0 0.0
  %1038 = vmatprep.subr.mxu0 0.0
  %1039 = vmatpush1.msra.mxu0 0.0
  %1040 = vmatprep.subr.mxu0 0.0
  %1041 = vmatpush1.msra.mxu0 0.0
  %1042 = vmatprep.subr.mxu0 0.0
  %1043 = vmatpush1.msra.mxu0 0.0
  %1044 = vmatprep.subr.mxu0 0.0
  %1045 = vmatpush1.msra.mxu0 0.0
  %1046 = vmatprep.subr.mxu0 0.0
  %1047 = vmatpush1.msra.mxu0 0.0
  %1048 = vmatprep.subr.mxu0 0.0
  %1049 = vmatpush1.msra.mxu0 0.0
  %1050 = vmatprep.subr.mxu0 0.0
  %1051 = vmatpush1.msra.mxu0 0.0
  %1052 = vmatprep.subr.mxu0 0.0
  %1053 = vmatpush1.msra.mxu0 0.0
  %1054 = vmatprep.subr.mxu0 0.0
  %1055 = vmatpush1.msra.mxu0 0.0
  %1056 = vmatprep.subr.mxu0 0.0
  %1057 = vmatpush1.msra.mxu0 0.0
  %1058 = vmatprep.subr.mxu0 0.0
  %1059 = vmatpush1.msra.mxu0 0.0
  %1060 = vmatprep.subr.mxu0 0.0
  %1061 = vmatpush1.msra.mxu0 0.0
  %1062 = vmatprep.subr.mxu0 0.0
  %1063 = vmatpush1.msra.mxu0 0.0
  %1064 = vmatprep.subr.mxu0 0.0
  %1065 = vmatpush1.msra.mxu0 0.0
  %1066 = vmatprep.subr.mxu0 0.0
  %1067 = vmatpush1.msra.mxu0 0.0
  %1068 = vmatprep.subr.mxu0 0.0
  %1069 = vmatpush1.msra.mxu0 0.0
  %1070 = vmatprep.mubr.f32.mxu0 0.0
  %1071 = vmatmul.mubr.f32.gmra.mrb[0].mxu0 %v1001
  %v1072 = vpop.f32.mrb[0].mxu0
  %v1073 = vadd.f32 0.0, %v1072
  %v1074 = vpop.f32.mrb[0].mxu0
  %v1075 = vadd.f32 0.0, %v1074
  %1076 = vmatprep.mubr.f32.mxu0 0.0
  %1077 = vmatmul.mubr.f32.gmra.mrb[0].mxu0 %v1004
  %v1078 = vpop.f32.mrb[0].mxu0
  %v1079 = vadd.f32 0.0, %v1078
  %v1080 = vpop.f32.mrb[0].mxu0
  %v1081 = vadd.f32 0.0, %v1080
  %1082 = vdwg.mxu0
  %1083 = vmatprep.subr.mxu0 %v354
  %1084 = vmatpush1.msra.mxu0 %v353
  %1085 = vmatprep.subr.mxu0 %v360
  %1086 = vmatpush1.msra.mxu0 %v359
  %1087 = vmatprep.subr.mxu0 %v366
  %1088 = vmatpush1.msra.mxu0 %v365
  %1089 = vmatprep.subr.mxu0 %v372
  %1090 = vmatpush1.msra.mxu0 %v371
  %1091 = vmatprep.subr.mxu0 %v378
  %1092 = vmatpush1.msra.mxu0 %v377
  %1093 = vmatprep.subr.mxu0 %v384
  %1094 = vmatpush1.msra.mxu0 %v383
  %1095 = vmatprep.subr.mxu0 %v390
  %1096 = vmatpush1.msra.mxu0 %v389
  %1097 = vmatprep.subr.mxu0 %v396
  %1098 = vmatpush1.msra.mxu0 %v395
  %1099 = vmatprep.subr.mxu0 %v402
  %1100 = vmatpush1.msra.mxu0 %v401
  %1101 = vmatprep.subr.mxu0 %v408
  %1102 = vmatpush1.msra.mxu0 %v407
  %1103 = vmatprep.subr.mxu0 %v414
  %1104 = vmatpush1.msra.mxu0 %v413
  %1105 = vmatprep.subr.mxu0 %v420
  %1106 = vmatpush1.msra.mxu0 %v419
  %1107 = vmatprep.subr.mxu0 %v426
  %1108 = vmatpush1.msra.mxu0 %v425
  %1109 = vmatprep.subr.mxu0 %v432
  %1110 = vmatpush1.msra.mxu0 %v431
  %1111 = vmatprep.subr.mxu0 0.0
  %1112 = vmatpush1.msra.mxu0 0.0
  %1113 = vmatprep.subr.mxu0 0.0
  %1114 = vmatpush1.msra.mxu0 0.0
  %1115 = vmatprep.subr.mxu0 0.0
  %1116 = vmatpush1.msra.mxu0 0.0
  %1117 = vmatprep.subr.mxu0 0.0
  %1118 = vmatpush1.msra.mxu0 0.0
  %1119 = vmatprep.subr.mxu0 0.0
  %1120 = vmatpush1.msra.mxu0 0.0
  %1121 = vmatprep.subr.mxu0 0.0
  %1122 = vmatpush1.msra.mxu0 0.0
  %1123 = vmatprep.subr.mxu0 0.0
  %1124 = vmatpush1.msra.mxu0 0.0
  %1125 = vmatprep.subr.mxu0 0.0
  %1126 = vmatpush1.msra.mxu0 0.0
  %1127 = vmatprep.subr.mxu0 0.0
  %1128 = vmatpush1.msra.mxu0 0.0
  %1129 = vmatprep.subr.mxu0 0.0
  %1130 = vmatpush1.msra.mxu0 0.0
  %1131 = vmatprep.subr.mxu0 0.0
  %1132 = vmatpush1.msra.mxu0 0.0
  %1133 = vmatprep.subr.mxu0 0.0
  %1134 = vmatpush1.msra.mxu0 0.0
  %1135 = vmatprep.subr.mxu0 0.0
  %1136 = vmatpush1.msra.mxu0 0.0
  %1137 = vmatprep.subr.mxu0 0.0
  %1138 = vmatpush1.msra.mxu0 0.0
  %1139 = vmatprep.subr.mxu0 0.0
  %1140 = vmatpush1.msra.mxu0 0.0
  %1141 = vmatprep.subr.mxu0 0.0
  %1142 = vmatpush1.msra.mxu0 0.0
  %1143 = vmatprep.subr.mxu0 0.0
  %1144 = vmatpush1.msra.mxu0 0.0
  %1145 = vmatprep.subr.mxu0 0.0
  %1146 = vmatpush1.msra.mxu0 0.0
  %1147 = vmatprep.mubr.f32.mxu0 0.0
  %1148 = vmatmul.mubr.f32.gmra.mrb[0].mxu0 %v1001
  %v1149 = vpop.f32.mrb[0].mxu0
  %v1150 = vadd.f32 0.0, %v1149
  %v1151 = vpop.f32.mrb[0].mxu0
  %v1152 = vadd.f32 0.0, %v1151
  %1153 = vmatprep.mubr.f32.mxu0 0.0
  %1154 = vmatmul.mubr.f32.gmra.mrb[0].mxu0 %v1004
  %v1155 = vpop.f32.mrb[0].mxu0
  %v1156 = vadd.f32 0.0, %v1155
  %v1157 = vpop.f32.mrb[0].mxu0
  %v1158 = vadd.f32 0.0, %v1157
  %1159 = vdwg.mxu0
  %1160 = vmatprep.subr.mxu0 %v356
  %1161 = vmatpush1.msra.mxu0 %v355
  %1162 = vmatprep.subr.mxu0 %v362
  %1163 = vmatpush1.msra.mxu0 %v361
  %1164 = vmatprep.subr.mxu0 %v368
  %1165 = vmatpush1.msra.mxu0 %v367
  %1166 = vmatprep.subr.mxu0 %v374
  %1167 = vmatpush1.msra.mxu0 %v373
  %1168 = vmatprep.subr.mxu0 %v380
  %1169 = vmatpush1.msra.mxu0 %v379
  %1170 = vmatprep.subr.mxu0 %v386
  %1171 = vmatpush1.msra.mxu0 %v385
  %1172 = vmatprep.subr.mxu0 %v392
  %1173 = vmatpush1.msra.mxu0 %v391
  %1174 = vmatprep.subr.mxu0 %v398
  %1175 = vmatpush1.msra.mxu0 %v397
  %1176 = vmatprep.subr.mxu0 %v404
  %1177 = vmatpush1.msra.mxu0 %v403
  %1178 = vmatprep.subr.mxu0 %v410
  %1179 = vmatpush1.msra.mxu0 %v409
  %1180 = vmatprep.subr.mxu0 %v416
  %1181 = vmatpush1.msra.mxu0 %v415
  %1182 = vmatprep.subr.mxu0 %v422
  %1183 = vmatpush1.msra.mxu0 %v421
  %1184 = vmatprep.subr.mxu0 %v428
  %1185 = vmatpush1.msra.mxu0 %v427
  %1186 = vmatprep.subr.mxu0 %v434
  %1187 = vmatpush1.msra.mxu0 %v433
  %1188 = vmatprep.subr.mxu0 0.0
  %1189 = vmatpush1.msra.mxu0 0.0
  %1190 = vmatprep.subr.mxu0 0.0
  %1191 = vmatpush1.msra.mxu0 0.0
  %1192 = vmatprep.subr.mxu0 0.0
  %1193 = vmatpush1.msra.mxu0 0.0
  %1194 = vmatprep.subr.mxu0 0.0
  %1195 = vmatpush1.msra.mxu0 0.0
  %1196 = vmatprep.subr.mxu0 0.0
  %1197 = vmatpush1.msra.mxu0 0.0
  %1198 = vmatprep.subr.mxu0 0.0
  %1199 = vmatpush1.msra.mxu0 0.0
  %1200 = vmatprep.subr.mxu0 0.0
  %1201 = vmatpush1.msra.mxu0 0.0
  %1202 = vmatprep.subr.mxu0 0.0
  %1203 = vmatpush1.msra.mxu0 0.0
  %1204 = vmatprep.subr.mxu0 0.0
  %1205 = vmatpush1.msra.mxu0 0.0
  %1206 = vmatprep.subr.mxu0 0.0
  %1207 = vmatpush1.msra.mxu0 0.0
  %1208 = vmatprep.subr.mxu0 0.0
  %1209 = vmatpush1.msra.mxu0 0.0
  %1210 = vmatprep.subr.mxu0 0.0
  %1211 = vmatpush1.msra.mxu0 0.0
  %1212 = vmatprep.subr.mxu0 0.0
  %1213 = vmatpush1.msra.mxu0 0.0
  %1214 = vmatprep.subr.mxu0 0.0
  %1215 = vmatpush1.msra.mxu0 0.0
  %1216 = vmatprep.subr.mxu0 0.0
  %1217 = vmatpush1.msra.mxu0 0.0
  %1218 = vmatprep.subr.mxu0 0.0
  %1219 = vmatpush1.msra.mxu0 0.0
  %1220 = vmatprep.subr.mxu0 0.0
  %1221 = vmatpush1.msra.mxu0 0.0
  %1222 = vmatprep.subr.mxu0 0.0
  %1223 = vmatpush1.msra.mxu0 0.0
  %1224 = vmatprep.mubr.f32.mxu0 0.0
  %1225 = vmatmul.mubr.f32.gmra.mrb[0].mxu0 %v1001
  %v1226 = vpop.f32.mrb[0].mxu0
  %v1227 = vadd.f32 0.0, %v1226
  %v1228 = vpop.f32.mrb[0].mxu0
  %v1229 = vadd.f32 0.0, %v1228
  %1230 = vmatprep.mubr.f32.mxu0 0.0
  %1231 = vmatmul.mubr.f32.gmra.mrb[0].mxu0 %v1004
  %v1232 = vpop.f32.mrb[0].mxu0
  %v1233 = vadd.f32 0.0, %v1232
  %v1234 = vpop.f32.mrb[0].mxu0
  %v1235 = vadd.f32 0.0, %v1234
  %1236 = vdwg.mxu0
  %1237 = vrot.lane.b32.xlu0 %v1073, 32
  %v1238 = vpop.permute.xlu0 %1237
  %1239 = vrot.lane.b32.xlu0 %v1079, 32
  %v1240 = vpop.permute.xlu0 %1239
  %1241 = vrot.lane.b32.xlu0 %v1075, 32
  %v1242 = vpop.permute.xlu0 %1241
  %1243 = vrot.lane.b32.xlu0 %v1081, 32
  %v1244 = vpop.permute.xlu0 %1243
  %1245 = vrot.lane.b32.xlu0 %v1150, 32
  %v1246 = vpop.permute.xlu0 %1245
  %1247 = vrot.lane.b32.xlu0 %v1156, 32
  %v1248 = vpop.permute.xlu0 %1247
  %1249 = vrot.lane.b32.xlu0 %v1152, 32
  %v1250 = vpop.permute.xlu0 %1249
  %1251 = vrot.lane.b32.xlu0 %v1158, 32
  %v1252 = vpop.permute.xlu0 %1251
  %1253 = vrot.lane.b32.xlu0 %v1227, 32
  %v1254 = vpop.permute.xlu0 %1253
  %1255 = vrot.lane.b32.xlu0 %v1233, 32
  %v1256 = vpop.permute.xlu0 %1255
  %1257 = vrot.lane.b32.xlu0 %v1229, 32
  %v1258 = vpop.permute.xlu0 %1257
  %1259 = vrot.lane.b32.xlu0 %v1235, 32
  %v1260 = vpop.permute.xlu0 %1259
  %vm1261 = vcmp.lt.s32.totalorder %v66, 32
  %v1262 = vsel %vm1261, %v1254, %v1258
  %v1263 = vsel %vm1261, %v1256, %v1260
  %v1264 = vsel %vm1261, %v1250, %v1254
  %v1265 = vsel %vm1261, %v1252, %v1256
  %v1266 = vsel %vm1261, %v1246, %v1250
  %v1267 = vsel %vm1261, %v1248, %v1252
  %v1268 = vsel %vm1261, %v1242, %v1246
  %v1269 = vsel %vm1261, %v1244, %v1248
  %v1270 = vsel %vm1261, %v1238, %v1242
  %v1271 = vsel %vm1261, %v1240, %v1244
  %v1272 = vsel %vm1261, %v1258, %v1238
  %v1273 = vsel %vm1261, %v1260, %v1240
  %v1274 = vadd.f32 %v986, %v1272
  %v1275 = vadd.f32 %v987, %v1270
  %v1276 = vadd.f32 %v988, %v1268
  %v1277 = vadd.f32 %v989, %v1266
  %v1278 = vadd.f32 %v990, %v1264
  %v1279 = vadd.f32 %v991, %v1262
  %v1280 = vadd.f32 %v992, %v1273
  %v1281 = vadd.f32 %v993, %v1271
  %v1282 = vadd.f32 %v994, %v1269
  %v1283 = vadd.f32 %v995, %v1267
  %v1284 = vadd.f32 %v996, %v1265
  %v1285 = vadd.f32 %v997, %v1263
  %v1286 = vld [vmem:[%s4 + $0x30] sm:$0xff]
  %v1287 = vld [vmem:[%s4 + $0x38] sm:$0xff]
  %v1289 = vsel %vm435, %v1286, 0
  %v1292 = vsel %vm435, %v1287, 0
  %1294 = vmatprep.subr.mxu0 %v352
  %1295 = vmatpush1.msra.mxu0 %v351
  %1296 = vmatprep.subr.mxu0 %v358
  %1297 = vmatpush1.msra.mxu0 %v357
  %1298 = vmatprep.subr.mxu0 %v364
  %1299 = vmatpush1.msra.mxu0 %v363
  %1300 = vmatprep.subr.mxu0 %v370
  %1301 = vmatpush1.msra.mxu0 %v369
  %1302 = vmatprep.subr.mxu0 %v376
  %1303 = vmatpush1.msra.mxu0 %v375
  %1304 = vmatprep.subr.mxu0 %v382
  %1305 = vmatpush1.msra.mxu0 %v381
  %1306 = vmatprep.subr.mxu0 %v388
  %1307 = vmatpush1.msra.mxu0 %v387
  %1308 = vmatprep.subr.mxu0 %v394
  %1309 = vmatpush1.msra.mxu0 %v393
  %1310 = vmatprep.subr.mxu0 %v400
  %1311 = vmatpush1.msra.mxu0 %v399
  %1312 = vmatprep.subr.mxu0 %v406
  %1313 = vmatpush1.msra.mxu0 %v405
  %1314 = vmatprep.subr.mxu0 %v412
  %1315 = vmatpush1.msra.mxu0 %v411
  %1316 = vmatprep.subr.mxu0 %v418
  %1317 = vmatpush1.msra.mxu0 %v417
  %1318 = vmatprep.subr.mxu0 %v424
  %1319 = vmatpush1.msra.mxu0 %v423
  %1320 = vmatprep.subr.mxu0 %v430
  %1321 = vmatpush1.msra.mxu0 %v429
  %1322 = vmatprep.subr.mxu0 0.0
  %1323 = vmatpush1.msra.mxu0 0.0
  %1324 = vmatprep.subr.mxu0 0.0
  %1325 = vmatpush1.msra.mxu0 0.0
  %1326 = vmatprep.subr.mxu0 0.0
  %1327 = vmatpush1.msra.mxu0 0.0
  %1328 = vmatprep.subr.mxu0 0.0
  %1329 = vmatpush1.msra.mxu0 0.0
  %1330 = vmatprep.subr.mxu0 0.0
  %1331 = vmatpush1.msra.mxu0 0.0
  %1332 = vmatprep.subr.mxu0 0.0
  %1333 = vmatpush1.msra.mxu0 0.0
  %1334 = vmatprep.subr.mxu0 0.0
  %1335 = vmatpush1.msra.mxu0 0.0
  %1336 = vmatprep.subr.mxu0 0.0
  %1337 = vmatpush1.msra.mxu0 0.0
  %1338 = vmatprep.subr.mxu0 0.0
  %1339 = vmatpush1.msra.mxu0 0.0
  %1340 = vmatprep.subr.mxu0 0.0
  %1341 = vmatpush1.msra.mxu0 0.0
  %1342 = vmatprep.subr.mxu0 0.0
  %1343 = vmatpush1.msra.mxu0 0.0
  %1344 = vmatprep.subr.mxu0 0.0
  %1345 = vmatpush1.msra.mxu0 0.0
  %1346 = vmatprep.subr.mxu0 0.0
  %1347 = vmatpush1.msra.mxu0 0.0
  %1348 = vmatprep.subr.mxu0 0.0
  %1349 = vmatpush1.msra.mxu0 0.0
  %1350 = vmatprep.subr.mxu0 0.0
  %1351 = vmatpush1.msra.mxu0 0.0
  %1352 = vmatprep.subr.mxu0 0.0
  %1353 = vmatpush1.msra.mxu0 0.0
  %1354 = vmatprep.subr.mxu0 0.0
  %1355 = vmatpush1.msra.mxu0 0.0
  %1356 = vmatprep.subr.mxu0 0.0
  %1357 = vmatpush1.msra.mxu0 0.0
  %1358 = vmatprep.mubr.f32.mxu0 0.0
  %1359 = vmatmul.mubr.f32.gmra.mrb[0].mxu0 %v1289
  %v1360 = vpop.f32.mrb[0].mxu0
  %v1361 = vadd.f32 0.0, %v1360
  %v1362 = vpop.f32.mrb[0].mxu0
  %v1363 = vadd.f32 0.0, %v1362
  %1364 = vmatprep.mubr.f32.mxu0 0.0
  %1365 = vmatmul.mubr.f32.gmra.mrb[0].mxu0 %v1292
  %v1366 = vpop.f32.mrb[0].mxu0
  %v1367 = vadd.f32 0.0, %v1366
  %v1368 = vpop.f32.mrb[0].mxu0
  %v1369 = vadd.f32 0.0, %v1368
  %1370 = vdwg.mxu0
  %1371 = vmatprep.subr.mxu0 %v354
  %1372 = vmatpush1.msra.mxu0 %v353
  %1373 = vmatprep.subr.mxu0 %v360
  %1374 = vmatpush1.msra.mxu0 %v359
  %1375 = vmatprep.subr.mxu0 %v366
  %1376 = vmatpush1.msra.mxu0 %v365
  %1377 = vmatprep.subr.mxu0 %v372
  %1378 = vmatpush1.msra.mxu0 %v371
  %1379 = vmatprep.subr.mxu0 %v378
  %1380 = vmatpush1.msra.mxu0 %v377
  %1381 = vmatprep.subr.mxu0 %v384
  %1382 = vmatpush1.msra.mxu0 %v383
  %1383 = vmatprep.subr.mxu0 %v390
  %1384 = vmatpush1.msra.mxu0 %v389
  %1385 = vmatprep.subr.mxu0 %v396
  %1386 = vmatpush1.msra.mxu0 %v395
  %1387 = vmatprep.subr.mxu0 %v402
  %1388 = vmatpush1.msra.mxu0 %v401
  %1389 = vmatprep.subr.mxu0 %v408
  %1390 = vmatpush1.msra.mxu0 %v407
  %1391 = vmatprep.subr.mxu0 %v414
  %1392 = vmatpush1.msra.mxu0 %v413
  %1393 = vmatprep.subr.mxu0 %v420
  %1394 = vmatpush1.msra.mxu0 %v419
  %1395 = vmatprep.subr.mxu0 %v426
  %1396 = vmatpush1.msra.mxu0 %v425
  %1397 = vmatprep.subr.mxu0 %v432
  %1398 = vmatpush1.msra.mxu0 %v431
  %1399 = vmatprep.subr.mxu0 0.0
  %1400 = vmatpush1.msra.mxu0 0.0
  %1401 = vmatprep.subr.mxu0 0.0
  %1402 = vmatpush1.msra.mxu0 0.0
  %1403 = vmatprep.subr.mxu0 0.0
  %1404 = vmatpush1.msra.mxu0 0.0
  %1405 = vmatprep.subr.mxu0 0.0
  %1406 = vmatpush1.msra.mxu0 0.0
  %1407 = vmatprep.subr.mxu0 0.0
  %1408 = vmatpush1.msra.mxu0 0.0
  %1409 = vmatprep.subr.mxu0 0.0
  %1410 = vmatpush1.msra.mxu0 0.0
  %1411 = vmatprep.subr.mxu0 0.0
  %1412 = vmatpush1.msra.mxu0 0.0
  %1413 = vmatprep.subr.mxu0 0.0
  %1414 = vmatpush1.msra.mxu0 0.0
  %1415 = vmatprep.subr.mxu0 0.0
  %1416 = vmatpush1.msra.mxu0 0.0
  %1417 = vmatprep.subr.mxu0 0.0
  %1418 = vmatpush1.msra.mxu0 0.0
  %1419 = vmatprep.subr.mxu0 0.0
  %1420 = vmatpush1.msra.mxu0 0.0
  %1421 = vmatprep.subr.mxu0 0.0
  %1422 = vmatpush1.msra.mxu0 0.0
  %1423 = vmatprep.subr.mxu0 0.0
  %1424 = vmatpush1.msra.mxu0 0.0
  %1425 = vmatprep.subr.mxu0 0.0
  %1426 = vmatpush1.msra.mxu0 0.0
  %1427 = vmatprep.subr.mxu0 0.0
  %1428 = vmatpush1.msra.mxu0 0.0
  %1429 = vmatprep.subr.mxu0 0.0
  %1430 = vmatpush1.msra.mxu0 0.0
  %1431 = vmatprep.subr.mxu0 0.0
  %1432 = vmatpush1.msra.mxu0 0.0
  %1433 = vmatprep.subr.mxu0 0.0
  %1434 = vmatpush1.msra.mxu0 0.0
  %1435 = vmatprep.mubr.f32.mxu0 0.0
  %1436 = vmatmul.mubr.f32.gmra.mrb[0].mxu0 %v1289
  %v1437 = vpop.f32.mrb[0].mxu0
  %v1438 = vadd.f32 0.0, %v1437
  %v1439 = vpop.f32.mrb[0].mxu0
  %v1440 = vadd.f32 0.0, %v1439
  %1441 = vmatprep.mubr.f32.mxu0 0.0
  %1442 = vmatmul.mubr.f32.gmra.mrb[0].mxu0 %v1292
  %v1443 = vpop.f32.mrb[0].mxu0
  %v1444 = vadd.f32 0.0, %v1443
  %v1445 = vpop.f32.mrb[0].mxu0
  %v1446 = vadd.f32 0.0, %v1445
  %1447 = vdwg.mxu0
  %1448 = vmatprep.subr.mxu0 %v356
  %1449 = vmatpush1.msra.mxu0 %v355
  %1450 = vmatprep.subr.mxu0 %v362
  %1451 = vmatpush1.msra.mxu0 %v361
  %1452 = vmatprep.subr.mxu0 %v368
  %1453 = vmatpush1.msra.mxu0 %v367
  %1454 = vmatprep.subr.mxu0 %v374
  %1455 = vmatpush1.msra.mxu0 %v373
  %1456 = vmatprep.subr.mxu0 %v380
  %1457 = vmatpush1.msra.mxu0 %v379
  %1458 = vmatprep.subr.mxu0 %v386
  %1459 = vmatpush1.msra.mxu0 %v385
  %1460 = vmatprep.subr.mxu0 %v392
  %1461 = vmatpush1.msra.mxu0 %v391
  %1462 = vmatprep.subr.mxu0 %v398
  %1463 = vmatpush1.msra.mxu0 %v397
  %1464 = vmatprep.subr.mxu0 %v404
  %1465 = vmatpush1.msra.mxu0 %v403
  %1466 = vmatprep.subr.mxu0 %v410
  %1467 = vmatpush1.msra.mxu0 %v409
  %1468 = vmatprep.subr.mxu0 %v416
  %1469 = vmatpush1.msra.mxu0 %v415
  %1470 = vmatprep.subr.mxu0 %v422
  %1471 = vmatpush1.msra.mxu0 %v421
  %1472 = vmatprep.subr.mxu0 %v428
  %1473 = vmatpush1.msra.mxu0 %v427
  %1474 = vmatprep.subr.mxu0 %v434
  %1475 = vmatpush1.msra.mxu0 %v433
  %1476 = vmatprep.subr.mxu0 0.0
  %1477 = vmatpush1.msra.mxu0 0.0
  %1478 = vmatprep.subr.mxu0 0.0
  %1479 = vmatpush1.msra.mxu0 0.0
  %1480 = vmatprep.subr.mxu0 0.0
  %1481 = vmatpush1.msra.mxu0 0.0
  %1482 = vmatprep.subr.mxu0 0.0
  %1483 = vmatpush1.msra.mxu0 0.0
  %1484 = vmatprep.subr.mxu0 0.0
  %1485 = vmatpush1.msra.mxu0 0.0
  %1486 = vmatprep.subr.mxu0 0.0
  %1487 = vmatpush1.msra.mxu0 0.0
  %1488 = vmatprep.subr.mxu0 0.0
  %1489 = vmatpush1.msra.mxu0 0.0
  %1490 = vmatprep.subr.mxu0 0.0
  %1491 = vmatpush1.msra.mxu0 0.0
  %1492 = vmatprep.subr.mxu0 0.0
  %1493 = vmatpush1.msra.mxu0 0.0
  %1494 = vmatprep.subr.mxu0 0.0
  %1495 = vmatpush1.msra.mxu0 0.0
  %1496 = vmatprep.subr.mxu0 0.0
  %1497 = vmatpush1.msra.mxu0 0.0
  %1498 = vmatprep.subr.mxu0 0.0
  %1499 = vmatpush1.msra.mxu0 0.0
  %1500 = vmatprep.subr.mxu0 0.0
  %1501 = vmatpush1.msra.mxu0 0.0
  %1502 = vmatprep.subr.mxu0 0.0
  %1503 = vmatpush1.msra.mxu0 0.0
  %1504 = vmatprep.subr.mxu0 0.0
  %1505 = vmatpush1.msra.mxu0 0.0
  %1506 = vmatprep.subr.mxu0 0.0
  %1507 = vmatpush1.msra.mxu0 0.0
  %1508 = vmatprep.subr.mxu0 0.0
  %1509 = vmatpush1.msra.mxu0 0.0
  %1510 = vmatprep.subr.mxu0 0.0
  %1511 = vmatpush1.msra.mxu0 0.0
  %1512 = vmatprep.mubr.f32.mxu0 0.0
  %1513 = vmatmul.mubr.f32.gmra.mrb[0].mxu0 %v1289
  %v1514 = vpop.f32.mrb[0].mxu0
  %v1515 = vadd.f32 0.0, %v1514
  %v1516 = vpop.f32.mrb[0].mxu0
  %v1517 = vadd.f32 0.0, %v1516
  %1518 = vmatprep.mubr.f32.mxu0 0.0
  %1519 = vmatmul.mubr.f32.gmra.mrb[0].mxu0 %v1292
  %v1520 = vpop.f32.mrb[0].mxu0
  %v1521 = vadd.f32 0.0, %v1520
  %v1522 = vpop.f32.mrb[0].mxu0
  %v1523 = vadd.f32 0.0, %v1522
  %1524 = vdwg.mxu0
  %v1525 = vadd.f32 %v1274, %v1361
  %v1526 = vadd.f32 %v1275, %v1363
  %v1527 = vadd.f32 %v1276, %v1438
  %v1528 = vadd.f32 %v1277, %v1440
  %v1529 = vadd.f32 %v1278, %v1515
  %v1530 = vadd.f32 %v1279, %v1517
  %v1531 = vadd.f32 %v1280, %v1367
  %v1532 = vadd.f32 %v1281, %v1369
  %v1533 = vadd.f32 %v1282, %v1444
  %v1534 = vadd.f32 %v1283, %v1446
  %v1535 = vadd.f32 %v1284, %v1521
  %v1536 = vadd.f32 %v1285, %v1523
  %v1537 = vld [vmem:[%s4 + $0x40] sm:$0xff]
  %v1538 = vld [vmem:[%s4 + $0x48] sm:$0xff]
  %v1540 = vsel %vm435, %v1537, 0
  %v1543 = vsel %vm435, %v1538, 0
  %1545 = vmatprep.subr.mxu0 %v352
  %1546 = vmatpush1.msra.mxu0 %v351
  %1547 = vmatprep.subr.mxu0 %v358
  %1548 = vmatpush1.msra.mxu0 %v357
  %1549 = vmatprep.subr.mxu0 %v364
  %1550 = vmatpush1.msra.mxu0 %v363
  %1551 = vmatprep.subr.mxu0 %v370
  %1552 = vmatpush1.msra.mxu0 %v369
  %1553 = vmatprep.subr.mxu0 %v376
  %1554 = vmatpush1.msra.mxu0 %v375
  %1555 = vmatprep.subr.mxu0 %v382
  %1556 = vmatpush1.msra.mxu0 %v381
  %1557 = vmatprep.subr.mxu0 %v388
  %1558 = vmatpush1.msra.mxu0 %v387
  %1559 = vmatprep.subr.mxu0 %v394
  %1560 = vmatpush1.msra.mxu0 %v393
  %1561 = vmatprep.subr.mxu0 %v400
  %1562 = vmatpush1.msra.mxu0 %v399
  %1563 = vmatprep.subr.mxu0 %v406
  %1564 = vmatpush1.msra.mxu0 %v405
  %1565 = vmatprep.subr.mxu0 %v412
  %1566 = vmatpush1.msra.mxu0 %v411
  %1567 = vmatprep.subr.mxu0 %v418
  %1568 = vmatpush1.msra.mxu0 %v417
  %1569 = vmatprep.subr.mxu0 %v424
  %1570 = vmatpush1.msra.mxu0 %v423
  %1571 = vmatprep.subr.mxu0 %v430
  %1572 = vmatpush1.msra.mxu0 %v429
  %1573 = vmatprep.subr.mxu0 0.0
  %1574 = vmatpush1.msra.mxu0 0.0
  %1575 = vmatprep.subr.mxu0 0.0
  %1576 = vmatpush1.msra.mxu0 0.0
  %1577 = vmatprep.subr.mxu0 0.0
  %1578 = vmatpush1.msra.mxu0 0.0
  %1579 = vmatprep.subr.mxu0 0.0
  %1580 = vmatpush1.msra.mxu0 0.0
  %1581 = vmatprep.subr.mxu0 0.0
  %1582 = vmatpush1.msra.mxu0 0.0
  %1583 = vmatprep.subr.mxu0 0.0
  %1584 = vmatpush1.msra.mxu0 0.0
  %1585 = vmatprep.subr.mxu0 0.0
  %1586 = vmatpush1.msra.mxu0 0.0
  %1587 = vmatprep.subr.mxu0 0.0
  %1588 = vmatpush1.msra.mxu0 0.0
  %1589 = vmatprep.subr.mxu0 0.0
  %1590 = vmatpush1.msra.mxu0 0.0
  %1591 = vmatprep.subr.mxu0 0.0
  %1592 = vmatpush1.msra.mxu0 0.0
  %1593 = vmatprep.subr.mxu0 0.0
  %1594 = vmatpush1.msra.mxu0 0.0
  %1595 = vmatprep.subr.mxu0 0.0
  %1596 = vmatpush1.msra.mxu0 0.0
  %1597 = vmatprep.subr.mxu0 0.0
  %1598 = vmatpush1.msra.mxu0 0.0
  %1599 = vmatprep.subr.mxu0 0.0
  %1600 = vmatpush1.msra.mxu0 0.0
  %1601 = vmatprep.subr.mxu0 0.0
  %1602 = vmatpush1.msra.mxu0 0.0
  %1603 = vmatprep.subr.mxu0 0.0
  %1604 = vmatpush1.msra.mxu0 0.0
  %1605 = vmatprep.subr.mxu0 0.0
  %1606 = vmatpush1.msra.mxu0 0.0
  %1607 = vmatprep.subr.mxu0 0.0
  %1608 = vmatpush1.msra.mxu0 0.0
  %1609 = vmatprep.mubr.f32.mxu0 0.0
  %1610 = vmatmul.mubr.f32.gmra.mrb[0].mxu0 %v1540
  %v1611 = vpop.f32.mrb[0].mxu0
  %v1612 = vadd.f32 0.0, %v1611
  %v1613 = vpop.f32.mrb[0].mxu0
  %v1614 = vadd.f32 0.0, %v1613
  %1615 = vmatprep.mubr.f32.mxu0 0.0
  %1616 = vmatmul.mubr.f32.gmra.mrb[0].mxu0 %v1543
  %v1617 = vpop.f32.mrb[0].mxu0
  %v1618 = vadd.f32 0.0, %v1617
  %v1619 = vpop.f32.mrb[0].mxu0
  %v1620 = vadd.f32 0.0, %v1619
  %1621 = vdwg.mxu0
  %1622 = vmatprep.subr.mxu0 %v354
  %1623 = vmatpush1.msra.mxu0 %v353
  %1624 = vmatprep.subr.mxu0 %v360
  %1625 = vmatpush1.msra.mxu0 %v359
  %1626 = vmatprep.subr.mxu0 %v366
  %1627 = vmatpush1.msra.mxu0 %v365
  %1628 = vmatprep.subr.mxu0 %v372
  %1629 = vmatpush1.msra.mxu0 %v371
  %1630 = vmatprep.subr.mxu0 %v378
  %1631 = vmatpush1.msra.mxu0 %v377
  %1632 = vmatprep.subr.mxu0 %v384
  %1633 = vmatpush1.msra.mxu0 %v383
  %1634 = vmatprep.subr.mxu0 %v390
  %1635 = vmatpush1.msra.mxu0 %v389
  %1636 = vmatprep.subr.mxu0 %v396
  %1637 = vmatpush1.msra.mxu0 %v395
  %1638 = vmatprep.subr.mxu0 %v402
  %1639 = vmatpush1.msra.mxu0 %v401
  %1640 = vmatprep.subr.mxu0 %v408
  %1641 = vmatpush1.msra.mxu0 %v407
  %1642 = vmatprep.subr.mxu0 %v414
  %1643 = vmatpush1.msra.mxu0 %v413
  %1644 = vmatprep.subr.mxu0 %v420
  %1645 = vmatpush1.msra.mxu0 %v419
  %1646 = vmatprep.subr.mxu0 %v426
  %1647 = vmatpush1.msra.mxu0 %v425
  %1648 = vmatprep.subr.mxu0 %v432
  %1649 = vmatpush1.msra.mxu0 %v431
  %1650 = vmatprep.subr.mxu0 0.0
  %1651 = vmatpush1.msra.mxu0 0.0
  %1652 = vmatprep.subr.mxu0 0.0
  %1653 = vmatpush1.msra.mxu0 0.0
  %1654 = vmatprep.subr.mxu0 0.0
  %1655 = vmatpush1.msra.mxu0 0.0
  %1656 = vmatprep.subr.mxu0 0.0
  %1657 = vmatpush1.msra.mxu0 0.0
  %1658 = vmatprep.subr.mxu0 0.0
  %1659 = vmatpush1.msra.mxu0 0.0
  %1660 = vmatprep.subr.mxu0 0.0
  %1661 = vmatpush1.msra.mxu0 0.0
  %1662 = vmatprep.subr.mxu0 0.0
  %1663 = vmatpush1.msra.mxu0 0.0
  %1664 = vmatprep.subr.mxu0 0.0
  %1665 = vmatpush1.msra.mxu0 0.0
  %1666 = vmatprep.subr.mxu0 0.0
  %1667 = vmatpush1.msra.mxu0 0.0
  %1668 = vmatprep.subr.mxu0 0.0
  %1669 = vmatpush1.msra.mxu0 0.0
  %1670 = vmatprep.subr.mxu0 0.0
  %1671 = vmatpush1.msra.mxu0 0.0
  %1672 = vmatprep.subr.mxu0 0.0
  %1673 = vmatpush1.msra.mxu0 0.0
  %1674 = vmatprep.subr.mxu0 0.0
  %1675 = vmatpush1.msra.mxu0 0.0
  %1676 = vmatprep.subr.mxu0 0.0
  %1677 = vmatpush1.msra.mxu0 0.0
  %1678 = vmatprep.subr.mxu0 0.0
  %1679 = vmatpush1.msra.mxu0 0.0
  %1680 = vmatprep.subr.mxu0 0.0
  %1681 = vmatpush1.msra.mxu0 0.0
  %1682 = vmatprep.subr.mxu0 0.0
  %1683 = vmatpush1.msra.mxu0 0.0
  %1684 = vmatprep.subr.mxu0 0.0
  %1685 = vmatpush1.msra.mxu0 0.0
  %1686 = vmatprep.mubr.f32.mxu0 0.0
  %1687 = vmatmul.mubr.f32.gmra.mrb[0].mxu0 %v1540
  %v1688 = vpop.f32.mrb[0].mxu0
  %v1689 = vadd.f32 0.0, %v1688
  %v1690 = vpop.f32.mrb[0].mxu0
  %v1691 = vadd.f32 0.0, %v1690
  %1692 = vmatprep.mubr.f32.mxu0 0.0
  %1693 = vmatmul.mubr.f32.gmra.mrb[0].mxu0 %v1543
  %v1694 = vpop.f32.mrb[0].mxu0
  %v1695 = vadd.f32 0.0, %v1694
  %v1696 = vpop.f32.mrb[0].mxu0
  %v1697 = vadd.f32 0.0, %v1696
  %1698 = vdwg.mxu0
  %1699 = vmatprep.subr.mxu0 %v356
  %1700 = vmatpush1.msra.mxu0 %v355
  %1701 = vmatprep.subr.mxu0 %v362
  %1702 = vmatpush1.msra.mxu0 %v361
  %1703 = vmatprep.subr.mxu0 %v368
  %1704 = vmatpush1.msra.mxu0 %v367
  %1705 = vmatprep.subr.mxu0 %v374
  %1706 = vmatpush1.msra.mxu0 %v373
  %1707 = vmatprep.subr.mxu0 %v380
  %1708 = vmatpush1.msra.mxu0 %v379
  %1709 = vmatprep.subr.mxu0 %v386
  %1710 = vmatpush1.msra.mxu0 %v385
  %1711 = vmatprep.subr.mxu0 %v392
  %1712 = vmatpush1.msra.mxu0 %v391
  %1713 = vmatprep.subr.mxu0 %v398
  %1714 = vmatpush1.msra.mxu0 %v397
  %1715 = vmatprep.subr.mxu0 %v404
  %1716 = vmatpush1.msra.mxu0 %v403
  %1717 = vmatprep.subr.mxu0 %v410
  %1718 = vmatpush1.msra.mxu0 %v409
  %1719 = vmatprep.subr.mxu0 %v416
  %1720 = vmatpush1.msra.mxu0 %v415
  %1721 = vmatprep.subr.mxu0 %v422
  %1722 = vmatpush1.msra.mxu0 %v421
  %1723 = vmatprep.subr.mxu0 %v428
  %1724 = vmatpush1.msra.mxu0 %v427
  %1725 = vmatprep.subr.mxu0 %v434
  %1726 = vmatpush1.msra.mxu0 %v433
  %1727 = vmatprep.subr.mxu0 0.0
  %1728 = vmatpush1.msra.mxu0 0.0
  %1729 = vmatprep.subr.mxu0 0.0
  %1730 = vmatpush1.msra.mxu0 0.0
  %1731 = vmatprep.subr.mxu0 0.0
  %1732 = vmatpush1.msra.mxu0 0.0
  %1733 = vmatprep.subr.mxu0 0.0
  %1734 = vmatpush1.msra.mxu0 0.0
  %1735 = vmatprep.subr.mxu0 0.0
  %1736 = vmatpush1.msra.mxu0 0.0
  %1737 = vmatprep.subr.mxu0 0.0
  %1738 = vmatpush1.msra.mxu0 0.0
  %1739 = vmatprep.subr.mxu0 0.0
  %1740 = vmatpush1.msra.mxu0 0.0
  %1741 = vmatprep.subr.mxu0 0.0
  %1742 = vmatpush1.msra.mxu0 0.0
  %1743 = vmatprep.subr.mxu0 0.0
  %1744 = vmatpush1.msra.mxu0 0.0
  %1745 = vmatprep.subr.mxu0 0.0
  %1746 = vmatpush1.msra.mxu0 0.0
  %1747 = vmatprep.subr.mxu0 0.0
  %1748 = vmatpush1.msra.mxu0 0.0
  %1749 = vmatprep.subr.mxu0 0.0
  %1750 = vmatpush1.msra.mxu0 0.0
  %1751 = vmatprep.subr.mxu0 0.0
  %1752 = vmatpush1.msra.mxu0 0.0
  %1753 = vmatprep.subr.mxu0 0.0
  %1754 = vmatpush1.msra.mxu0 0.0
  %1755 = vmatprep.subr.mxu0 0.0
  %1756 = vmatpush1.msra.mxu0 0.0
  %1757 = vmatprep.subr.mxu0 0.0
  %1758 = vmatpush1.msra.mxu0 0.0
  %1759 = vmatprep.subr.mxu0 0.0
  %1760 = vmatpush1.msra.mxu0 0.0
  %1761 = vmatprep.subr.mxu0 0.0
  %1762 = vmatpush1.msra.mxu0 0.0
  %1763 = vmatprep.mubr.f32.mxu0 0.0
  %1764 = vmatmul.mubr.f32.gmra.mrb[0].mxu0 %v1540
  %v1765 = vpop.f32.mrb[0].mxu0
  %v1766 = vadd.f32 0.0, %v1765
  %v1767 = vpop.f32.mrb[0].mxu0
  %v1768 = vadd.f32 0.0, %v1767
  %1769 = vmatprep.mubr.f32.mxu0 0.0
  %1770 = vmatmul.mubr.f32.gmra.mrb[0].mxu0 %v1543
  %v1771 = vpop.f32.mrb[0].mxu0
  %v1772 = vadd.f32 0.0, %v1771
  %v1773 = vpop.f32.mrb[0].mxu0
  %v1774 = vadd.f32 0.0, %v1773
  %1775 = vdwg.mxu0
  %1776 = vrot.lane.b32.xlu0 %v1612, 96
  %v1777 = vpop.permute.xlu0 %1776
  %1778 = vrot.lane.b32.xlu0 %v1618, 96
  %v1779 = vpop.permute.xlu0 %1778
  %1780 = vrot.lane.b32.xlu0 %v1614, 96
  %v1781 = vpop.permute.xlu0 %1780
  %1782 = vrot.lane.b32.xlu0 %v1620, 96
  %v1783 = vpop.permute.xlu0 %1782
  %1784 = vrot.lane.b32.xlu0 %v1689, 96
  %v1785 = vpop.permute.xlu0 %1784
  %1786 = vrot.lane.b32.xlu0 %v1695, 96
  %v1787 = vpop.permute.xlu0 %1786
  %1788 = vrot.lane.b32.xlu0 %v1691, 96
  %v1789 = vpop.permute.xlu0 %1788
  %1790 = vrot.lane.b32.xlu0 %v1697, 96
  %v1791 = vpop.permute.xlu0 %1790
  %1792 = vrot.lane.b32.xlu0 %v1766, 96
  %v1793 = vpop.permute.xlu0 %1792
  %1794 = vrot.lane.b32.xlu0 %v1772, 96
  %v1795 = vpop.permute.xlu0 %1794
  %1796 = vrot.lane.b32.xlu0 %v1768, 96
  %v1797 = vpop.permute.xlu0 %1796
  %1798 = vrot.lane.b32.xlu0 %v1774, 96
  %v1799 = vpop.permute.xlu0 %1798
  %v1800 = vsel %vm697, %v1793, %v1797
  %v1801 = vsel %vm697, %v1795, %v1799
  %v1802 = vsel %vm697, %v1789, %v1793
  %v1803 = vsel %vm697, %v1791, %v1795
  %v1804 = vsel %vm697, %v1785, %v1789
  %v1805 = vsel %vm697, %v1787, %v1791
  %v1806 = vsel %vm697, %v1781, %v1785
  %v1807 = vsel %vm697, %v1783, %v1787
  %v1808 = vsel %vm697, %v1777, %v1781
  %v1809 = vsel %vm697, %v1779, %v1783
  %v1810 = vsel %vm697, %v1797, %v1777
  %v1811 = vsel %vm697, %v1799, %v1779
  %v1812 = vadd.f32 %v1525, %v1808
  %v1813 = vadd.f32 %v1526, %v1806
  %v1814 = vadd.f32 %v1527, %v1804
  %v1815 = vadd.f32 %v1528, %v1802
  %v1816 = vadd.f32 %v1529, %v1800
  %v1817 = vadd.f32 %v1530, %v1810
  %v1818 = vadd.f32 %v1531, %v1809
  %v1819 = vadd.f32 %v1532, %v1807
  %v1820 = vadd.f32 %v1533, %v1805
  %v1821 = vadd.f32 %v1534, %v1803
  %v1822 = vadd.f32 %v1535, %v1801
  %v1823 = vadd.f32 %v1536, %v1811
  %v1824 = vld [vmem:[%s4 + $0x50] sm:$0xff]
  %v1825 = vld [vmem:[%s4 + $0x58] sm:$0xff]
  %v1827 = vsel %vm435, %v1824, 0
  %v1830 = vsel %vm435, %v1825, 0
  %1832 = vmatprep.subr.mxu0 %v352
  %1833 = vmatpush1.msra.mxu0 %v351
  %1834 = vmatprep.subr.mxu0 %v358
  %1835 = vmatpush1.msra.mxu0 %v357
  %1836 = vmatprep.subr.mxu0 %v364
  %1837 = vmatpush1.msra.mxu0 %v363
  %1838 = vmatprep.subr.mxu0 %v370
  %1839 = vmatpush1.msra.mxu0 %v369
  %1840 = vmatprep.subr.mxu0 %v376
  %1841 = vmatpush1.msra.mxu0 %v375
  %1842 = vmatprep.subr.mxu0 %v382
  %1843 = vmatpush1.msra.mxu0 %v381
  %1844 = vmatprep.subr.mxu0 %v388
  %1845 = vmatpush1.msra.mxu0 %v387
  %1846 = vmatprep.subr.mxu0 %v394
  %1847 = vmatpush1.msra.mxu0 %v393
  %1848 = vmatprep.subr.mxu0 %v400
  %1849 = vmatpush1.msra.mxu0 %v399
  %1850 = vmatprep.subr.mxu0 %v406
  %1851 = vmatpush1.msra.mxu0 %v405
  %1852 = vmatprep.subr.mxu0 %v412
  %1853 = vmatpush1.msra.mxu0 %v411
  %1854 = vmatprep.subr.mxu0 %v418
  %1855 = vmatpush1.msra.mxu0 %v417
  %1856 = vmatprep.subr.mxu0 %v424
  %1857 = vmatpush1.msra.mxu0 %v423
  %1858 = vmatprep.subr.mxu0 %v430
  %1859 = vmatpush1.msra.mxu0 %v429
  %1860 = vmatprep.subr.mxu0 0.0
  %1861 = vmatpush1.msra.mxu0 0.0
  %1862 = vmatprep.subr.mxu0 0.0
  %1863 = vmatpush1.msra.mxu0 0.0
  %1864 = vmatprep.subr.mxu0 0.0
  %1865 = vmatpush1.msra.mxu0 0.0
  %1866 = vmatprep.subr.mxu0 0.0
  %1867 = vmatpush1.msra.mxu0 0.0
  %1868 = vmatprep.subr.mxu0 0.0
  %1869 = vmatpush1.msra.mxu0 0.0
  %1870 = vmatprep.subr.mxu0 0.0
  %1871 = vmatpush1.msra.mxu0 0.0
  %1872 = vmatprep.subr.mxu0 0.0
  %1873 = vmatpush1.msra.mxu0 0.0
  %1874 = vmatprep.subr.mxu0 0.0
  %1875 = vmatpush1.msra.mxu0 0.0
  %1876 = vmatprep.subr.mxu0 0.0
  %1877 = vmatpush1.msra.mxu0 0.0
  %1878 = vmatprep.subr.mxu0 0.0
  %1879 = vmatpush1.msra.mxu0 0.0
  %1880 = vmatprep.subr.mxu0 0.0
  %1881 = vmatpush1.msra.mxu0 0.0
  %1882 = vmatprep.subr.mxu0 0.0
  %1883 = vmatpush1.msra.mxu0 0.0
  %1884 = vmatprep.subr.mxu0 0.0
  %1885 = vmatpush1.msra.mxu0 0.0
  %1886 = vmatprep.subr.mxu0 0.0
  %1887 = vmatpush1.msra.mxu0 0.0
  %1888 = vmatprep.subr.mxu0 0.0
  %1889 = vmatpush1.msra.mxu0 0.0
  %1890 = vmatprep.subr.mxu0 0.0
  %1891 = vmatpush1.msra.mxu0 0.0
  %1892 = vmatprep.subr.mxu0 0.0
  %1893 = vmatpush1.msra.mxu0 0.0
  %1894 = vmatprep.subr.mxu0 0.0
  %1895 = vmatpush1.msra.mxu0 0.0
  %1896 = vmatprep.mubr.f32.mxu0 0.0
  %1897 = vmatmul.mubr.f32.gmra.mrb[0].mxu0 %v1827
  %v1898 = vpop.f32.mrb[0].mxu0
  %v1899 = vadd.f32 0.0, %v1898
  %v1900 = vpop.f32.mrb[0].mxu0
  %v1901 = vadd.f32 0.0, %v1900
  %1902 = vmatprep.mubr.f32.mxu0 0.0
  %1903 = vmatmul.mubr.f32.gmra.mrb[0].mxu0 %v1830
  %v1904 = vpop.f32.mrb[0].mxu0
  %v1905 = vadd.f32 0.0, %v1904
  %v1906 = vpop.f32.mrb[0].mxu0
  %v1907 = vadd.f32 0.0, %v1906
  %1908 = vdwg.mxu0
  %1909 = vmatprep.subr.mxu0 %v354
  %1910 = vmatpush1.msra.mxu0 %v353
  %1911 = vmatprep.subr.mxu0 %v360
  %1912 = vmatpush1.msra.mxu0 %v359
  %1913 = vmatprep.subr.mxu0 %v366
  %1914 = vmatpush1.msra.mxu0 %v365
  %1915 = vmatprep.subr.mxu0 %v372
  %1916 = vmatpush1.msra.mxu0 %v371
  %1917 = vmatprep.subr.mxu0 %v378
  %1918 = vmatpush1.msra.mxu0 %v377
  %1919 = vmatprep.subr.mxu0 %v384
  %1920 = vmatpush1.msra.mxu0 %v383
  %1921 = vmatprep.subr.mxu0 %v390
  %1922 = vmatpush1.msra.mxu0 %v389
  %1923 = vmatprep.subr.mxu0 %v396
  %1924 = vmatpush1.msra.mxu0 %v395
  %1925 = vmatprep.subr.mxu0 %v402
  %1926 = vmatpush1.msra.mxu0 %v401
  %1927 = vmatprep.subr.mxu0 %v408
  %1928 = vmatpush1.msra.mxu0 %v407
  %1929 = vmatprep.subr.mxu0 %v414
  %1930 = vmatpush1.msra.mxu0 %v413
  %1931 = vmatprep.subr.mxu0 %v420
  %1932 = vmatpush1.msra.mxu0 %v419
  %1933 = vmatprep.subr.mxu0 %v426
  %1934 = vmatpush1.msra.mxu0 %v425
  %1935 = vmatprep.subr.mxu0 %v432
  %1936 = vmatpush1.msra.mxu0 %v431
  %1937 = vmatprep.subr.mxu0 0.0
  %1938 = vmatpush1.msra.mxu0 0.0
  %1939 = vmatprep.subr.mxu0 0.0
  %1940 = vmatpush1.msra.mxu0 0.0
  %1941 = vmatprep.subr.mxu0 0.0
  %1942 = vmatpush1.msra.mxu0 0.0
  %1943 = vmatprep.subr.mxu0 0.0
  %1944 = vmatpush1.msra.mxu0 0.0
  %1945 = vmatprep.subr.mxu0 0.0
  %1946 = vmatpush1.msra.mxu0 0.0
  %1947 = vmatprep.subr.mxu0 0.0
  %1948 = vmatpush1.msra.mxu0 0.0
  %1949 = vmatprep.subr.mxu0 0.0
  %1950 = vmatpush1.msra.mxu0 0.0
  %1951 = vmatprep.subr.mxu0 0.0
  %1952 = vmatpush1.msra.mxu0 0.0
  %1953 = vmatprep.subr.mxu0 0.0
  %1954 = vmatpush1.msra.mxu0 0.0
  %1955 = vmatprep.subr.mxu0 0.0
  %1956 = vmatpush1.msra.mxu0 0.0
  %1957 = vmatprep.subr.mxu0 0.0
  %1958 = vmatpush1.msra.mxu0 0.0
  %1959 = vmatprep.subr.mxu0 0.0
  %1960 = vmatpush1.msra.mxu0 0.0
  %1961 = vmatprep.subr.mxu0 0.0
  %1962 = vmatpush1.msra.mxu0 0.0
  %1963 = vmatprep.subr.mxu0 0.0
  %1964 = vmatpush1.msra.mxu0 0.0
  %1965 = vmatprep.subr.mxu0 0.0
  %1966 = vmatpush1.msra.mxu0 0.0
  %1967 = vmatprep.subr.mxu0 0.0
  %1968 = vmatpush1.msra.mxu0 0.0
  %1969 = vmatprep.subr.mxu0 0.0
  %1970 = vmatpush1.msra.mxu0 0.0
  %1971 = vmatprep.subr.mxu0 0.0
  %1972 = vmatpush1.msra.mxu0 0.0
  %1973 = vmatprep.mubr.f32.mxu0 0.0
  %1974 = vmatmul.mubr.f32.gmra.mrb[0].mxu0 %v1827
  %v1975 = vpop.f32.mrb[0].mxu0
  %v1976 = vadd.f32 0.0, %v1975
  %v1977 = vpop.f32.mrb[0].mxu0
  %v1978 = vadd.f32 0.0, %v1977
  %1979 = vmatprep.mubr.f32.mxu0 0.0
  %1980 = vmatmul.mubr.f32.gmra.mrb[0].mxu0 %v1830
  %v1981 = vpop.f32.mrb[0].mxu0
  %v1982 = vadd.f32 0.0, %v1981
  %v1983 = vpop.f32.mrb[0].mxu0
  %v1984 = vadd.f32 0.0, %v1983
  %1985 = vdwg.mxu0
  %1986 = vmatprep.subr.mxu0 %v356
  %1987 = vmatpush1.msra.mxu0 %v355
  %1988 = vmatprep.subr.mxu0 %v362
  %1989 = vmatpush1.msra.mxu0 %v361
  %1990 = vmatprep.subr.mxu0 %v368
  %1991 = vmatpush1.msra.mxu0 %v367
  %1992 = vmatprep.subr.mxu0 %v374
  %1993 = vmatpush1.msra.mxu0 %v373
  %1994 = vmatprep.subr.mxu0 %v380
  %1995 = vmatpush1.msra.mxu0 %v379
  %1996 = vmatprep.subr.mxu0 %v386
  %1997 = vmatpush1.msra.mxu0 %v385
  %1998 = vmatprep.subr.mxu0 %v392
  %1999 = vmatpush1.msra.mxu0 %v391
  %2000 = vmatprep.subr.mxu0 %v398
  %2001 = vmatpush1.msra.mxu0 %v397
  %2002 = vmatprep.subr.mxu0 %v404
  %2003 = vmatpush1.msra.mxu0 %v403
  %2004 = vmatprep.subr.mxu0 %v410
  %2005 = vmatpush1.msra.mxu0 %v409
  %2006 = vmatprep.subr.mxu0 %v416
  %2007 = vmatpush1.msra.mxu0 %v415
  %2008 = vmatprep.subr.mxu0 %v422
  %2009 = vmatpush1.msra.mxu0 %v421
  %2010 = vmatprep.subr.mxu0 %v428
  %2011 = vmatpush1.msra.mxu0 %v427
  %2012 = vmatprep.subr.mxu0 %v434
  %2013 = vmatpush1.msra.mxu0 %v433
  %2014 = vmatprep.subr.mxu0 0.0
  %2015 = vmatpush1.msra.mxu0 0.0
  %2016 = vmatprep.subr.mxu0 0.0
  %2017 = vmatpush1.msra.mxu0 0.0
  %2018 = vmatprep.subr.mxu0 0.0
  %2019 = vmatpush1.msra.mxu0 0.0
  %2020 = vmatprep.subr.mxu0 0.0
  %2021 = vmatpush1.msra.mxu0 0.0
  %2022 = vmatprep.subr.mxu0 0.0
  %2023 = vmatpush1.msra.mxu0 0.0
  %2024 = vmatprep.subr.mxu0 0.0
  %2025 = vmatpush1.msra.mxu0 0.0
  %2026 = vmatprep.subr.mxu0 0.0
  %2027 = vmatpush1.msra.mxu0 0.0
  %2028 = vmatprep.subr.mxu0 0.0
  %2029 = vmatpush1.msra.mxu0 0.0
  %2030 = vmatprep.subr.mxu0 0.0
  %2031 = vmatpush1.msra.mxu0 0.0
  %2032 = vmatprep.subr.mxu0 0.0
  %2033 = vmatpush1.msra.mxu0 0.0
  %2034 = vmatprep.subr.mxu0 0.0
  %2035 = vmatpush1.msra.mxu0 0.0
  %2036 = vmatprep.subr.mxu0 0.0
  %2037 = vmatpush1.msra.mxu0 0.0
  %2038 = vmatprep.subr.mxu0 0.0
  %2039 = vmatpush1.msra.mxu0 0.0
  %2040 = vmatprep.subr.mxu0 0.0
  %2041 = vmatpush1.msra.mxu0 0.0
  %2042 = vmatprep.subr.mxu0 0.0
  %2043 = vmatpush1.msra.mxu0 0.0
  %2044 = vmatprep.subr.mxu0 0.0
  %2045 = vmatpush1.msra.mxu0 0.0
  %2046 = vmatprep.subr.mxu0 0.0
  %2047 = vmatpush1.msra.mxu0 0.0
  %2048 = vmatprep.subr.mxu0 0.0
  %2049 = vmatpush1.msra.mxu0 0.0
  %2050 = vmatprep.mubr.f32.mxu0 0.0
  %2051 = vmatmul.mubr.f32.gmra.mrb[0].mxu0 %v1827
  %v2052 = vpop.f32.mrb[0].mxu0
  %v2053 = vadd.f32 0.0, %v2052
  %v2054 = vpop.f32.mrb[0].mxu0
  %v2055 = vadd.f32 0.0, %v2054
  %2056 = vmatprep.mubr.f32.mxu0 0.0
  %2057 = vmatmul.mubr.f32.gmra.mrb[0].mxu0 %v1830
  %v2058 = vpop.f32.mrb[0].mxu0
  %v2059 = vadd.f32 0.0, %v2058
  %v2060 = vpop.f32.mrb[0].mxu0
  %v2061 = vadd.f32 0.0, %v2060
  %2062 = vdwg.mxu0
  %2063 = vrot.lane.b32.xlu0 %v1899, 64
  %v2064 = vpop.permute.xlu0 %2063
  %2065 = vrot.lane.b32.xlu0 %v1905, 64
  %v2066 = vpop.permute.xlu0 %2065
  %2067 = vrot.lane.b32.xlu0 %v1901, 64
  %v2068 = vpop.permute.xlu0 %2067
  %2069 = vrot.lane.b32.xlu0 %v1907, 64
  %v2070 = vpop.permute.xlu0 %2069
  %2071 = vrot.lane.b32.xlu0 %v1976, 64
  %v2072 = vpop.permute.xlu0 %2071
  %2073 = vrot.lane.b32.xlu0 %v1982, 64
  %v2074 = vpop.permute.xlu0 %2073
  %2075 = vrot.lane.b32.xlu0 %v1978, 64
  %v2076 = vpop.permute.xlu0 %2075
  %2077 = vrot.lane.b32.xlu0 %v1984, 64
  %v2078 = vpop.permute.xlu0 %2077
  %2079 = vrot.lane.b32.xlu0 %v2053, 64
  %v2080 = vpop.permute.xlu0 %2079
  %2081 = vrot.lane.b32.xlu0 %v2059, 64
  %v2082 = vpop.permute.xlu0 %2081
  %2083 = vrot.lane.b32.xlu0 %v2055, 64
  %v2084 = vpop.permute.xlu0 %2083
  %2085 = vrot.lane.b32.xlu0 %v2061, 64
  %v2086 = vpop.permute.xlu0 %2085
  %v2087 = vsel %vm973, %v2080, %v2084
  %v2088 = vsel %vm973, %v2082, %v2086
  %v2089 = vsel %vm973, %v2076, %v2080
  %v2090 = vsel %vm973, %v2078, %v2082
  %v2091 = vsel %vm973, %v2072, %v2076
  %v2092 = vsel %vm973, %v2074, %v2078
  %v2093 = vsel %vm973, %v2068, %v2072
  %v2094 = vsel %vm973, %v2070, %v2074
  %v2095 = vsel %vm973, %v2064, %v2068
  %v2096 = vsel %vm973, %v2066, %v2070
  %v2097 = vsel %vm973, %v2084, %v2064
  %v2098 = vsel %vm973, %v2086, %v2066
  %v2099 = vadd.f32 %v1812, %v2095
  %v2100 = vadd.f32 %v1813, %v2093
  %v2101 = vadd.f32 %v1814, %v2091
  %v2102 = vadd.f32 %v1815, %v2089
  %v2103 = vadd.f32 %v1816, %v2087
  %v2104 = vadd.f32 %v1817, %v2097
  %v2105 = vadd.f32 %v1818, %v2096
  %v2106 = vadd.f32 %v1819, %v2094
  %v2107 = vadd.f32 %v1820, %v2092
  %v2108 = vadd.f32 %v1821, %v2090
  %v2109 = vadd.f32 %v1822, %v2088
  %v2110 = vadd.f32 %v1823, %v2098
  %v2111 = vld [vmem:[%s4 + $0x60] sm:$0xff]
  %v2112 = vld [vmem:[%s4 + $0x68] sm:$0xff]
  %v2114 = vsel %vm435, %v2111, 0
  %v2117 = vsel %vm435, %v2112, 0
  %2119 = vmatprep.subr.mxu0 %v352
  %2120 = vmatpush1.msra.mxu0 %v351
  %2121 = vmatprep.subr.mxu0 %v358
  %2122 = vmatpush1.msra.mxu0 %v357
  %2123 = vmatprep.subr.mxu0 %v364
  %2124 = vmatpush1.msra.mxu0 %v363
  %2125 = vmatprep.subr.mxu0 %v370
  %2126 = vmatpush1.msra.mxu0 %v369
  %2127 = vmatprep.subr.mxu0 %v376
  %2128 = vmatpush1.msra.mxu0 %v375
  %2129 = vmatprep.subr.mxu0 %v382
  %2130 = vmatpush1.msra.mxu0 %v381
  %2131 = vmatprep.subr.mxu0 %v388
  %2132 = vmatpush1.msra.mxu0 %v387
  %2133 = vmatprep.subr.mxu0 %v394
  %2134 = vmatpush1.msra.mxu0 %v393
  %2135 = vmatprep.subr.mxu0 %v400
  %2136 = vmatpush1.msra.mxu0 %v399
  %2137 = vmatprep.subr.mxu0 %v406
  %2138 = vmatpush1.msra.mxu0 %v405
  %2139 = vmatprep.subr.mxu0 %v412
  %2140 = vmatpush1.msra.mxu0 %v411
  %2141 = vmatprep.subr.mxu0 %v418
  %2142 = vmatpush1.msra.mxu0 %v417
  %2143 = vmatprep.subr.mxu0 %v424
  %2144 = vmatpush1.msra.mxu0 %v423
  %2145 = vmatprep.subr.mxu0 %v430
  %2146 = vmatpush1.msra.mxu0 %v429
  %2147 = vmatprep.subr.mxu0 0.0
  %2148 = vmatpush1.msra.mxu0 0.0
  %2149 = vmatprep.subr.mxu0 0.0
  %2150 = vmatpush1.msra.mxu0 0.0
  %2151 = vmatprep.subr.mxu0 0.0
  %2152 = vmatpush1.msra.mxu0 0.0
  %2153 = vmatprep.subr.mxu0 0.0
  %2154 = vmatpush1.msra.mxu0 0.0
  %2155 = vmatprep.subr.mxu0 0.0
  %2156 = vmatpush1.msra.mxu0 0.0
  %2157 = vmatprep.subr.mxu0 0.0
  %2158 = vmatpush1.msra.mxu0 0.0
  %2159 = vmatprep.subr.mxu0 0.0
  %2160 = vmatpush1.msra.mxu0 0.0
  %2161 = vmatprep.subr.mxu0 0.0
  %2162 = vmatpush1.msra.mxu0 0.0
  %2163 = vmatprep.subr.mxu0 0.0
  %2164 = vmatpush1.msra.mxu0 0.0
  %2165 = vmatprep.subr.mxu0 0.0
  %2166 = vmatpush1.msra.mxu0 0.0
  %2167 = vmatprep.subr.mxu0 0.0
  %2168 = vmatpush1.msra.mxu0 0.0
  %2169 = vmatprep.subr.mxu0 0.0
  %2170 = vmatpush1.msra.mxu0 0.0
  %2171 = vmatprep.subr.mxu0 0.0
  %2172 = vmatpush1.msra.mxu0 0.0
  %2173 = vmatprep.subr.mxu0 0.0
  %2174 = vmatpush1.msra.mxu0 0.0
  %2175 = vmatprep.subr.mxu0 0.0
  %2176 = vmatpush1.msra.mxu0 0.0
  %2177 = vmatprep.subr.mxu0 0.0
  %2178 = vmatpush1.msra.mxu0 0.0
  %2179 = vmatprep.subr.mxu0 0.0
  %2180 = vmatpush1.msra.mxu0 0.0
  %2181 = vmatprep.subr.mxu0 0.0
  %2182 = vmatpush1.msra.mxu0 0.0
  %2183 = vmatprep.mubr.f32.mxu0 0.0
  %2184 = vmatmul.mubr.f32.gmra.mrb[0].mxu0 %v2114
  %v2185 = vpop.f32.mrb[0].mxu0
  %v2186 = vadd.f32 0.0, %v2185
  %v2187 = vpop.f32.mrb[0].mxu0
  %v2188 = vadd.f32 0.0, %v2187
  %2189 = vmatprep.mubr.f32.mxu0 0.0
  %2190 = vmatmul.mubr.f32.gmra.mrb[0].mxu0 %v2117
  %v2191 = vpop.f32.mrb[0].mxu0
  %v2192 = vadd.f32 0.0, %v2191
  %v2193 = vpop.f32.mrb[0].mxu0
  %v2194 = vadd.f32 0.0, %v2193
  %2195 = vdwg.mxu0
  %2196 = vmatprep.subr.mxu0 %v354
  %2197 = vmatpush1.msra.mxu0 %v353
  %2198 = vmatprep.subr.mxu0 %v360
  %2199 = vmatpush1.msra.mxu0 %v359
  %2200 = vmatprep.subr.mxu0 %v366
  %2201 = vmatpush1.msra.mxu0 %v365
  %2202 = vmatprep.subr.mxu0 %v372
  %2203 = vmatpush1.msra.mxu0 %v371
  %2204 = vmatprep.subr.mxu0 %v378
  %2205 = vmatpush1.msra.mxu0 %v377
  %2206 = vmatprep.subr.mxu0 %v384
  %2207 = vmatpush1.msra.mxu0 %v383
  %2208 = vmatprep.subr.mxu0 %v390
  %2209 = vmatpush1.msra.mxu0 %v389
  %2210 = vmatprep.subr.mxu0 %v396
  %2211 = vmatpush1.msra.mxu0 %v395
  %2212 = vmatprep.subr.mxu0 %v402
  %2213 = vmatpush1.msra.mxu0 %v401
  %2214 = vmatprep.subr.mxu0 %v408
  %2215 = vmatpush1.msra.mxu0 %v407
  %2216 = vmatprep.subr.mxu0 %v414
  %2217 = vmatpush1.msra.mxu0 %v413
  %2218 = vmatprep.subr.mxu0 %v420
  %2219 = vmatpush1.msra.mxu0 %v419
  %2220 = vmatprep.subr.mxu0 %v426
  %2221 = vmatpush1.msra.mxu0 %v425
  %2222 = vmatprep.subr.mxu0 %v432
  %2223 = vmatpush1.msra.mxu0 %v431
  %2224 = vmatprep.subr.mxu0 0.0
  %2225 = vmatpush1.msra.mxu0 0.0
  %2226 = vmatprep.subr.mxu0 0.0
  %2227 = vmatpush1.msra.mxu0 0.0
  %2228 = vmatprep.subr.mxu0 0.0
  %2229 = vmatpush1.msra.mxu0 0.0
  %2230 = vmatprep.subr.mxu0 0.0
  %2231 = vmatpush1.msra.mxu0 0.0
  %2232 = vmatprep.subr.mxu0 0.0
  %2233 = vmatpush1.msra.mxu0 0.0
  %2234 = vmatprep.subr.mxu0 0.0
  %2235 = vmatpush1.msra.mxu0 0.0
  %2236 = vmatprep.subr.mxu0 0.0
  %2237 = vmatpush1.msra.mxu0 0.0
  %2238 = vmatprep.subr.mxu0 0.0
  %2239 = vmatpush1.msra.mxu0 0.0
  %2240 = vmatprep.subr.mxu0 0.0
  %2241 = vmatpush1.msra.mxu0 0.0
  %2242 = vmatprep.subr.mxu0 0.0
  %2243 = vmatpush1.msra.mxu0 0.0
  %2244 = vmatprep.subr.mxu0 0.0
  %2245 = vmatpush1.msra.mxu0 0.0
  %2246 = vmatprep.subr.mxu0 0.0
  %2247 = vmatpush1.msra.mxu0 0.0
  %2248 = vmatprep.subr.mxu0 0.0
  %2249 = vmatpush1.msra.mxu0 0.0
  %2250 = vmatprep.subr.mxu0 0.0
  %2251 = vmatpush1.msra.mxu0 0.0
  %2252 = vmatprep.subr.mxu0 0.0
  %2253 = vmatpush1.msra.mxu0 0.0
  %2254 = vmatprep.subr.mxu0 0.0
  %2255 = vmatpush1.msra.mxu0 0.0
  %2256 = vmatprep.subr.mxu0 0.0
  %2257 = vmatpush1.msra.mxu0 0.0
  %2258 = vmatprep.subr.mxu0 0.0
  %2259 = vmatpush1.msra.mxu0 0.0
  %2260 = vmatprep.mubr.f32.mxu0 0.0
  %2261 = vmatmul.mubr.f32.gmra.mrb[0].mxu0 %v2114
  %v2262 = vpop.f32.mrb[0].mxu0
  %v2263 = vadd.f32 0.0, %v2262
  %v2264 = vpop.f32.mrb[0].mxu0
  %v2265 = vadd.f32 0.0, %v2264
  %2266 = vmatprep.mubr.f32.mxu0 0.0
  %2267 = vmatmul.mubr.f32.gmra.mrb[0].mxu0 %v2117
  %v2268 = vpop.f32.mrb[0].mxu0
  %v2269 = vadd.f32 0.0, %v2268
  %v2270 = vpop.f32.mrb[0].mxu0
  %v2271 = vadd.f32 0.0, %v2270
  %2272 = vdwg.mxu0
  %2273 = vmatprep.subr.mxu0 %v356
  %2274 = vmatpush1.msra.mxu0 %v355
  %2275 = vmatprep.subr.mxu0 %v362
  %2276 = vmatpush1.msra.mxu0 %v361
  %2277 = vmatprep.subr.mxu0 %v368
  %2278 = vmatpush1.msra.mxu0 %v367
  %2279 = vmatprep.subr.mxu0 %v374
  %2280 = vmatpush1.msra.mxu0 %v373
  %2281 = vmatprep.subr.mxu0 %v380
  %2282 = vmatpush1.msra.mxu0 %v379
  %2283 = vmatprep.subr.mxu0 %v386
  %2284 = vmatpush1.msra.mxu0 %v385
  %2285 = vmatprep.subr.mxu0 %v392
  %2286 = vmatpush1.msra.mxu0 %v391
  %2287 = vmatprep.subr.mxu0 %v398
  %2288 = vmatpush1.msra.mxu0 %v397
  %2289 = vmatprep.subr.mxu0 %v404
  %2290 = vmatpush1.msra.mxu0 %v403
  %2291 = vmatprep.subr.mxu0 %v410
  %2292 = vmatpush1.msra.mxu0 %v409
  %2293 = vmatprep.subr.mxu0 %v416
  %2294 = vmatpush1.msra.mxu0 %v415
  %2295 = vmatprep.subr.mxu0 %v422
  %2296 = vmatpush1.msra.mxu0 %v421
  %2297 = vmatprep.subr.mxu0 %v428
  %2298 = vmatpush1.msra.mxu0 %v427
  %2299 = vmatprep.subr.mxu0 %v434
  %2300 = vmatpush1.msra.mxu0 %v433
  %2301 = vmatprep.subr.mxu0 0.0
  %2302 = vmatpush1.msra.mxu0 0.0
  %2303 = vmatprep.subr.mxu0 0.0
  %2304 = vmatpush1.msra.mxu0 0.0
  %2305 = vmatprep.subr.mxu0 0.0
  %2306 = vmatpush1.msra.mxu0 0.0
  %2307 = vmatprep.subr.mxu0 0.0
  %2308 = vmatpush1.msra.mxu0 0.0
  %2309 = vmatprep.subr.mxu0 0.0
  %2310 = vmatpush1.msra.mxu0 0.0
  %2311 = vmatprep.subr.mxu0 0.0
  %2312 = vmatpush1.msra.mxu0 0.0
  %2313 = vmatprep.subr.mxu0 0.0
  %2314 = vmatpush1.msra.mxu0 0.0
  %2315 = vmatprep.subr.mxu0 0.0
  %2316 = vmatpush1.msra.mxu0 0.0
  %2317 = vmatprep.subr.mxu0 0.0
  %2318 = vmatpush1.msra.mxu0 0.0
  %2319 = vmatprep.subr.mxu0 0.0
  %2320 = vmatpush1.msra.mxu0 0.0
  %2321 = vmatprep.subr.mxu0 0.0
  %2322 = vmatpush1.msra.mxu0 0.0
  %2323 = vmatprep.subr.mxu0 0.0
  %2324 = vmatpush1.msra.mxu0 0.0
  %2325 = vmatprep.subr.mxu0 0.0
  %2326 = vmatpush1.msra.mxu0 0.0
  %2327 = vmatprep.subr.mxu0 0.0
  %2328 = vmatpush1.msra.mxu0 0.0
  %2329 = vmatprep.subr.mxu0 0.0
  %2330 = vmatpush1.msra.mxu0 0.0
  %2331 = vmatprep.subr.mxu0 0.0
  %2332 = vmatpush1.msra.mxu0 0.0
  %2333 = vmatprep.subr.mxu0 0.0
  %2334 = vmatpush1.msra.mxu0 0.0
  %2335 = vmatprep.subr.mxu0 0.0
  %2336 = vmatpush1.msra.mxu0 0.0
  %2337 = vmatprep.mubr.f32.mxu0 0.0
  %2338 = vmatmul.mubr.f32.gmra.mrb[0].mxu0 %v2114
  %v2339 = vpop.f32.mrb[0].mxu0
  %v2340 = vadd.f32 0.0, %v2339
  %v2341 = vpop.f32.mrb[0].mxu0
  %v2342 = vadd.f32 0.0, %v2341
  %2343 = vmatprep.mubr.f32.mxu0 0.0
  %2344 = vmatmul.mubr.f32.gmra.mrb[0].mxu0 %v2117
  %v2345 = vpop.f32.mrb[0].mxu0
  %v2346 = vadd.f32 0.0, %v2345
  %v2347 = vpop.f32.mrb[0].mxu0
  %v2348 = vadd.f32 0.0, %v2347
  %2349 = vdwg.mxu0
  %2350 = vrot.lane.b32.xlu0 %v2186, 32
  %v2351 = vpop.permute.xlu0 %2350
  %2352 = vrot.lane.b32.xlu0 %v2192, 32
  %v2353 = vpop.permute.xlu0 %2352
  %2354 = vrot.lane.b32.xlu0 %v2188, 32
  %v2355 = vpop.permute.xlu0 %2354
  %2356 = vrot.lane.b32.xlu0 %v2194, 32
  %v2357 = vpop.permute.xlu0 %2356
  %2358 = vrot.lane.b32.xlu0 %v2263, 32
  %v2359 = vpop.permute.xlu0 %2358
  %2360 = vrot.lane.b32.xlu0 %v2269, 32
  %v2361 = vpop.permute.xlu0 %2360
  %2362 = vrot.lane.b32.xlu0 %v2265, 32
  %v2363 = vpop.permute.xlu0 %2362
  %2364 = vrot.lane.b32.xlu0 %v2271, 32
  %v2365 = vpop.permute.xlu0 %2364
  %2366 = vrot.lane.b32.xlu0 %v2340, 32
  %v2367 = vpop.permute.xlu0 %2366
  %2368 = vrot.lane.b32.xlu0 %v2346, 32
  %v2369 = vpop.permute.xlu0 %2368
  %2370 = vrot.lane.b32.xlu0 %v2342, 32
  %v2371 = vpop.permute.xlu0 %2370
  %2372 = vrot.lane.b32.xlu0 %v2348, 32
  %v2373 = vpop.permute.xlu0 %2372
  %v2374 = vsel %vm1261, %v2367, %v2371
  %v2375 = vsel %vm1261, %v2369, %v2373
  %v2376 = vsel %vm1261, %v2363, %v2367
  %v2377 = vsel %vm1261, %v2365, %v2369
  %v2378 = vsel %vm1261, %v2359, %v2363
  %v2379 = vsel %vm1261, %v2361, %v2365
  %v2380 = vsel %vm1261, %v2355, %v2359
  %v2381 = vsel %vm1261, %v2357, %v2361
  %v2382 = vsel %vm1261, %v2351, %v2355
  %v2383 = vsel %vm1261, %v2353, %v2357
  %v2384 = vsel %vm1261, %v2371, %v2351
  %v2385 = vsel %vm1261, %v2373, %v2353
  %v2386 = vadd.f32 %v2099, %v2382
  %v2387 = vadd.f32 %v2100, %v2380
  %v2388 = vadd.f32 %v2101, %v2378
  %v2389 = vadd.f32 %v2102, %v2376
  %v2390 = vadd.f32 %v2103, %v2374
  %v2391 = vadd.f32 %v2104, %v2384
  %v2392 = vadd.f32 %v2105, %v2383
  %v2393 = vadd.f32 %v2106, %v2381
  %v2394 = vadd.f32 %v2107, %v2379
  %v2395 = vadd.f32 %v2108, %v2377
  %v2396 = vadd.f32 %v2109, %v2375
  %v2397 = vadd.f32 %v2110, %v2385
  %v2398 = vld [vmem:[%s5] sm:$0xff]
  %v2399 = vld [vmem:[%s5 + $0x8] sm:$0xff]
  %2401 = vset.pattern.permute.xlu0 0
  %2402 = vperm.xlu0 %2401, %v2398
  %v2403 = vpop.permute.xlu0 %2402
  %2406 = vset.pattern.permute.xlu0 0
  %2407 = vperm.xlu0 %2406, %v2399
  %v2408 = vpop.permute.xlu0 %2407
  %v2410 = vadd.f32 %v2386, %v2403
  %v2411 = vadd.f32 %v2387, %v2403
  %v2412 = vadd.f32 %v2388, %v2403
  %v2413 = vadd.f32 %v2389, %v2403
  %v2414 = vadd.f32 %v2390, %v2403
  %v2415 = vadd.f32 %v2391, %v2403
  %v2416 = vadd.f32 %v2392, %v2408
  %v2417 = vadd.f32 %v2393, %v2408
  %v2418 = vadd.f32 %v2394, %v2408
  %v2419 = vadd.f32 %v2395, %v2408
  %v2420 = vadd.f32 %v2396, %v2408
  %v2421 = vadd.f32 %v2397, %v2408
  %v2422 = vld [vmem:[%s1] sm:$0xff]
  %v2423 = vld [vmem:[%s1 + $0x8] sm:$0xff]
  %v2424 = vld [vmem:[%s1 + $0x10] sm:$0xff]
  %v2425 = vld [vmem:[%s1 + $0x18] sm:$0xff]
  %v2426 = vld [vmem:[%s1 + $0x20] sm:$0xff]
  %v2427 = vld [vmem:[%s1 + $0x28] sm:$0xff]
  %v2428 = vld [vmem:[%s1 + $0x30] sm:$0xff]
  %v2429 = vld [vmem:[%s1 + $0x38] sm:$0xff]
  %v2430 = vld [vmem:[%s1 + $0x40] sm:$0xff]
  %v2431 = vld [vmem:[%s1 + $0x48] sm:$0xff]
  %v2432 = vld [vmem:[%s1 + $0x50] sm:$0xff]
  %v2433 = vld [vmem:[%s1 + $0x58] sm:$0xff]
  %v2434 = vadd.f32 %v2410, %v2422
  %v2435 = vadd.f32 %v2411, %v2423
  %v2436 = vadd.f32 %v2412, %v2424
  %v2437 = vadd.f32 %v2413, %v2425
  %v2438 = vadd.f32 %v2414, %v2426
  %v2439 = vadd.f32 %v2415, %v2427
  %v2440 = vadd.f32 %v2416, %v2428
  %v2441 = vadd.f32 %v2417, %v2429
  %v2442 = vadd.f32 %v2418, %v2430
  %v2443 = vadd.f32 %v2419, %v2431
  %v2444 = vadd.f32 %v2420, %v2432
  %v2445 = vadd.f32 %v2421, %v2433
  %v2446 = vmax.f32 %v2434, 0.0
  %v2447 = vmax.f32 %v2435, 0.0
  %v2448 = vmax.f32 %v2436, 0.0
  %v2449 = vmax.f32 %v2437, 0.0
  %v2450 = vmax.f32 %v2438, 0.0
  %v2451 = vmax.f32 %v2439, 0.0
  %v2452 = vmax.f32 %v2440, 0.0
  %v2453 = vmax.f32 %v2441, 0.0
  %v2454 = vmax.f32 %v2442, 0.0
  %v2455 = vmax.f32 %v2443, 0.0
  %v2456 = vmax.f32 %v2444, 0.0
  %v2457 = vmax.f32 %v2445, 0.0
  %v2458 = vld [vmem:[%s3] sm:$0x3f]
  %v2460 = vlaneseq
  %v2461 = vshrl.u32 %v2460, 7
  %v2462 = vsub.s32 0, %v2461
  %v2463 = vrot.slane %v2458, %v2462
  %v2464 = vlaneseq
  %v2465 = vshrl.u32 %v2464, 7
  %v2466 = vsub.s32 1, %v2465
  %v2467 = vrot.slane %v2458, %v2466
  %v2468 = vlaneseq
  %v2469 = vshrl.u32 %v2468, 7
  %v2470 = vsub.s32 2, %v2469
  %v2471 = vrot.slane %v2458, %v2470
  %v2472 = vlaneseq
  %v2473 = vshrl.u32 %v2472, 7
  %v2474 = vsub.s32 3, %v2473
  %v2475 = vrot.slane %v2458, %v2474
  %v2476 = vlaneseq
  %v2477 = vshrl.u32 %v2476, 7
  %v2478 = vsub.s32 4, %v2477
  %v2479 = vrot.slane %v2458, %v2478
  %v2480 = vlaneseq
  %v2481 = vshrl.u32 %v2480, 7
  %v2482 = vsub.s32 5, %v2481
  %v2483 = vrot.slane %v2458, %v2482
  %v2490 = vmul.f32 %v2446, %v2463
  %v2491 = vmul.f32 %v2447, %v2467
  %v2492 = vmul.f32 %v2448, %v2471
  %v2493 = vmul.f32 %v2449, %v2475
  %v2494 = vmul.f32 %v2450, %v2479
  %v2495 = vmul.f32 %v2451, %v2483
  %v2496 = vmul.f32 %v2452, %v2463
  %v2497 = vmul.f32 %v2453, %v2467
  %v2498 = vmul.f32 %v2454, %v2471
  %v2499 = vmul.f32 %v2455, %v2475
  %v2500 = vmul.f32 %v2456, %v2479
  %v2501 = vmul.f32 %v2457, %v2483
  %2502 = vrot.lane.b32.xlu0 %v2490, 3
  %v2503 = vpop.permute.xlu0 %2502
  %2504 = vrot.lane.b32.xlu0 %v2496, 3
  %v2505 = vpop.permute.xlu0 %2504
  %2506 = vrot.lane.b32.xlu0 %v2491, 3
  %v2507 = vpop.permute.xlu0 %2506
  %2508 = vrot.lane.b32.xlu0 %v2497, 3
  %v2509 = vpop.permute.xlu0 %2508
  %2510 = vrot.lane.b32.xlu0 %v2492, 3
  %v2511 = vpop.permute.xlu0 %2510
  %2512 = vrot.lane.b32.xlu0 %v2498, 3
  %v2513 = vpop.permute.xlu0 %2512
  %2514 = vrot.lane.b32.xlu0 %v2493, 3
  %v2515 = vpop.permute.xlu0 %2514
  %2516 = vrot.lane.b32.xlu0 %v2499, 3
  %v2517 = vpop.permute.xlu0 %2516
  %2518 = vrot.lane.b32.xlu0 %v2494, 3
  %v2519 = vpop.permute.xlu0 %2518
  %2520 = vrot.lane.b32.xlu0 %v2500, 3
  %v2521 = vpop.permute.xlu0 %2520
  %2522 = vrot.lane.b32.xlu0 %v2495, 3
  %v2523 = vpop.permute.xlu0 %2522
  %2524 = vrot.lane.b32.xlu0 %v2501, 3
  %v2525 = vpop.permute.xlu0 %2524
  %v2526 = vsel %vm67, %v2519, %v2523
  %v2527 = vsel %vm67, %v2521, %v2525
  %v2528 = vsel %vm67, %v2515, %v2519
  %v2529 = vsel %vm67, %v2517, %v2521
  %v2530 = vsel %vm67, %v2511, %v2515
  %v2531 = vsel %vm67, %v2513, %v2517
  %v2532 = vsel %vm67, %v2507, %v2511
  %v2533 = vsel %vm67, %v2509, %v2513
  %v2534 = vsel %vm67, %v2503, %v2507
  %v2535 = vsel %vm67, %v2505, %v2509
  %v2536 = vsel %vm67, %v2523, %v2503
  %v2537 = vsel %vm67, %v2525, %v2505
  %2538 = vst [vmem:[#allocation2] sm:$0xff] %v2536
  %2539 = vst [vmem:[#allocation2 + $0x8] sm:$0xff] %v2534
  %2540 = vst [vmem:[#allocation2 + $0x10] sm:$0xff] %v2532
  %2541 = vst [vmem:[#allocation2 + $0x18] sm:$0xff] %v2530
  %2542 = vst [vmem:[#allocation2 + $0x20] sm:$0xff] %v2528
  %2543 = vst [vmem:[#allocation2 + $0x28] sm:$0xff] %v2526
  %2544 = vst [vmem:[#allocation2 + $0x30] sm:$0xff] %v2537
  %2545 = vst [vmem:[#allocation2 + $0x38] sm:$0xff] %v2535
  %2546 = vst [vmem:[#allocation2 + $0x40] sm:$0xff] %v2533
  %2547 = vst [vmem:[#allocation2 + $0x48] sm:$0xff] %v2531
  %2548 = vst [vmem:[#allocation2 + $0x50] sm:$0xff] %v2529
  %2549 = vst [vmem:[#allocation2 + $0x58] sm:$0xff] %v2527
  %2550 = vrot.lane.b32.xlu0 %v2490, 2
  %v2551 = vpop.permute.xlu0 %2550
  %2552 = vrot.lane.b32.xlu0 %v2496, 2
  %v2553 = vpop.permute.xlu0 %2552
  %2554 = vrot.lane.b32.xlu0 %v2491, 2
  %v2555 = vpop.permute.xlu0 %2554
  %2556 = vrot.lane.b32.xlu0 %v2497, 2
  %v2557 = vpop.permute.xlu0 %2556
  %2558 = vrot.lane.b32.xlu0 %v2492, 2
  %v2559 = vpop.permute.xlu0 %2558
  %2560 = vrot.lane.b32.xlu0 %v2498, 2
  %v2561 = vpop.permute.xlu0 %2560
  %2562 = vrot.lane.b32.xlu0 %v2493, 2
  %v2563 = vpop.permute.xlu0 %2562
  %2564 = vrot.lane.b32.xlu0 %v2499, 2
  %v2565 = vpop.permute.xlu0 %2564
  %2566 = vrot.lane.b32.xlu0 %v2494, 2
  %v2567 = vpop.permute.xlu0 %2566
  %2568 = vrot.lane.b32.xlu0 %v2500, 2
  %v2569 = vpop.permute.xlu0 %2568
  %2570 = vrot.lane.b32.xlu0 %v2495, 2
  %v2571 = vpop.permute.xlu0 %2570
  %2572 = vrot.lane.b32.xlu0 %v2501, 2
  %v2573 = vpop.permute.xlu0 %2572
  %v2574 = vsel %vm116, %v2567, %v2571
  %v2575 = vsel %vm116, %v2569, %v2573
  %v2576 = vsel %vm116, %v2563, %v2567
  %v2577 = vsel %vm116, %v2565, %v2569
  %v2578 = vsel %vm116, %v2559, %v2563
  %v2579 = vsel %vm116, %v2561, %v2565
  %v2580 = vsel %vm116, %v2555, %v2559
  %v2581 = vsel %vm116, %v2557, %v2561
  %v2582 = vsel %vm116, %v2551, %v2555
  %v2583 = vsel %vm116, %v2553, %v2557
  %v2584 = vsel %vm116, %v2571, %v2551
  %v2585 = vsel %vm116, %v2573, %v2553
  %2586 = vst [vmem:[#allocation2 + $0x60] sm:$0xff] %v2584
  %2587 = vst [vmem:[#allocation2 + $0x68] sm:$0xff] %v2582
  %2588 = vst [vmem:[#allocation2 + $0x70] sm:$0xff] %v2580
  %2589 = vst [vmem:[#allocation2 + $0x78] sm:$0xff] %v2578
  %2590 = vst [vmem:[#allocation2 + $0x80] sm:$0xff] %v2576
  %2591 = vst [vmem:[#allocation2 + $0x88] sm:$0xff] %v2574
  %2592 = vst [vmem:[#allocation2 + $0x90] sm:$0xff] %v2585
  %2593 = vst [vmem:[#allocation2 + $0x98] sm:$0xff] %v2583
  %2594 = vst [vmem:[#allocation2 + $0xa0] sm:$0xff] %v2581
  %2595 = vst [vmem:[#allocation2 + $0xa8] sm:$0xff] %v2579
  %2596 = vst [vmem:[#allocation2 + $0xb0] sm:$0xff] %v2577
  %2597 = vst [vmem:[#allocation2 + $0xb8] sm:$0xff] %v2575
  %2598 = vrot.lane.b32.xlu0 %v2490, 1
  %v2599 = vpop.permute.xlu0 %2598
  %2600 = vrot.lane.b32.xlu0 %v2496, 1
  %v2601 = vpop.permute.xlu0 %2600
  %2602 = vrot.lane.b32.xlu0 %v2491, 1
  %v2603 = vpop.permute.xlu0 %2602
  %2604 = vrot.lane.b32.xlu0 %v2497, 1
  %v2605 = vpop.permute.xlu0 %2604
  %2606 = vrot.lane.b32.xlu0 %v2492, 1
  %v2607 = vpop.permute.xlu0 %2606
  %2608 = vrot.lane.b32.xlu0 %v2498, 1
  %v2609 = vpop.permute.xlu0 %2608
  %2610 = vrot.lane.b32.xlu0 %v2493, 1
  %v2611 = vpop.permute.xlu0 %2610
  %2612 = vrot.lane.b32.xlu0 %v2499, 1
  %v2613 = vpop.permute.xlu0 %2612
  %2614 = vrot.lane.b32.xlu0 %v2494, 1
  %v2615 = vpop.permute.xlu0 %2614
  %2616 = vrot.lane.b32.xlu0 %v2500, 1
  %v2617 = vpop.permute.xlu0 %2616
  %2618 = vrot.lane.b32.xlu0 %v2495, 1
  %v2619 = vpop.permute.xlu0 %2618
  %2620 = vrot.lane.b32.xlu0 %v2501, 1
  %v2621 = vpop.permute.xlu0 %2620
  %v2622 = vsel %vm165, %v2615, %v2619
  %v2623 = vsel %vm165, %v2617, %v2621
  %v2624 = vsel %vm165, %v2611, %v2615
  %v2625 = vsel %vm165, %v2613, %v2617
  %v2626 = vsel %vm165, %v2607, %v2611
  %v2627 = vsel %vm165, %v2609, %v2613
  %v2628 = vsel %vm165, %v2603, %v2607
  %v2629 = vsel %vm165, %v2605, %v2609
  %v2630 = vsel %vm165, %v2599, %v2603
  %v2631 = vsel %vm165, %v2601, %v2605
  %v2632 = vsel %vm165, %v2619, %v2599
  %v2633 = vsel %vm165, %v2621, %v2601
  %2634 = vst [vmem:[#allocation2 + $0xc0] sm:$0xff] %v2632
  %2635 = vst [vmem:[#allocation2 + $0xc8] sm:$0xff] %v2630
  %2636 = vst [vmem:[#allocation2 + $0xd0] sm:$0xff] %v2628
  %2637 = vst [vmem:[#allocation2 + $0xd8] sm:$0xff] %v2626
  %2638 = vst [vmem:[#allocation2 + $0xe0] sm:$0xff] %v2624
  %2639 = vst [vmem:[#allocation2 + $0xe8] sm:$0xff] %v2622
  %2640 = vst [vmem:[#allocation2 + $0xf0] sm:$0xff] %v2633
  %2641 = vst [vmem:[#allocation2 + $0xf8] sm:$0xff] %v2631
  %2642 = vst [vmem:[#allocation2 + $0x100] sm:$0xff] %v2629
  %2643 = vst [vmem:[#allocation2 + $0x108] sm:$0xff] %v2627
  %2644 = vst [vmem:[#allocation2 + $0x110] sm:$0xff] %v2625
  %2645 = vst [vmem:[#allocation2 + $0x118] sm:$0xff] %v2623
  %2646 = vst [vmem:[#allocation2 + $0x120] sm:$0xff] %v2490
  %2647 = vst [vmem:[#allocation2 + $0x128] sm:$0xff] %v2491
  %2648 = vst [vmem:[#allocation2 + $0x130] sm:$0xff] %v2492
  %2649 = vst [vmem:[#allocation2 + $0x138] sm:$0xff] %v2493
  %2650 = vst [vmem:[#allocation2 + $0x140] sm:$0xff] %v2494
  %2651 = vst [vmem:[#allocation2 + $0x148] sm:$0xff] %v2495
  %2652 = vst [vmem:[#allocation2 + $0x150] sm:$0xff] %v2496
  %2653 = vst [vmem:[#allocation2 + $0x158] sm:$0xff] %v2497
  %2654 = vst [vmem:[#allocation2 + $0x160] sm:$0xff] %v2498
  %2655 = vst [vmem:[#allocation2 + $0x168] sm:$0xff] %v2499
  %2656 = vst [vmem:[#allocation2 + $0x170] sm:$0xff] %v2500
  %2657 = vst [vmem:[#allocation2 + $0x178] sm:$0xff] %v2501
  %2658 = vrot.lane.b32.xlu0 %v2490, 127
  %v2659 = vpop.permute.xlu0 %2658
  %2660 = vrot.lane.b32.xlu0 %v2496, 127
  %v2661 = vpop.permute.xlu0 %2660
  %2662 = vrot.lane.b32.xlu0 %v2491, 127
  %v2663 = vpop.permute.xlu0 %2662
  %2664 = vrot.lane.b32.xlu0 %v2497, 127
  %v2665 = vpop.permute.xlu0 %2664
  %2666 = vrot.lane.b32.xlu0 %v2492, 127
  %v2667 = vpop.permute.xlu0 %2666
  %2668 = vrot.lane.b32.xlu0 %v2498, 127
  %v2669 = vpop.permute.xlu0 %2668
  %2670 = vrot.lane.b32.xlu0 %v2493, 127
  %v2671 = vpop.permute.xlu0 %2670
  %2672 = vrot.lane.b32.xlu0 %v2499, 127
  %v2673 = vpop.permute.xlu0 %2672
  %2674 = vrot.lane.b32.xlu0 %v2494, 127
  %v2675 = vpop.permute.xlu0 %2674
  %2676 = vrot.lane.b32.xlu0 %v2500, 127
  %v2677 = vpop.permute.xlu0 %2676
  %2678 = vrot.lane.b32.xlu0 %v2495, 127
  %v2679 = vpop.permute.xlu0 %2678
  %2680 = vrot.lane.b32.xlu0 %v2501, 127
  %v2681 = vpop.permute.xlu0 %2680
  %v2682 = vsel %vm226, %v2675, %v2679
  %v2683 = vsel %vm226, %v2677, %v2681
  %v2684 = vsel %vm226, %v2671, %v2675
  %v2685 = vsel %vm226, %v2673, %v2677
  %v2686 = vsel %vm226, %v2667, %v2671
  %v2687 = vsel %vm226, %v2669, %v2673
  %v2688 = vsel %vm226, %v2663, %v2667
  %v2689 = vsel %vm226, %v2665, %v2669
  %v2690 = vsel %vm226, %v2659, %v2663
  %v2691 = vsel %vm226, %v2661, %v2665
  %v2692 = vsel %vm226, %v2679, %v2659
  %v2693 = vsel %vm226, %v2681, %v2661
  %2694 = vst [vmem:[#allocation2 + $0x180] sm:$0xff] %v2690
  %2695 = vst [vmem:[#allocation2 + $0x188] sm:$0xff] %v2688
  %2696 = vst [vmem:[#allocation2 + $0x190] sm:$0xff] %v2686
  %2697 = vst [vmem:[#allocation2 + $0x198] sm:$0xff] %v2684
  %2698 = vst [vmem:[#allocation2 + $0x1a0] sm:$0xff] %v2682
  %2699 = vst [vmem:[#allocation2 + $0x1a8] sm:$0xff] %v2692
  %2700 = vst [vmem:[#allocation2 + $0x1b0] sm:$0xff] %v2691
  %2701 = vst [vmem:[#allocation2 + $0x1b8] sm:$0xff] %v2689
  %2702 = vst [vmem:[#allocation2 + $0x1c0] sm:$0xff] %v2687
  %2703 = vst [vmem:[#allocation2 + $0x1c8] sm:$0xff] %v2685
  %2704 = vst [vmem:[#allocation2 + $0x1d0] sm:$0xff] %v2683
  %2705 = vst [vmem:[#allocation2 + $0x1d8] sm:$0xff] %v2693
  %2706 = vrot.lane.b32.xlu0 %v2490, 126
  %v2707 = vpop.permute.xlu0 %2706
  %2708 = vrot.lane.b32.xlu0 %v2496, 126
  %v2709 = vpop.permute.xlu0 %2708
  %2710 = vrot.lane.b32.xlu0 %v2491, 126
  %v2711 = vpop.permute.xlu0 %2710
  %2712 = vrot.lane.b32.xlu0 %v2497, 126
  %v2713 = vpop.permute.xlu0 %2712
  %2714 = vrot.lane.b32.xlu0 %v2492, 126
  %v2715 = vpop.permute.xlu0 %2714
  %2716 = vrot.lane.b32.xlu0 %v2498, 126
  %v2717 = vpop.permute.xlu0 %2716
  %2718 = vrot.lane.b32.xlu0 %v2493, 126
  %v2719 = vpop.permute.xlu0 %2718
  %2720 = vrot.lane.b32.xlu0 %v2499, 126
  %v2721 = vpop.permute.xlu0 %2720
  %2722 = vrot.lane.b32.xlu0 %v2494, 126
  %v2723 = vpop.permute.xlu0 %2722
  %2724 = vrot.lane.b32.xlu0 %v2500, 126
  %v2725 = vpop.permute.xlu0 %2724
  %2726 = vrot.lane.b32.xlu0 %v2495, 126
  %v2727 = vpop.permute.xlu0 %2726
  %2728 = vrot.lane.b32.xlu0 %v2501, 126
  %v2729 = vpop.permute.xlu0 %2728
  %v2730 = vsel %vm275, %v2723, %v2727
  %v2731 = vsel %vm275, %v2725, %v2729
  %v2732 = vsel %vm275, %v2719, %v2723
  %v2733 = vsel %vm275, %v2721, %v2725
  %v2734 = vsel %vm275, %v2715, %v2719
  %v2735 = vsel %vm275, %v2717, %v2721
  %v2736 = vsel %vm275, %v2711, %v2715
  %v2737 = vsel %vm275, %v2713, %v2717
  %v2738 = vsel %vm275, %v2707, %v2711
  %v2739 = vsel %vm275, %v2709, %v2713
  %v2740 = vsel %vm275, %v2727, %v2707
  %v2741 = vsel %vm275, %v2729, %v2709
  %2742 = vst [vmem:[#allocation2 + $0x1e0] sm:$0xff] %v2738
  %2743 = vst [vmem:[#allocation2 + $0x1e8] sm:$0xff] %v2736
  %2744 = vst [vmem:[#allocation2 + $0x1f0] sm:$0xff] %v2734
  %2745 = vst [vmem:[#allocation2 + $0x1f8] sm:$0xff] %v2732
  %2746 = vst [vmem:[#allocation2 + $0x200] sm:$0xff] %v2730
  %2747 = vst [vmem:[#allocation2 + $0x208] sm:$0xff] %v2740
  %2748 = vst [vmem:[#allocation2 + $0x210] sm:$0xff] %v2739
  %2749 = vst [vmem:[#allocation2 + $0x218] sm:$0xff] %v2737
  %2750 = vst [vmem:[#allocation2 + $0x220] sm:$0xff] %v2735
  %2751 = vst [vmem:[#allocation2 + $0x228] sm:$0xff] %v2733
  %2752 = vst [vmem:[#allocation2 + $0x230] sm:$0xff] %v2731
  %2753 = vst [vmem:[#allocation2 + $0x238] sm:$0xff] %v2741
  %2754 = vrot.lane.b32.xlu0 %v2490, 125
  %v2755 = vpop.permute.xlu0 %2754
  %2756 = vrot.lane.b32.xlu0 %v2496, 125
  %v2757 = vpop.permute.xlu0 %2756
  %2758 = vrot.lane.b32.xlu0 %v2491, 125
  %v2759 = vpop.permute.xlu0 %2758
  %2760 = vrot.lane.b32.xlu0 %v2497, 125
  %v2761 = vpop.permute.xlu0 %2760
  %2762 = vrot.lane.b32.xlu0 %v2492, 125
  %v2763 = vpop.permute.xlu0 %2762
  %2764 = vrot.lane.b32.xlu0 %v2498, 125
  %v2765 = vpop.permute.xlu0 %2764
  %2766 = vrot.lane.b32.xlu0 %v2493, 125
  %v2767 = vpop.permute.xlu0 %2766
  %2768 = vrot.lane.b32.xlu0 %v2499, 125
  %v2769 = vpop.permute.xlu0 %2768
  %2770 = vrot.lane.b32.xlu0 %v2494, 125
  %v2771 = vpop.permute.xlu0 %2770
  %2772 = vrot.lane.b32.xlu0 %v2500, 125
  %v2773 = vpop.permute.xlu0 %2772
  %2774 = vrot.lane.b32.xlu0 %v2495, 125
  %v2775 = vpop.permute.xlu0 %2774
  %2776 = vrot.lane.b32.xlu0 %v2501, 125
  %v2777 = vpop.permute.xlu0 %2776
  %v2778 = vsel %vm324, %v2771, %v2775
  %v2779 = vsel %vm324, %v2773, %v2777
  %v2780 = vsel %vm324, %v2767, %v2771
  %v2781 = vsel %vm324, %v2769, %v2773
  %v2782 = vsel %vm324, %v2763, %v2767
  %v2783 = vsel %vm324, %v2765, %v2769
  %v2784 = vsel %vm324, %v2759, %v2763
  %v2785 = vsel %vm324, %v2761, %v2765
  %v2786 = vsel %vm324, %v2755, %v2759
  %v2787 = vsel %vm324, %v2757, %v2761
  %v2788 = vsel %vm324, %v2775, %v2755
  %v2789 = vsel %vm324, %v2777, %v2757
  %2790 = vst [vmem:[#allocation2 + $0x240] sm:$0xff] %v2786
  %2791 = vst [vmem:[#allocation2 + $0x248] sm:$0xff] %v2784
  %2792 = vst [vmem:[#allocation2 + $0x250] sm:$0xff] %v2782
  %2793 = vst [vmem:[#allocation2 + $0x258] sm:$0xff] %v2780
  %2794 = vst [vmem:[#allocation2 + $0x260] sm:$0xff] %v2778
  %2795 = vst [vmem:[#allocation2 + $0x268] sm:$0xff] %v2788
  %2796 = vst [vmem:[#allocation2 + $0x270] sm:$0xff] %v2787
  %2797 = vst [vmem:[#allocation2 + $0x278] sm:$0xff] %v2785
  %2798 = vst [vmem:[#allocation2 + $0x280] sm:$0xff] %v2783
  %2799 = vst [vmem:[#allocation2 + $0x288] sm:$0xff] %v2781
  %2800 = vst [vmem:[#allocation2 + $0x290] sm:$0xff] %v2779
  %2801 = vst [vmem:[#allocation2 + $0x298] sm:$0xff] %v2789
  %v2802 = vld [vmem:[%s6] sm:$0xff]
  %v2803 = vld [vmem:[%s6 + $0x8] sm:$0xff]
  %v2804 = vld [vmem:[#allocation2] sm:$0xff]
  %v2805 = vld [vmem:[#allocation2 + $0x8] sm:$0xff]
  %v2806 = vld [vmem:[#allocation2 + $0x10] sm:$0xff]
  %v2807 = vld [vmem:[#allocation2 + $0x18] sm:$0xff]
  %v2808 = vld [vmem:[#allocation2 + $0x20] sm:$0xff]
  %v2809 = vld [vmem:[#allocation2 + $0x28] sm:$0xff]
  %v2810 = vld [vmem:[#allocation2 + $0x30] sm:$0xff]
  %v2811 = vld [vmem:[#allocation2 + $0x38] sm:$0xff]
  %v2812 = vld [vmem:[#allocation2 + $0x40] sm:$0xff]
  %v2813 = vld [vmem:[#allocation2 + $0x48] sm:$0xff]
  %v2814 = vld [vmem:[#allocation2 + $0x50] sm:$0xff]
  %v2815 = vld [vmem:[#allocation2 + $0x58] sm:$0xff]
  %v2816 = vld [vmem:[#allocation2 + $0x60] sm:$0xff]
  %v2817 = vld [vmem:[#allocation2 + $0x68] sm:$0xff]
  %v2818 = vld [vmem:[#allocation2 + $0x70] sm:$0xff]
  %v2819 = vld [vmem:[#allocation2 + $0x78] sm:$0xff]
  %v2820 = vld [vmem:[#allocation2 + $0x80] sm:$0xff]
  %v2821 = vld [vmem:[#allocation2 + $0x88] sm:$0xff]
  %v2822 = vld [vmem:[#allocation2 + $0x90] sm:$0xff]
  %v2823 = vld [vmem:[#allocation2 + $0x98] sm:$0xff]
  %v2824 = vld [vmem:[#allocation2 + $0xa0] sm:$0xff]
  %v2825 = vld [vmem:[#allocation2 + $0xa8] sm:$0xff]
  %v2826 = vld [vmem:[#allocation2 + $0xb0] sm:$0xff]
  %v2827 = vld [vmem:[#allocation2 + $0xb8] sm:$0xff]
  %v2828 = vld [vmem:[#allocation2 + $0xc0] sm:$0xff]
  %v2829 = vld [vmem:[#allocation2 + $0xc8] sm:$0xff]
  %v2830 = vld [vmem:[#allocation2 + $0xd0] sm:$0xff]
  %v2831 = vld [vmem:[#allocation2 + $0xd8] sm:$0xff]
  %v2832 = vld [vmem:[#allocation2 + $0xe0] sm:$0xff]
  %v2833 = vld [vmem:[#allocation2 + $0xe8] sm:$0xff]
  %v2834 = vld [vmem:[#allocation2 + $0xf0] sm:$0xff]
  %v2835 = vld [vmem:[#allocation2 + $0xf8] sm:$0xff]
  %v2836 = vld [vmem:[#allocation2 + $0x100] sm:$0xff]
  %v2837 = vld [vmem:[#allocation2 + $0x108] sm:$0xff]
  %v2838 = vld [vmem:[#allocation2 + $0x110] sm:$0xff]
  %v2839 = vld [vmem:[#allocation2 + $0x118] sm:$0xff]
  %v2840 = vld [vmem:[#allocation2 + $0x120] sm:$0xff]
  %v2841 = vld [vmem:[#allocation2 + $0x128] sm:$0xff]
  %v2842 = vld [vmem:[#allocation2 + $0x130] sm:$0xff]
  %v2843 = vld [vmem:[#allocation2 + $0x138] sm:$0xff]
  %v2844 = vld [vmem:[#allocation2 + $0x140] sm:$0xff]
  %v2845 = vld [vmem:[#allocation2 + $0x148] sm:$0xff]
  %v2846 = vld [vmem:[#allocation2 + $0x150] sm:$0xff]
  %v2847 = vld [vmem:[#allocation2 + $0x158] sm:$0xff]
  %v2848 = vld [vmem:[#allocation2 + $0x160] sm:$0xff]
  %v2849 = vld [vmem:[#allocation2 + $0x168] sm:$0xff]
  %v2850 = vld [vmem:[#allocation2 + $0x170] sm:$0xff]
  %v2851 = vld [vmem:[#allocation2 + $0x178] sm:$0xff]
  %v2852 = vld [vmem:[#allocation2 + $0x180] sm:$0xff]
  %v2853 = vld [vmem:[#allocation2 + $0x188] sm:$0xff]
  %v2854 = vld [vmem:[#allocation2 + $0x190] sm:$0xff]
  %v2855 = vld [vmem:[#allocation2 + $0x198] sm:$0xff]
  %v2856 = vld [vmem:[#allocation2 + $0x1a0] sm:$0xff]
  %v2857 = vld [vmem:[#allocation2 + $0x1a8] sm:$0xff]
  %v2858 = vld [vmem:[#allocation2 + $0x1b0] sm:$0xff]
  %v2859 = vld [vmem:[#allocation2 + $0x1b8] sm:$0xff]
  %v2860 = vld [vmem:[#allocation2 + $0x1c0] sm:$0xff]
  %v2861 = vld [vmem:[#allocation2 + $0x1c8] sm:$0xff]
  %v2862 = vld [vmem:[#allocation2 + $0x1d0] sm:$0xff]
  %v2863 = vld [vmem:[#allocation2 + $0x1d8] sm:$0xff]
  %v2864 = vld [vmem:[#allocation2 + $0x1e0] sm:$0xff]
  %v2865 = vld [vmem:[#allocation2 + $0x1e8] sm:$0xff]
  %v2866 = vld [vmem:[#allocation2 + $0x1f0] sm:$0xff]
  %v2867 = vld [vmem:[#allocation2 + $0x1f8] sm:$0xff]
  %v2868 = vld [vmem:[#allocation2 + $0x200] sm:$0xff]
  %v2869 = vld [vmem:[#allocation2 + $0x208] sm:$0xff]
  %v2870 = vld [vmem:[#allocation2 + $0x210] sm:$0xff]
  %v2871 = vld [vmem:[#allocation2 + $0x218] sm:$0xff]
  %v2872 = vld [vmem:[#allocation2 + $0x220] sm:$0xff]
  %v2873 = vld [vmem:[#allocation2 + $0x228] sm:$0xff]
  %v2874 = vld [vmem:[#allocation2 + $0x230] sm:$0xff]
  %v2875 = vld [vmem:[#allocation2 + $0x238] sm:$0xff]
  %v2876 = vld [vmem:[#allocation2 + $0x240] sm:$0xff]
  %v2877 = vld [vmem:[#allocation2 + $0x248] sm:$0xff]
  %v2878 = vld [vmem:[#allocation2 + $0x250] sm:$0xff]
  %v2879 = vld [vmem:[#allocation2 + $0x258] sm:$0xff]
  %v2880 = vld [vmem:[#allocation2 + $0x260] sm:$0xff]
  %v2881 = vld [vmem:[#allocation2 + $0x268] sm:$0xff]
  %v2882 = vld [vmem:[#allocation2 + $0x270] sm:$0xff]
  %v2883 = vld [vmem:[#allocation2 + $0x278] sm:$0xff]
  %v2884 = vld [vmem:[#allocation2 + $0x280] sm:$0xff]
  %v2885 = vld [vmem:[#allocation2 + $0x288] sm:$0xff]
  %v2886 = vld [vmem:[#allocation2 + $0x290] sm:$0xff]
  %v2887 = vld [vmem:[#allocation2 + $0x298] sm:$0xff]
  %v2889 = vsel %vm435, %v2802, 0
  %v2892 = vsel %vm435, %v2803, 0
  %2894 = vmatprep.subr.mxu0 %v2805
  %2895 = vmatpush1.msra.mxu0 %v2804
  %2896 = vmatprep.subr.mxu0 %v2811
  %2897 = vmatpush1.msra.mxu0 %v2810
  %2898 = vmatprep.subr.mxu0 %v2817
  %2899 = vmatpush1.msra.mxu0 %v2816
  %2900 = vmatprep.subr.mxu0 %v2823
  %2901 = vmatpush1.msra.mxu0 %v2822
  %2902 = vmatprep.subr.mxu0 %v2829
  %2903 = vmatpush1.msra.mxu0 %v2828
  %2904 = vmatprep.subr.mxu0 %v2835
  %2905 = vmatpush1.msra.mxu0 %v2834
  %2906 = vmatprep.subr.mxu0 %v2841
  %2907 = vmatpush1.msra.mxu0 %v2840
  %2908 = vmatprep.subr.mxu0 %v2847
  %2909 = vmatpush1.msra.mxu0 %v2846
  %2910 = vmatprep.subr.mxu0 %v2853
  %2911 = vmatpush1.msra.mxu0 %v2852
  %2912 = vmatprep.subr.mxu0 %v2859
  %2913 = vmatpush1.msra.mxu0 %v2858
  %2914 = vmatprep.subr.mxu0 %v2865
  %2915 = vmatpush1.msra.mxu0 %v2864
  %2916 = vmatprep.subr.mxu0 %v2871
  %2917 = vmatpush1.msra.mxu0 %v2870
  %2918 = vmatprep.subr.mxu0 %v2877
  %2919 = vmatpush1.msra.mxu0 %v2876
  %2920 = vmatprep.subr.mxu0 %v2883
  %2921 = vmatpush1.msra.mxu0 %v2882
  %2922 = vmatprep.subr.mxu0 0.0
  %2923 = vmatpush1.msra.mxu0 0.0
  %2924 = vmatprep.subr.mxu0 0.0
  %2925 = vmatpush1.msra.mxu0 0.0
  %2926 = vmatprep.subr.mxu0 0.0
  %2927 = vmatpush1.msra.mxu0 0.0
  %2928 = vmatprep.subr.mxu0 0.0
  %2929 = vmatpush1.msra.mxu0 0.0
  %2930 = vmatprep.subr.mxu0 0.0
  %2931 = vmatpush1.msra.mxu0 0.0
  %2932 = vmatprep.subr.mxu0 0.0
  %2933 = vmatpush1.msra.mxu0 0.0
  %2934 = vmatprep.subr.mxu0 0.0
  %2935 = vmatpush1.msra.mxu0 0.0
  %2936 = vmatprep.subr.mxu0 0.0
  %2937 = vmatpush1.msra.mxu0 0.0
  %2938 = vmatprep.subr.mxu0 0.0
  %2939 = vmatpush1.msra.mxu0 0.0
  %2940 = vmatprep.subr.mxu0 0.0
  %2941 = vmatpush1.msra.mxu0 0.0
  %2942 = vmatprep.subr.mxu0 0.0
  %2943 = vmatpush1.msra.mxu0 0.0
  %2944 = vmatprep.subr.mxu0 0.0
  %2945 = vmatpush1.msra.mxu0 0.0
  %2946 = vmatprep.subr.mxu0 0.0
  %2947 = vmatpush1.msra.mxu0 0.0
  %2948 = vmatprep.subr.mxu0 0.0
  %2949 = vmatpush1.msra.mxu0 0.0
  %2950 = vmatprep.subr.mxu0 0.0
  %2951 = vmatpush1.msra.mxu0 0.0
  %2952 = vmatprep.subr.mxu0 0.0
  %2953 = vmatpush1.msra.mxu0 0.0
  %2954 = vmatprep.subr.mxu0 0.0
  %2955 = vmatpush1.msra.mxu0 0.0
  %2956 = vmatprep.subr.mxu0 0.0
  %2957 = vmatpush1.msra.mxu0 0.0
  %2958 = vmatprep.mubr.f32.mxu0 0.0
  %2959 = vmatmul.mubr.f32.gmra.mrb[0].mxu0 %v2889
  %v2960 = vpop.f32.mrb[0].mxu0
  %v2961 = vadd.f32 0.0, %v2960
  %v2962 = vpop.f32.mrb[0].mxu0
  %v2963 = vadd.f32 0.0, %v2962
  %2964 = vmatprep.mubr.f32.mxu0 0.0
  %2965 = vmatmul.mubr.f32.gmra.mrb[0].mxu0 %v2892
  %v2966 = vpop.f32.mrb[0].mxu0
  %v2967 = vadd.f32 0.0, %v2966
  %v2968 = vpop.f32.mrb[0].mxu0
  %v2969 = vadd.f32 0.0, %v2968
  %2970 = vdwg.mxu0
  %2971 = vmatprep.subr.mxu0 %v2807
  %2972 = vmatpush1.msra.mxu0 %v2806
  %2973 = vmatprep.subr.mxu0 %v2813
  %2974 = vmatpush1.msra.mxu0 %v2812
  %2975 = vmatprep.subr.mxu0 %v2819
  %2976 = vmatpush1.msra.mxu0 %v2818
  %2977 = vmatprep.subr.mxu0 %v2825
  %2978 = vmatpush1.msra.mxu0 %v2824
  %2979 = vmatprep.subr.mxu0 %v2831
  %2980 = vmatpush1.msra.mxu0 %v2830
  %2981 = vmatprep.subr.mxu0 %v2837
  %2982 = vmatpush1.msra.mxu0 %v2836
  %2983 = vmatprep.subr.mxu0 %v2843
  %2984 = vmatpush1.msra.mxu0 %v2842
  %2985 = vmatprep.subr.mxu0 %v2849
  %2986 = vmatpush1.msra.mxu0 %v2848
  %2987 = vmatprep.subr.mxu0 %v2855
  %2988 = vmatpush1.msra.mxu0 %v2854
  %2989 = vmatprep.subr.mxu0 %v2861
  %2990 = vmatpush1.msra.mxu0 %v2860
  %2991 = vmatprep.subr.mxu0 %v2867
  %2992 = vmatpush1.msra.mxu0 %v2866
  %2993 = vmatprep.subr.mxu0 %v2873
  %2994 = vmatpush1.msra.mxu0 %v2872
  %2995 = vmatprep.subr.mxu0 %v2879
  %2996 = vmatpush1.msra.mxu0 %v2878
  %2997 = vmatprep.subr.mxu0 %v2885
  %2998 = vmatpush1.msra.mxu0 %v2884
  %2999 = vmatprep.subr.mxu0 0.0
  %3000 = vmatpush1.msra.mxu0 0.0
  %3001 = vmatprep.subr.mxu0 0.0
  %3002 = vmatpush1.msra.mxu0 0.0
  %3003 = vmatprep.subr.mxu0 0.0
  %3004 = vmatpush1.msra.mxu0 0.0
  %3005 = vmatprep.subr.mxu0 0.0
  %3006 = vmatpush1.msra.mxu0 0.0
  %3007 = vmatprep.subr.mxu0 0.0
  %3008 = vmatpush1.msra.mxu0 0.0
  %3009 = vmatprep.subr.mxu0 0.0
  %3010 = vmatpush1.msra.mxu0 0.0
  %3011 = vmatprep.subr.mxu0 0.0
  %3012 = vmatpush1.msra.mxu0 0.0
  %3013 = vmatprep.subr.mxu0 0.0
  %3014 = vmatpush1.msra.mxu0 0.0
  %3015 = vmatprep.subr.mxu0 0.0
  %3016 = vmatpush1.msra.mxu0 0.0
  %3017 = vmatprep.subr.mxu0 0.0
  %3018 = vmatpush1.msra.mxu0 0.0
  %3019 = vmatprep.subr.mxu0 0.0
  %3020 = vmatpush1.msra.mxu0 0.0
  %3021 = vmatprep.subr.mxu0 0.0
  %3022 = vmatpush1.msra.mxu0 0.0
  %3023 = vmatprep.subr.mxu0 0.0
  %3024 = vmatpush1.msra.mxu0 0.0
  %3025 = vmatprep.subr.mxu0 0.0
  %3026 = vmatpush1.msra.mxu0 0.0
  %3027 = vmatprep.subr.mxu0 0.0
  %3028 = vmatpush1.msra.mxu0 0.0
  %3029 = vmatprep.subr.mxu0 0.0
  %3030 = vmatpush1.msra.mxu0 0.0
  %3031 = vmatprep.subr.mxu0 0.0
  %3032 = vmatpush1.msra.mxu0 0.0
  %3033 = vmatprep.subr.mxu0 0.0
  %3034 = vmatpush1.msra.mxu0 0.0
  %3035 = vmatprep.mubr.f32.mxu0 0.0
  %3036 = vmatmul.mubr.f32.gmra.mrb[0].mxu0 %v2889
  %v3037 = vpop.f32.mrb[0].mxu0
  %v3038 = vadd.f32 0.0, %v3037
  %v3039 = vpop.f32.mrb[0].mxu0
  %v3040 = vadd.f32 0.0, %v3039
  %3041 = vmatprep.mubr.f32.mxu0 0.0
  %3042 = vmatmul.mubr.f32.gmra.mrb[0].mxu0 %v2892
  %v3043 = vpop.f32.mrb[0].mxu0
  %v3044 = vadd.f32 0.0, %v3043
  %v3045 = vpop.f32.mrb[0].mxu0
  %v3046 = vadd.f32 0.0, %v3045
  %3047 = vdwg.mxu0
  %3048 = vmatprep.subr.mxu0 %v2809
  %3049 = vmatpush1.msra.mxu0 %v2808
  %3050 = vmatprep.subr.mxu0 %v2815
  %3051 = vmatpush1.msra.mxu0 %v2814
  %3052 = vmatprep.subr.mxu0 %v2821
  %3053 = vmatpush1.msra.mxu0 %v2820
  %3054 = vmatprep.subr.mxu0 %v2827
  %3055 = vmatpush1.msra.mxu0 %v2826
  %3056 = vmatprep.subr.mxu0 %v2833
  %3057 = vmatpush1.msra.mxu0 %v2832
  %3058 = vmatprep.subr.mxu0 %v2839
  %3059 = vmatpush1.msra.mxu0 %v2838
  %3060 = vmatprep.subr.mxu0 %v2845
  %3061 = vmatpush1.msra.mxu0 %v2844
  %3062 = vmatprep.subr.mxu0 %v2851
  %3063 = vmatpush1.msra.mxu0 %v2850
  %3064 = vmatprep.subr.mxu0 %v2857
  %3065 = vmatpush1.msra.mxu0 %v2856
  %3066 = vmatprep.subr.mxu0 %v2863
  %3067 = vmatpush1.msra.mxu0 %v2862
  %3068 = vmatprep.subr.mxu0 %v2869
  %3069 = vmatpush1.msra.mxu0 %v2868
  %3070 = vmatprep.subr.mxu0 %v2875
  %3071 = vmatpush1.msra.mxu0 %v2874
  %3072 = vmatprep.subr.mxu0 %v2881
  %3073 = vmatpush1.msra.mxu0 %v2880
  %3074 = vmatprep.subr.mxu0 %v2887
  %3075 = vmatpush1.msra.mxu0 %v2886
  %3076 = vmatprep.subr.mxu0 0.0
  %3077 = vmatpush1.msra.mxu0 0.0
  %3078 = vmatprep.subr.mxu0 0.0
  %3079 = vmatpush1.msra.mxu0 0.0
  %3080 = vmatprep.subr.mxu0 0.0
  %3081 = vmatpush1.msra.mxu0 0.0
  %3082 = vmatprep.subr.mxu0 0.0
  %3083 = vmatpush1.msra.mxu0 0.0
  %3084 = vmatprep.subr.mxu0 0.0
  %3085 = vmatpush1.msra.mxu0 0.0
  %3086 = vmatprep.subr.mxu0 0.0
  %3087 = vmatpush1.msra.mxu0 0.0
  %3088 = vmatprep.subr.mxu0 0.0
  %3089 = vmatpush1.msra.mxu0 0.0
  %3090 = vmatprep.subr.mxu0 0.0
  %3091 = vmatpush1.msra.mxu0 0.0
  %3092 = vmatprep.subr.mxu0 0.0
  %3093 = vmatpush1.msra.mxu0 0.0
  %3094 = vmatprep.subr.mxu0 0.0
  %3095 = vmatpush1.msra.mxu0 0.0
  %3096 = vmatprep.subr.mxu0 0.0
  %3097 = vmatpush1.msra.mxu0 0.0
  %3098 = vmatprep.subr.mxu0 0.0
  %3099 = vmatpush1.msra.mxu0 0.0
  %3100 = vmatprep.subr.mxu0 0.0
  %3101 = vmatpush1.msra.mxu0 0.0
  %3102 = vmatprep.subr.mxu0 0.0
  %3103 = vmatpush1.msra.mxu0 0.0
  %3104 = vmatprep.subr.mxu0 0.0
  %3105 = vmatpush1.msra.mxu0 0.0
  %3106 = vmatprep.subr.mxu0 0.0
  %3107 = vmatpush1.msra.mxu0 0.0
  %3108 = vmatprep.subr.mxu0 0.0
  %3109 = vmatpush1.msra.mxu0 0.0
  %3110 = vmatprep.subr.mxu0 0.0
  %3111 = vmatpush1.msra.mxu0 0.0
  %3112 = vmatprep.mubr.f32.mxu0 0.0
  %3113 = vmatmul.mubr.f32.gmra.mrb[0].mxu0 %v2889
  %v3114 = vpop.f32.mrb[0].mxu0
  %v3115 = vadd.f32 0.0, %v3114
  %v3116 = vpop.f32.mrb[0].mxu0
  %v3117 = vadd.f32 0.0, %v3116
  %3118 = vmatprep.mubr.f32.mxu0 0.0
  %3119 = vmatmul.mubr.f32.gmra.mrb[0].mxu0 %v2892
  %v3120 = vpop.f32.mrb[0].mxu0
  %v3121 = vadd.f32 0.0, %v3120
  %v3122 = vpop.f32.mrb[0].mxu0
  %v3123 = vadd.f32 0.0, %v3122
  %3124 = vdwg.mxu0
  %3125 = vrot.lane.b32.xlu0 %v2961, 96
  %v3126 = vpop.permute.xlu0 %3125
  %3127 = vrot.lane.b32.xlu0 %v2967, 96
  %v3128 = vpop.permute.xlu0 %3127
  %3129 = vrot.lane.b32.xlu0 %v2963, 96
  %v3130 = vpop.permute.xlu0 %3129
  %3131 = vrot.lane.b32.xlu0 %v2969, 96
  %v3132 = vpop.permute.xlu0 %3131
  %3133 = vrot.lane.b32.xlu0 %v3038, 96
  %v3134 = vpop.permute.xlu0 %3133
  %3135 = vrot.lane.b32.xlu0 %v3044, 96
  %v3136 = vpop.permute.xlu0 %3135
  %3137 = vrot.lane.b32.xlu0 %v3040, 96
  %v3138 = vpop.permute.xlu0 %3137
  %3139 = vrot.lane.b32.xlu0 %v3046, 96
  %v3140 = vpop.permute.xlu0 %3139
  %3141 = vrot.lane.b32.xlu0 %v3115, 96
  %v3142 = vpop.permute.xlu0 %3141
  %3143 = vrot.lane.b32.xlu0 %v3121, 96
  %v3144 = vpop.permute.xlu0 %3143
  %3145 = vrot.lane.b32.xlu0 %v3117, 96
  %v3146 = vpop.permute.xlu0 %3145
  %3147 = vrot.lane.b32.xlu0 %v3123, 96
  %v3148 = vpop.permute.xlu0 %3147
  %v3149 = vsel %vm697, %v3142, %v3146
  %v3150 = vsel %vm697, %v3144, %v3148
  %v3151 = vsel %vm697, %v3138, %v3142
  %v3152 = vsel %vm697, %v3140, %v3144
  %v3153 = vsel %vm697, %v3134, %v3138
  %v3154 = vsel %vm697, %v3136, %v3140
  %v3155 = vsel %vm697, %v3130, %v3134
  %v3156 = vsel %vm697, %v3132, %v3136
  %v3157 = vsel %vm697, %v3126, %v3130
  %v3158 = vsel %vm697, %v3128, %v3132
  %v3159 = vsel %vm697, %v3146, %v3126
  %v3160 = vsel %vm697, %v3148, %v3128
  %v3161 = vld [vmem:[%s6 + $0x10] sm:$0xff]
  %v3162 = vld [vmem:[%s6 + $0x18] sm:$0xff]
  %v3164 = vsel %vm435, %v3161, 0
  %v3167 = vsel %vm435, %v3162, 0
  %3169 = vmatprep.subr.mxu0 %v2805
  %3170 = vmatpush1.msra.mxu0 %v2804
  %3171 = vmatprep.subr.mxu0 %v2811
  %3172 = vmatpush1.msra.mxu0 %v2810
  %3173 = vmatprep.subr.mxu0 %v2817
  %3174 = vmatpush1.msra.mxu0 %v2816
  %3175 = vmatprep.subr.mxu0 %v2823
  %3176 = vmatpush1.msra.mxu0 %v2822
  %3177 = vmatprep.subr.mxu0 %v2829
  %3178 = vmatpush1.msra.mxu0 %v2828
  %3179 = vmatprep.subr.mxu0 %v2835
  %3180 = vmatpush1.msra.mxu0 %v2834
  %3181 = vmatprep.subr.mxu0 %v2841
  %3182 = vmatpush1.msra.mxu0 %v2840
  %3183 = vmatprep.subr.mxu0 %v2847
  %3184 = vmatpush1.msra.mxu0 %v2846
  %3185 = vmatprep.subr.mxu0 %v2853
  %3186 = vmatpush1.msra.mxu0 %v2852
  %3187 = vmatprep.subr.mxu0 %v2859
  %3188 = vmatpush1.msra.mxu0 %v2858
  %3189 = vmatprep.subr.mxu0 %v2865
  %3190 = vmatpush1.msra.mxu0 %v2864
  %3191 = vmatprep.subr.mxu0 %v2871
  %3192 = vmatpush1.msra.mxu0 %v2870
  %3193 = vmatprep.subr.mxu0 %v2877
  %3194 = vmatpush1.msra.mxu0 %v2876
  %3195 = vmatprep.subr.mxu0 %v2883
  %3196 = vmatpush1.msra.mxu0 %v2882
  %3197 = vmatprep.subr.mxu0 0.0
  %3198 = vmatpush1.msra.mxu0 0.0
  %3199 = vmatprep.subr.mxu0 0.0
  %3200 = vmatpush1.msra.mxu0 0.0
  %3201 = vmatprep.subr.mxu0 0.0
  %3202 = vmatpush1.msra.mxu0 0.0
  %3203 = vmatprep.subr.mxu0 0.0
  %3204 = vmatpush1.msra.mxu0 0.0
  %3205 = vmatprep.subr.mxu0 0.0
  %3206 = vmatpush1.msra.mxu0 0.0
  %3207 = vmatprep.subr.mxu0 0.0
  %3208 = vmatpush1.msra.mxu0 0.0
  %3209 = vmatprep.subr.mxu0 0.0
  %3210 = vmatpush1.msra.mxu0 0.0
  %3211 = vmatprep.subr.mxu0 0.0
  %3212 = vmatpush1.msra.mxu0 0.0
  %3213 = vmatprep.subr.mxu0 0.0
  %3214 = vmatpush1.msra.mxu0 0.0
  %3215 = vmatprep.subr.mxu0 0.0
  %3216 = vmatpush1.msra.mxu0 0.0
  %3217 = vmatprep.subr.mxu0 0.0
  %3218 = vmatpush1.msra.mxu0 0.0
  %3219 = vmatprep.subr.mxu0 0.0
  %3220 = vmatpush1.msra.mxu0 0.0
  %3221 = vmatprep.subr.mxu0 0.0
  %3222 = vmatpush1.msra.mxu0 0.0
  %3223 = vmatprep.subr.mxu0 0.0
  %3224 = vmatpush1.msra.mxu0 0.0
  %3225 = vmatprep.subr.mxu0 0.0
  %3226 = vmatpush1.msra.mxu0 0.0
  %3227 = vmatprep.subr.mxu0 0.0
  %3228 = vmatpush1.msra.mxu0 0.0
  %3229 = vmatprep.subr.mxu0 0.0
  %3230 = vmatpush1.msra.mxu0 0.0
  %3231 = vmatprep.subr.mxu0 0.0
  %3232 = vmatpush1.msra.mxu0 0.0
  %3233 = vmatprep.mubr.f32.mxu0 0.0
  %3234 = vmatmul.mubr.f32.gmra.mrb[0].mxu0 %v3164
  %v3235 = vpop.f32.mrb[0].mxu0
  %v3236 = vadd.f32 0.0, %v3235
  %v3237 = vpop.f32.mrb[0].mxu0
  %v3238 = vadd.f32 0.0, %v3237
  %3239 = vmatprep.mubr.f32.mxu0 0.0
  %3240 = vmatmul.mubr.f32.gmra.mrb[0].mxu0 %v3167
  %v3241 = vpop.f32.mrb[0].mxu0
  %v3242 = vadd.f32 0.0, %v3241
  %v3243 = vpop.f32.mrb[0].mxu0
  %v3244 = vadd.f32 0.0, %v3243
  %3245 = vdwg.mxu0
  %3246 = vmatprep.subr.mxu0 %v2807
  %3247 = vmatpush1.msra.mxu0 %v2806
  %3248 = vmatprep.subr.mxu0 %v2813
  %3249 = vmatpush1.msra.mxu0 %v2812
  %3250 = vmatprep.subr.mxu0 %v2819
  %3251 = vmatpush1.msra.mxu0 %v2818
  %3252 = vmatprep.subr.mxu0 %v2825
  %3253 = vmatpush1.msra.mxu0 %v2824
  %3254 = vmatprep.subr.mxu0 %v2831
  %3255 = vmatpush1.msra.mxu0 %v2830
  %3256 = vmatprep.subr.mxu0 %v2837
  %3257 = vmatpush1.msra.mxu0 %v2836
  %3258 = vmatprep.subr.mxu0 %v2843
  %3259 = vmatpush1.msra.mxu0 %v2842
  %3260 = vmatprep.subr.mxu0 %v2849
  %3261 = vmatpush1.msra.mxu0 %v2848
  %3262 = vmatprep.subr.mxu0 %v2855
  %3263 = vmatpush1.msra.mxu0 %v2854
  %3264 = vmatprep.subr.mxu0 %v2861
  %3265 = vmatpush1.msra.mxu0 %v2860
  %3266 = vmatprep.subr.mxu0 %v2867
  %3267 = vmatpush1.msra.mxu0 %v2866
  %3268 = vmatprep.subr.mxu0 %v2873
  %3269 = vmatpush1.msra.mxu0 %v2872
  %3270 = vmatprep.subr.mxu0 %v2879
  %3271 = vmatpush1.msra.mxu0 %v2878
  %3272 = vmatprep.subr.mxu0 %v2885
  %3273 = vmatpush1.msra.mxu0 %v2884
  %3274 = vmatprep.subr.mxu0 0.0
  %3275 = vmatpush1.msra.mxu0 0.0
  %3276 = vmatprep.subr.mxu0 0.0
  %3277 = vmatpush1.msra.mxu0 0.0
  %3278 = vmatprep.subr.mxu0 0.0
  %3279 = vmatpush1.msra.mxu0 0.0
  %3280 = vmatprep.subr.mxu0 0.0
  %3281 = vmatpush1.msra.mxu0 0.0
  %3282 = vmatprep.subr.mxu0 0.0
  %3283 = vmatpush1.msra.mxu0 0.0
  %3284 = vmatprep.subr.mxu0 0.0
  %3285 = vmatpush1.msra.mxu0 0.0
  %3286 = vmatprep.subr.mxu0 0.0
  %3287 = vmatpush1.msra.mxu0 0.0
  %3288 = vmatprep.subr.mxu0 0.0
  %3289 = vmatpush1.msra.mxu0 0.0
  %3290 = vmatprep.subr.mxu0 0.0
  %3291 = vmatpush1.msra.mxu0 0.0
  %3292 = vmatprep.subr.mxu0 0.0
  %3293 = vmatpush1.msra.mxu0 0.0
  %3294 = vmatprep.subr.mxu0 0.0
  %3295 = vmatpush1.msra.mxu0 0.0
  %3296 = vmatprep.subr.mxu0 0.0
  %3297 = vmatpush1.msra.mxu0 0.0
  %3298 = vmatprep.subr.mxu0 0.0
  %3299 = vmatpush1.msra.mxu0 0.0
  %3300 = vmatprep.subr.mxu0 0.0
  %3301 = vmatpush1.msra.mxu0 0.0
  %3302 = vmatprep.subr.mxu0 0.0
  %3303 = vmatpush1.msra.mxu0 0.0
  %3304 = vmatprep.subr.mxu0 0.0
  %3305 = vmatpush1.msra.mxu0 0.0
  %3306 = vmatprep.subr.mxu0 0.0
  %3307 = vmatpush1.msra.mxu0 0.0
  %3308 = vmatprep.subr.mxu0 0.0
  %3309 = vmatpush1.msra.mxu0 0.0
  %3310 = vmatprep.mubr.f32.mxu0 0.0
  %3311 = vmatmul.mubr.f32.gmra.mrb[0].mxu0 %v3164
  %v3312 = vpop.f32.mrb[0].mxu0
  %v3313 = vadd.f32 0.0, %v3312
  %v3314 = vpop.f32.mrb[0].mxu0
  %v3315 = vadd.f32 0.0, %v3314
  %3316 = vmatprep.mubr.f32.mxu0 0.0
  %3317 = vmatmul.mubr.f32.gmra.mrb[0].mxu0 %v3167
  %v3318 = vpop.f32.mrb[0].mxu0
  %v3319 = vadd.f32 0.0, %v3318
  %v3320 = vpop.f32.mrb[0].mxu0
  %v3321 = vadd.f32 0.0, %v3320
  %3322 = vdwg.mxu0
  %3323 = vmatprep.subr.mxu0 %v2809
  %3324 = vmatpush1.msra.mxu0 %v2808
  %3325 = vmatprep.subr.mxu0 %v2815
  %3326 = vmatpush1.msra.mxu0 %v2814
  %3327 = vmatprep.subr.mxu0 %v2821
  %3328 = vmatpush1.msra.mxu0 %v2820
  %3329 = vmatprep.subr.mxu0 %v2827
  %3330 = vmatpush1.msra.mxu0 %v2826
  %3331 = vmatprep.subr.mxu0 %v2833
  %3332 = vmatpush1.msra.mxu0 %v2832
  %3333 = vmatprep.subr.mxu0 %v2839
  %3334 = vmatpush1.msra.mxu0 %v2838
  %3335 = vmatprep.subr.mxu0 %v2845
  %3336 = vmatpush1.msra.mxu0 %v2844
  %3337 = vmatprep.subr.mxu0 %v2851
  %3338 = vmatpush1.msra.mxu0 %v2850
  %3339 = vmatprep.subr.mxu0 %v2857
  %3340 = vmatpush1.msra.mxu0 %v2856
  %3341 = vmatprep.subr.mxu0 %v2863
  %3342 = vmatpush1.msra.mxu0 %v2862
  %3343 = vmatprep.subr.mxu0 %v2869
  %3344 = vmatpush1.msra.mxu0 %v2868
  %3345 = vmatprep.subr.mxu0 %v2875
  %3346 = vmatpush1.msra.mxu0 %v2874
  %3347 = vmatprep.subr.mxu0 %v2881
  %3348 = vmatpush1.msra.mxu0 %v2880
  %3349 = vmatprep.subr.mxu0 %v2887
  %3350 = vmatpush1.msra.mxu0 %v2886
  %3351 = vmatprep.subr.mxu0 0.0
  %3352 = vmatpush1.msra.mxu0 0.0
  %3353 = vmatprep.subr.mxu0 0.0
  %3354 = vmatpush1.msra.mxu0 0.0
  %3355 = vmatprep.subr.mxu0 0.0
  %3356 = vmatpush1.msra.mxu0 0.0
  %3357 = vmatprep.subr.mxu0 0.0
  %3358 = vmatpush1.msra.mxu0 0.0
  %3359 = vmatprep.subr.mxu0 0.0
  %3360 = vmatpush1.msra.mxu0 0.0
  %3361 = vmatprep.subr.mxu0 0.0
  %3362 = vmatpush1.msra.mxu0 0.0
  %3363 = vmatprep.subr.mxu0 0.0
  %3364 = vmatpush1.msra.mxu0 0.0
  %3365 = vmatprep.subr.mxu0 0.0
  %3366 = vmatpush1.msra.mxu0 0.0
  %3367 = vmatprep.subr.mxu0 0.0
  %3368 = vmatpush1.msra.mxu0 0.0
  %3369 = vmatprep.subr.mxu0 0.0
  %3370 = vmatpush1.msra.mxu0 0.0
  %3371 = vmatprep.subr.mxu0 0.0
  %3372 = vmatpush1.msra.mxu0 0.0
  %3373 = vmatprep.subr.mxu0 0.0
  %3374 = vmatpush1.msra.mxu0 0.0
  %3375 = vmatprep.subr.mxu0 0.0
  %3376 = vmatpush1.msra.mxu0 0.0
  %3377 = vmatprep.subr.mxu0 0.0
  %3378 = vmatpush1.msra.mxu0 0.0
  %3379 = vmatprep.subr.mxu0 0.0
  %3380 = vmatpush1.msra.mxu0 0.0
  %3381 = vmatprep.subr.mxu0 0.0
  %3382 = vmatpush1.msra.mxu0 0.0
  %3383 = vmatprep.subr.mxu0 0.0
  %3384 = vmatpush1.msra.mxu0 0.0
  %3385 = vmatprep.subr.mxu0 0.0
  %3386 = vmatpush1.msra.mxu0 0.0
  %3387 = vmatprep.mubr.f32.mxu0 0.0
  %3388 = vmatmul.mubr.f32.gmra.mrb[0].mxu0 %v3164
  %v3389 = vpop.f32.mrb[0].mxu0
  %v3390 = vadd.f32 0.0, %v3389
  %v3391 = vpop.f32.mrb[0].mxu0
  %v3392 = vadd.f32 0.0, %v3391
  %3393 = vmatprep.mubr.f32.mxu0 0.0
  %3394 = vmatmul.mubr.f32.gmra.mrb[0].mxu0 %v3167
  %v3395 = vpop.f32.mrb[0].mxu0
  %v3396 = vadd.f32 0.0, %v3395
  %v3397 = vpop.f32.mrb[0].mxu0
  %v3398 = vadd.f32 0.0, %v3397
  %3399 = vdwg.mxu0
  %3400 = vrot.lane.b32.xlu0 %v3236, 64
  %v3401 = vpop.permute.xlu0 %3400
  %3402 = vrot.lane.b32.xlu0 %v3242, 64
  %v3403 = vpop.permute.xlu0 %3402
  %3404 = vrot.lane.b32.xlu0 %v3238, 64
  %v3405 = vpop.permute.xlu0 %3404
  %3406 = vrot.lane.b32.xlu0 %v3244, 64
  %v3407 = vpop.permute.xlu0 %3406
  %3408 = vrot.lane.b32.xlu0 %v3313, 64
  %v3409 = vpop.permute.xlu0 %3408
  %3410 = vrot.lane.b32.xlu0 %v3319, 64
  %v3411 = vpop.permute.xlu0 %3410
  %3412 = vrot.lane.b32.xlu0 %v3315, 64
  %v3413 = vpop.permute.xlu0 %3412
  %3414 = vrot.lane.b32.xlu0 %v3321, 64
  %v3415 = vpop.permute.xlu0 %3414
  %3416 = vrot.lane.b32.xlu0 %v3390, 64
  %v3417 = vpop.permute.xlu0 %3416
  %3418 = vrot.lane.b32.xlu0 %v3396, 64
  %v3419 = vpop.permute.xlu0 %3418
  %3420 = vrot.lane.b32.xlu0 %v3392, 64
  %v3421 = vpop.permute.xlu0 %3420
  %3422 = vrot.lane.b32.xlu0 %v3398, 64
  %v3423 = vpop.permute.xlu0 %3422
  %v3424 = vsel %vm973, %v3417, %v3421
  %v3425 = vsel %vm973, %v3419, %v3423
  %v3426 = vsel %vm973, %v3413, %v3417
  %v3427 = vsel %vm973, %v3415, %v3419
  %v3428 = vsel %vm973, %v3409, %v3413
  %v3429 = vsel %vm973, %v3411, %v3415
  %v3430 = vsel %vm973, %v3405, %v3409
  %v3431 = vsel %vm973, %v3407, %v3411
  %v3432 = vsel %vm973, %v3401, %v3405
  %v3433 = vsel %vm973, %v3403, %v3407
  %v3434 = vsel %vm973, %v3421, %v3401
  %v3435 = vsel %vm973, %v3423, %v3403
  %v3436 = vadd.f32 %v3159, %v3434
  %v3437 = vadd.f32 %v3157, %v3432
  %v3438 = vadd.f32 %v3155, %v3430
  %v3439 = vadd.f32 %v3153, %v3428
  %v3440 = vadd.f32 %v3151, %v3426
  %v3441 = vadd.f32 %v3149, %v3424
  %v3442 = vadd.f32 %v3160, %v3435
  %v3443 = vadd.f32 %v3158, %v3433
  %v3444 = vadd.f32 %v3156, %v3431
  %v3445 = vadd.f32 %v3154, %v3429
  %v3446 = vadd.f32 %v3152, %v3427
  %v3447 = vadd.f32 %v3150, %v3425
  %v3448 = vld [vmem:[%s6 + $0x20] sm:$0xff]
  %v3449 = vld [vmem:[%s6 + $0x28] sm:$0xff]
  %v3451 = vsel %vm435, %v3448, 0
  %v3454 = vsel %vm435, %v3449, 0
  %3456 = vmatprep.subr.mxu0 %v2805
  %3457 = vmatpush1.msra.mxu0 %v2804
  %3458 = vmatprep.subr.mxu0 %v2811
  %3459 = vmatpush1.msra.mxu0 %v2810
  %3460 = vmatprep.subr.mxu0 %v2817
  %3461 = vmatpush1.msra.mxu0 %v2816
  %3462 = vmatprep.subr.mxu0 %v2823
  %3463 = vmatpush1.msra.mxu0 %v2822
  %3464 = vmatprep.subr.mxu0 %v2829
  %3465 = vmatpush1.msra.mxu0 %v2828
  %3466 = vmatprep.subr.mxu0 %v2835
  %3467 = vmatpush1.msra.mxu0 %v2834
  %3468 = vmatprep.subr.mxu0 %v2841
  %3469 = vmatpush1.msra.mxu0 %v2840
  %3470 = vmatprep.subr.mxu0 %v2847
  %3471 = vmatpush1.msra.mxu0 %v2846
  %3472 = vmatprep.subr.mxu0 %v2853
  %3473 = vmatpush1.msra.mxu0 %v2852
  %3474 = vmatprep.subr.mxu0 %v2859
  %3475 = vmatpush1.msra.mxu0 %v2858
  %3476 = vmatprep.subr.mxu0 %v2865
  %3477 = vmatpush1.msra.mxu0 %v2864
  %3478 = vmatprep.subr.mxu0 %v2871
  %3479 = vmatpush1.msra.mxu0 %v2870
  %3480 = vmatprep.subr.mxu0 %v2877
  %3481 = vmatpush1.msra.mxu0 %v2876
  %3482 = vmatprep.subr.mxu0 %v2883
  %3483 = vmatpush1.msra.mxu0 %v2882
  %3484 = vmatprep.subr.mxu0 0.0
  %3485 = vmatpush1.msra.mxu0 0.0
  %3486 = vmatprep.subr.mxu0 0.0
  %3487 = vmatpush1.msra.mxu0 0.0
  %3488 = vmatprep.subr.mxu0 0.0
  %3489 = vmatpush1.msra.mxu0 0.0
  %3490 = vmatprep.subr.mxu0 0.0
  %3491 = vmatpush1.msra.mxu0 0.0
  %3492 = vmatprep.subr.mxu0 0.0
  %3493 = vmatpush1.msra.mxu0 0.0
  %3494 = vmatprep.subr.mxu0 0.0
  %3495 = vmatpush1.msra.mxu0 0.0
  %3496 = vmatprep.subr.mxu0 0.0
  %3497 = vmatpush1.msra.mxu0 0.0
  %3498 = vmatprep.subr.mxu0 0.0
  %3499 = vmatpush1.msra.mxu0 0.0
  %3500 = vmatprep.subr.mxu0 0.0
  %3501 = vmatpush1.msra.mxu0 0.0
  %3502 = vmatprep.subr.mxu0 0.0
  %3503 = vmatpush1.msra.mxu0 0.0
  %3504 = vmatprep.subr.mxu0 0.0
  %3505 = vmatpush1.msra.mxu0 0.0
  %3506 = vmatprep.subr.mxu0 0.0
  %3507 = vmatpush1.msra.mxu0 0.0
  %3508 = vmatprep.subr.mxu0 0.0
  %3509 = vmatpush1.msra.mxu0 0.0
  %3510 = vmatprep.subr.mxu0 0.0
  %3511 = vmatpush1.msra.mxu0 0.0
  %3512 = vmatprep.subr.mxu0 0.0
  %3513 = vmatpush1.msra.mxu0 0.0
  %3514 = vmatprep.subr.mxu0 0.0
  %3515 = vmatpush1.msra.mxu0 0.0
  %3516 = vmatprep.subr.mxu0 0.0
  %3517 = vmatpush1.msra.mxu0 0.0
  %3518 = vmatprep.subr.mxu0 0.0
  %3519 = vmatpush1.msra.mxu0 0.0
  %3520 = vmatprep.mubr.f32.mxu0 0.0
  %3521 = vmatmul.mubr.f32.gmra.mrb[0].mxu0 %v3451
  %v3522 = vpop.f32.mrb[0].mxu0
  %v3523 = vadd.f32 0.0, %v3522
  %v3524 = vpop.f32.mrb[0].mxu0
  %v3525 = vadd.f32 0.0, %v3524
  %3526 = vmatprep.mubr.f32.mxu0 0.0
  %3527 = vmatmul.mubr.f32.gmra.mrb[0].mxu0 %v3454
  %v3528 = vpop.f32.mrb[0].mxu0
  %v3529 = vadd.f32 0.0, %v3528
  %v3530 = vpop.f32.mrb[0].mxu0
  %v3531 = vadd.f32 0.0, %v3530
  %3532 = vdwg.mxu0
  %3533 = vmatprep.subr.mxu0 %v2807
  %3534 = vmatpush1.msra.mxu0 %v2806
  %3535 = vmatprep.subr.mxu0 %v2813
  %3536 = vmatpush1.msra.mxu0 %v2812
  %3537 = vmatprep.subr.mxu0 %v2819
  %3538 = vmatpush1.msra.mxu0 %v2818
  %3539 = vmatprep.subr.mxu0 %v2825
  %3540 = vmatpush1.msra.mxu0 %v2824
  %3541 = vmatprep.subr.mxu0 %v2831
  %3542 = vmatpush1.msra.mxu0 %v2830
  %3543 = vmatprep.subr.mxu0 %v2837
  %3544 = vmatpush1.msra.mxu0 %v2836
  %3545 = vmatprep.subr.mxu0 %v2843
  %3546 = vmatpush1.msra.mxu0 %v2842
  %3547 = vmatprep.subr.mxu0 %v2849
  %3548 = vmatpush1.msra.mxu0 %v2848
  %3549 = vmatprep.subr.mxu0 %v2855
  %3550 = vmatpush1.msra.mxu0 %v2854
  %3551 = vmatprep.subr.mxu0 %v2861
  %3552 = vmatpush1.msra.mxu0 %v2860
  %3553 = vmatprep.subr.mxu0 %v2867
  %3554 = vmatpush1.msra.mxu0 %v2866
  %3555 = vmatprep.subr.mxu0 %v2873
  %3556 = vmatpush1.msra.mxu0 %v2872
  %3557 = vmatprep.subr.mxu0 %v2879
  %3558 = vmatpush1.msra.mxu0 %v2878
  %3559 = vmatprep.subr.mxu0 %v2885
  %3560 = vmatpush1.msra.mxu0 %v2884
  %3561 = vmatprep.subr.mxu0 0.0
  %3562 = vmatpush1.msra.mxu0 0.0
  %3563 = vmatprep.subr.mxu0 0.0
  %3564 = vmatpush1.msra.mxu0 0.0
  %3565 = vmatprep.subr.mxu0 0.0
  %3566 = vmatpush1.msra.mxu0 0.0
  %3567 = vmatprep.subr.mxu0 0.0
  %3568 = vmatpush1.msra.mxu0 0.0
  %3569 = vmatprep.subr.mxu0 0.0
  %3570 = vmatpush1.msra.mxu0 0.0
  %3571 = vmatprep.subr.mxu0 0.0
  %3572 = vmatpush1.msra.mxu0 0.0
  %3573 = vmatprep.subr.mxu0 0.0
  %3574 = vmatpush1.msra.mxu0 0.0
  %3575 = vmatprep.subr.mxu0 0.0
  %3576 = vmatpush1.msra.mxu0 0.0
  %3577 = vmatprep.subr.mxu0 0.0
  %3578 = vmatpush1.msra.mxu0 0.0
  %3579 = vmatprep.subr.mxu0 0.0
  %3580 = vmatpush1.msra.mxu0 0.0
  %3581 = vmatprep.subr.mxu0 0.0
  %3582 = vmatpush1.msra.mxu0 0.0
  %3583 = vmatprep.subr.mxu0 0.0
  %3584 = vmatpush1.msra.mxu0 0.0
  %3585 = vmatprep.subr.mxu0 0.0
  %3586 = vmatpush1.msra.mxu0 0.0
  %3587 = vmatprep.subr.mxu0 0.0
  %3588 = vmatpush1.msra.mxu0 0.0
  %3589 = vmatprep.subr.mxu0 0.0
  %3590 = vmatpush1.msra.mxu0 0.0
  %3591 = vmatprep.subr.mxu0 0.0
  %3592 = vmatpush1.msra.mxu0 0.0
  %3593 = vmatprep.subr.mxu0 0.0
  %3594 = vmatpush1.msra.mxu0 0.0
  %3595 = vmatprep.subr.mxu0 0.0
  %3596 = vmatpush1.msra.mxu0 0.0
  %3597 = vmatprep.mubr.f32.mxu0 0.0
  %3598 = vmatmul.mubr.f32.gmra.mrb[0].mxu0 %v3451
  %v3599 = vpop.f32.mrb[0].mxu0
  %v3600 = vadd.f32 0.0, %v3599
  %v3601 = vpop.f32.mrb[0].mxu0
  %v3602 = vadd.f32 0.0, %v3601
  %3603 = vmatprep.mubr.f32.mxu0 0.0
  %3604 = vmatmul.mubr.f32.gmra.mrb[0].mxu0 %v3454
  %v3605 = vpop.f32.mrb[0].mxu0
  %v3606 = vadd.f32 0.0, %v3605
  %v3607 = vpop.f32.mrb[0].mxu0
  %v3608 = vadd.f32 0.0, %v3607
  %3609 = vdwg.mxu0
  %3610 = vmatprep.subr.mxu0 %v2809
  %3611 = vmatpush1.msra.mxu0 %v2808
  %3612 = vmatprep.subr.mxu0 %v2815
  %3613 = vmatpush1.msra.mxu0 %v2814
  %3614 = vmatprep.subr.mxu0 %v2821
  %3615 = vmatpush1.msra.mxu0 %v2820
  %3616 = vmatprep.subr.mxu0 %v2827
  %3617 = vmatpush1.msra.mxu0 %v2826
  %3618 = vmatprep.subr.mxu0 %v2833
  %3619 = vmatpush1.msra.mxu0 %v2832
  %3620 = vmatprep.subr.mxu0 %v2839
  %3621 = vmatpush1.msra.mxu0 %v2838
  %3622 = vmatprep.subr.mxu0 %v2845
  %3623 = vmatpush1.msra.mxu0 %v2844
  %3624 = vmatprep.subr.mxu0 %v2851
  %3625 = vmatpush1.msra.mxu0 %v2850
  %3626 = vmatprep.subr.mxu0 %v2857
  %3627 = vmatpush1.msra.mxu0 %v2856
  %3628 = vmatprep.subr.mxu0 %v2863
  %3629 = vmatpush1.msra.mxu0 %v2862
  %3630 = vmatprep.subr.mxu0 %v2869
  %3631 = vmatpush1.msra.mxu0 %v2868
  %3632 = vmatprep.subr.mxu0 %v2875
  %3633 = vmatpush1.msra.mxu0 %v2874
  %3634 = vmatprep.subr.mxu0 %v2881
  %3635 = vmatpush1.msra.mxu0 %v2880
  %3636 = vmatprep.subr.mxu0 %v2887
  %3637 = vmatpush1.msra.mxu0 %v2886
  %3638 = vmatprep.subr.mxu0 0.0
  %3639 = vmatpush1.msra.mxu0 0.0
  %3640 = vmatprep.subr.mxu0 0.0
  %3641 = vmatpush1.msra.mxu0 0.0
  %3642 = vmatprep.subr.mxu0 0.0
  %3643 = vmatpush1.msra.mxu0 0.0
  %3644 = vmatprep.subr.mxu0 0.0
  %3645 = vmatpush1.msra.mxu0 0.0
  %3646 = vmatprep.subr.mxu0 0.0
  %3647 = vmatpush1.msra.mxu0 0.0
  %3648 = vmatprep.subr.mxu0 0.0
  %3649 = vmatpush1.msra.mxu0 0.0
  %3650 = vmatprep.subr.mxu0 0.0
  %3651 = vmatpush1.msra.mxu0 0.0
  %3652 = vmatprep.subr.mxu0 0.0
  %3653 = vmatpush1.msra.mxu0 0.0
  %3654 = vmatprep.subr.mxu0 0.0
  %3655 = vmatpush1.msra.mxu0 0.0
  %3656 = vmatprep.subr.mxu0 0.0
  %3657 = vmatpush1.msra.mxu0 0.0
  %3658 = vmatprep.subr.mxu0 0.0
  %3659 = vmatpush1.msra.mxu0 0.0
  %3660 = vmatprep.subr.mxu0 0.0
  %3661 = vmatpush1.msra.mxu0 0.0
  %3662 = vmatprep.subr.mxu0 0.0
  %3663 = vmatpush1.msra.mxu0 0.0
  %3664 = vmatprep.subr.mxu0 0.0
  %3665 = vmatpush1.msra.mxu0 0.0
  %3666 = vmatprep.subr.mxu0 0.0
  %3667 = vmatpush1.msra.mxu0 0.0
  %3668 = vmatprep.subr.mxu0 0.0
  %3669 = vmatpush1.msra.mxu0 0.0
  %3670 = vmatprep.subr.mxu0 0.0
  %3671 = vmatpush1.msra.mxu0 0.0
  %3672 = vmatprep.subr.mxu0 0.0
  %3673 = vmatpush1.msra.mxu0 0.0
  %3674 = vmatprep.mubr.f32.mxu0 0.0
  %3675 = vmatmul.mubr.f32.gmra.mrb[0].mxu0 %v3451
  %v3676 = vpop.f32.mrb[0].mxu0
  %v3677 = vadd.f32 0.0, %v3676
  %v3678 = vpop.f32.mrb[0].mxu0
  %v3679 = vadd.f32 0.0, %v3678
  %3680 = vmatprep.mubr.f32.mxu0 0.0
  %3681 = vmatmul.mubr.f32.gmra.mrb[0].mxu0 %v3454
  %v3682 = vpop.f32.mrb[0].mxu0
  %v3683 = vadd.f32 0.0, %v3682
  %v3684 = vpop.f32.mrb[0].mxu0
  %v3685 = vadd.f32 0.0, %v3684
  %3686 = vdwg.mxu0
  %3687 = vrot.lane.b32.xlu0 %v3523, 32
  %v3688 = vpop.permute.xlu0 %3687
  %3689 = vrot.lane.b32.xlu0 %v3529, 32
  %v3690 = vpop.permute.xlu0 %3689
  %3691 = vrot.lane.b32.xlu0 %v3525, 32
  %v3692 = vpop.permute.xlu0 %3691
  %3693 = vrot.lane.b32.xlu0 %v3531, 32
  %v3694 = vpop.permute.xlu0 %3693
  %3695 = vrot.lane.b32.xlu0 %v3600, 32
  %v3696 = vpop.permute.xlu0 %3695
  %3697 = vrot.lane.b32.xlu0 %v3606, 32
  %v3698 = vpop.permute.xlu0 %3697
  %3699 = vrot.lane.b32.xlu0 %v3602, 32
  %v3700 = vpop.permute.xlu0 %3699
  %3701 = vrot.lane.b32.xlu0 %v3608, 32
  %v3702 = vpop.permute.xlu0 %3701
  %3703 = vrot.lane.b32.xlu0 %v3677, 32
  %v3704 = vpop.permute.xlu0 %3703
  %3705 = vrot.lane.b32.xlu0 %v3683, 32
  %v3706 = vpop.permute.xlu0 %3705
  %3707 = vrot.lane.b32.xlu0 %v3679, 32
  %v3708 = vpop.permute.xlu0 %3707
  %3709 = vrot.lane.b32.xlu0 %v3685, 32
  %v3710 = vpop.permute.xlu0 %3709
  %v3711 = vsel %vm1261, %v3704, %v3708
  %v3712 = vsel %vm1261, %v3706, %v3710
  %v3713 = vsel %vm1261, %v3700, %v3704
  %v3714 = vsel %vm1261, %v3702, %v3706
  %v3715 = vsel %vm1261, %v3696, %v3700
  %v3716 = vsel %vm1261, %v3698, %v3702
  %v3717 = vsel %vm1261, %v3692, %v3696
  %v3718 = vsel %vm1261, %v3694, %v3698
  %v3719 = vsel %vm1261, %v3688, %v3692
  %v3720 = vsel %vm1261, %v3690, %v3694
  %v3721 = vsel %vm1261, %v3708, %v3688
  %v3722 = vsel %vm1261, %v3710, %v3690
  %v3723 = vadd.f32 %v3436, %v3721
  %v3724 = vadd.f32 %v3437, %v3719
  %v3725 = vadd.f32 %v3438, %v3717
  %v3726 = vadd.f32 %v3439, %v3715
  %v3727 = vadd.f32 %v3440, %v3713
  %v3728 = vadd.f32 %v3441, %v3711
  %v3729 = vadd.f32 %v3442, %v3722
  %v3730 = vadd.f32 %v3443, %v3720
  %v3731 = vadd.f32 %v3444, %v3718
  %v3732 = vadd.f32 %v3445, %v3716
  %v3733 = vadd.f32 %v3446, %v3714
  %v3734 = vadd.f32 %v3447, %v3712
  %v3735 = vld [vmem:[%s6 + $0x30] sm:$0xff]
  %v3736 = vld [vmem:[%s6 + $0x38] sm:$0xff]
  %v3738 = vsel %vm435, %v3735, 0
  %v3741 = vsel %vm435, %v3736, 0
  %3743 = vmatprep.subr.mxu0 %v2805
  %3744 = vmatpush1.msra.mxu0 %v2804
  %3745 = vmatprep.subr.mxu0 %v2811
  %3746 = vmatpush1.msra.mxu0 %v2810
  %3747 = vmatprep.subr.mxu0 %v2817
  %3748 = vmatpush1.msra.mxu0 %v2816
  %3749 = vmatprep.subr.mxu0 %v2823
  %3750 = vmatpush1.msra.mxu0 %v2822
  %3751 = vmatprep.subr.mxu0 %v2829
  %3752 = vmatpush1.msra.mxu0 %v2828
  %3753 = vmatprep.subr.mxu0 %v2835
  %3754 = vmatpush1.msra.mxu0 %v2834
  %3755 = vmatprep.subr.mxu0 %v2841
  %3756 = vmatpush1.msra.mxu0 %v2840
  %3757 = vmatprep.subr.mxu0 %v2847
  %3758 = vmatpush1.msra.mxu0 %v2846
  %3759 = vmatprep.subr.mxu0 %v2853
  %3760 = vmatpush1.msra.mxu0 %v2852
  %3761 = vmatprep.subr.mxu0 %v2859
  %3762 = vmatpush1.msra.mxu0 %v2858
  %3763 = vmatprep.subr.mxu0 %v2865
  %3764 = vmatpush1.msra.mxu0 %v2864
  %3765 = vmatprep.subr.mxu0 %v2871
  %3766 = vmatpush1.msra.mxu0 %v2870
  %3767 = vmatprep.subr.mxu0 %v2877
  %3768 = vmatpush1.msra.mxu0 %v2876
  %3769 = vmatprep.subr.mxu0 %v2883
  %3770 = vmatpush1.msra.mxu0 %v2882
  %3771 = vmatprep.subr.mxu0 0.0
  %3772 = vmatpush1.msra.mxu0 0.0
  %3773 = vmatprep.subr.mxu0 0.0
  %3774 = vmatpush1.msra.mxu0 0.0
  %3775 = vmatprep.subr.mxu0 0.0
  %3776 = vmatpush1.msra.mxu0 0.0
  %3777 = vmatprep.subr.mxu0 0.0
  %3778 = vmatpush1.msra.mxu0 0.0
  %3779 = vmatprep.subr.mxu0 0.0
  %3780 = vmatpush1.msra.mxu0 0.0
  %3781 = vmatprep.subr.mxu0 0.0
  %3782 = vmatpush1.msra.mxu0 0.0
  %3783 = vmatprep.subr.mxu0 0.0
  %3784 = vmatpush1.msra.mxu0 0.0
  %3785 = vmatprep.subr.mxu0 0.0
  %3786 = vmatpush1.msra.mxu0 0.0
  %3787 = vmatprep.subr.mxu0 0.0
  %3788 = vmatpush1.msra.mxu0 0.0
  %3789 = vmatprep.subr.mxu0 0.0
  %3790 = vmatpush1.msra.mxu0 0.0
  %3791 = vmatprep.subr.mxu0 0.0
  %3792 = vmatpush1.msra.mxu0 0.0
  %3793 = vmatprep.subr.mxu0 0.0
  %3794 = vmatpush1.msra.mxu0 0.0
  %3795 = vmatprep.subr.mxu0 0.0
  %3796 = vmatpush1.msra.mxu0 0.0
  %3797 = vmatprep.subr.mxu0 0.0
  %3798 = vmatpush1.msra.mxu0 0.0
  %3799 = vmatprep.subr.mxu0 0.0
  %3800 = vmatpush1.msra.mxu0 0.0
  %3801 = vmatprep.subr.mxu0 0.0
  %3802 = vmatpush1.msra.mxu0 0.0
  %3803 = vmatprep.subr.mxu0 0.0
  %3804 = vmatpush1.msra.mxu0 0.0
  %3805 = vmatprep.subr.mxu0 0.0
  %3806 = vmatpush1.msra.mxu0 0.0
  %3807 = vmatprep.mubr.f32.mxu0 0.0
  %3808 = vmatmul.mubr.f32.gmra.mrb[0].mxu0 %v3738
  %v3809 = vpop.f32.mrb[0].mxu0
  %v3810 = vadd.f32 0.0, %v3809
  %v3811 = vpop.f32.mrb[0].mxu0
  %v3812 = vadd.f32 0.0, %v3811
  %3813 = vmatprep.mubr.f32.mxu0 0.0
  %3814 = vmatmul.mubr.f32.gmra.mrb[0].mxu0 %v3741
  %v3815 = vpop.f32.mrb[0].mxu0
  %v3816 = vadd.f32 0.0, %v3815
  %v3817 = vpop.f32.mrb[0].mxu0
  %v3818 = vadd.f32 0.0, %v3817
  %3819 = vdwg.mxu0
  %3820 = vmatprep.subr.mxu0 %v2807
  %3821 = vmatpush1.msra.mxu0 %v2806
  %3822 = vmatprep.subr.mxu0 %v2813
  %3823 = vmatpush1.msra.mxu0 %v2812
  %3824 = vmatprep.subr.mxu0 %v2819
  %3825 = vmatpush1.msra.mxu0 %v2818
  %3826 = vmatprep.subr.mxu0 %v2825
  %3827 = vmatpush1.msra.mxu0 %v2824
  %3828 = vmatprep.subr.mxu0 %v2831
  %3829 = vmatpush1.msra.mxu0 %v2830
  %3830 = vmatprep.subr.mxu0 %v2837
  %3831 = vmatpush1.msra.mxu0 %v2836
  %3832 = vmatprep.subr.mxu0 %v2843
  %3833 = vmatpush1.msra.mxu0 %v2842
  %3834 = vmatprep.subr.mxu0 %v2849
  %3835 = vmatpush1.msra.mxu0 %v2848
  %3836 = vmatprep.subr.mxu0 %v2855
  %3837 = vmatpush1.msra.mxu0 %v2854
  %3838 = vmatprep.subr.mxu0 %v2861
  %3839 = vmatpush1.msra.mxu0 %v2860
  %3840 = vmatprep.subr.mxu0 %v2867
  %3841 = vmatpush1.msra.mxu0 %v2866
  %3842 = vmatprep.subr.mxu0 %v2873
  %3843 = vmatpush1.msra.mxu0 %v2872
  %3844 = vmatprep.subr.mxu0 %v2879
  %3845 = vmatpush1.msra.mxu0 %v2878
  %3846 = vmatprep.subr.mxu0 %v2885
  %3847 = vmatpush1.msra.mxu0 %v2884
  %3848 = vmatprep.subr.mxu0 0.0
  %3849 = vmatpush1.msra.mxu0 0.0
  %3850 = vmatprep.subr.mxu0 0.0
  %3851 = vmatpush1.msra.mxu0 0.0
  %3852 = vmatprep.subr.mxu0 0.0
  %3853 = vmatpush1.msra.mxu0 0.0
  %3854 = vmatprep.subr.mxu0 0.0
  %3855 = vmatpush1.msra.mxu0 0.0
  %3856 = vmatprep.subr.mxu0 0.0
  %3857 = vmatpush1.msra.mxu0 0.0
  %3858 = vmatprep.subr.mxu0 0.0
  %3859 = vmatpush1.msra.mxu0 0.0
  %3860 = vmatprep.subr.mxu0 0.0
  %3861 = vmatpush1.msra.mxu0 0.0
  %3862 = vmatprep.subr.mxu0 0.0
  %3863 = vmatpush1.msra.mxu0 0.0
  %3864 = vmatprep.subr.mxu0 0.0
  %3865 = vmatpush1.msra.mxu0 0.0
  %3866 = vmatprep.subr.mxu0 0.0
  %3867 = vmatpush1.msra.mxu0 0.0
  %3868 = vmatprep.subr.mxu0 0.0
  %3869 = vmatpush1.msra.mxu0 0.0
  %3870 = vmatprep.subr.mxu0 0.0
  %3871 = vmatpush1.msra.mxu0 0.0
  %3872 = vmatprep.subr.mxu0 0.0
  %3873 = vmatpush1.msra.mxu0 0.0
  %3874 = vmatprep.subr.mxu0 0.0
  %3875 = vmatpush1.msra.mxu0 0.0
  %3876 = vmatprep.subr.mxu0 0.0
  %3877 = vmatpush1.msra.mxu0 0.0
  %3878 = vmatprep.subr.mxu0 0.0
  %3879 = vmatpush1.msra.mxu0 0.0
  %3880 = vmatprep.subr.mxu0 0.0
  %3881 = vmatpush1.msra.mxu0 0.0
  %3882 = vmatprep.subr.mxu0 0.0
  %3883 = vmatpush1.msra.mxu0 0.0
  %3884 = vmatprep.mubr.f32.mxu0 0.0
  %3885 = vmatmul.mubr.f32.gmra.mrb[0].mxu0 %v3738
  %v3886 = vpop.f32.mrb[0].mxu0
  %v3887 = vadd.f32 0.0, %v3886
  %v3888 = vpop.f32.mrb[0].mxu0
  %v3889 = vadd.f32 0.0, %v3888
  %3890 = vmatprep.mubr.f32.mxu0 0.0
  %3891 = vmatmul.mubr.f32.gmra.mrb[0].mxu0 %v3741
  %v3892 = vpop.f32.mrb[0].mxu0
  %v3893 = vadd.f32 0.0, %v3892
  %v3894 = vpop.f32.mrb[0].mxu0
  %v3895 = vadd.f32 0.0, %v3894
  %3896 = vdwg.mxu0
  %3897 = vmatprep.subr.mxu0 %v2809
  %3898 = vmatpush1.msra.mxu0 %v2808
  %3899 = vmatprep.subr.mxu0 %v2815
  %3900 = vmatpush1.msra.mxu0 %v2814
  %3901 = vmatprep.subr.mxu0 %v2821
  %3902 = vmatpush1.msra.mxu0 %v2820
  %3903 = vmatprep.subr.mxu0 %v2827
  %3904 = vmatpush1.msra.mxu0 %v2826
  %3905 = vmatprep.subr.mxu0 %v2833
  %3906 = vmatpush1.msra.mxu0 %v2832
  %3907 = vmatprep.subr.mxu0 %v2839
  %3908 = vmatpush1.msra.mxu0 %v2838
  %3909 = vmatprep.subr.mxu0 %v2845
  %3910 = vmatpush1.msra.mxu0 %v2844
  %3911 = vmatprep.subr.mxu0 %v2851
  %3912 = vmatpush1.msra.mxu0 %v2850
  %3913 = vmatprep.subr.mxu0 %v2857
  %3914 = vmatpush1.msra.mxu0 %v2856
  %3915 = vmatprep.subr.mxu0 %v2863
  %3916 = vmatpush1.msra.mxu0 %v2862
  %3917 = vmatprep.subr.mxu0 %v2869
  %3918 = vmatpush1.msra.mxu0 %v2868
  %3919 = vmatprep.subr.mxu0 %v2875
  %3920 = vmatpush1.msra.mxu0 %v2874
  %3921 = vmatprep.subr.mxu0 %v2881
  %3922 = vmatpush1.msra.mxu0 %v2880
  %3923 = vmatprep.subr.mxu0 %v2887
  %3924 = vmatpush1.msra.mxu0 %v2886
  %3925 = vmatprep.subr.mxu0 0.0
  %3926 = vmatpush1.msra.mxu0 0.0
  %3927 = vmatprep.subr.mxu0 0.0
  %3928 = vmatpush1.msra.mxu0 0.0
  %3929 = vmatprep.subr.mxu0 0.0
  %3930 = vmatpush1.msra.mxu0 0.0
  %3931 = vmatprep.subr.mxu0 0.0
  %3932 = vmatpush1.msra.mxu0 0.0
  %3933 = vmatprep.subr.mxu0 0.0
  %3934 = vmatpush1.msra.mxu0 0.0
  %3935 = vmatprep.subr.mxu0 0.0
  %3936 = vmatpush1.msra.mxu0 0.0
  %3937 = vmatprep.subr.mxu0 0.0
  %3938 = vmatpush1.msra.mxu0 0.0
  %3939 = vmatprep.subr.mxu0 0.0
  %3940 = vmatpush1.msra.mxu0 0.0
  %3941 = vmatprep.subr.mxu0 0.0
  %3942 = vmatpush1.msra.mxu0 0.0
  %3943 = vmatprep.subr.mxu0 0.0
  %3944 = vmatpush1.msra.mxu0 0.0
  %3945 = vmatprep.subr.mxu0 0.0
  %3946 = vmatpush1.msra.mxu0 0.0
  %3947 = vmatprep.subr.mxu0 0.0
  %3948 = vmatpush1.msra.mxu0 0.0
  %3949 = vmatprep.subr.mxu0 0.0
  %3950 = vmatpush1.msra.mxu0 0.0
  %3951 = vmatprep.subr.mxu0 0.0
  %3952 = vmatpush1.msra.mxu0 0.0
  %3953 = vmatprep.subr.mxu0 0.0
  %3954 = vmatpush1.msra.mxu0 0.0
  %3955 = vmatprep.subr.mxu0 0.0
  %3956 = vmatpush1.msra.mxu0 0.0
  %3957 = vmatprep.subr.mxu0 0.0
  %3958 = vmatpush1.msra.mxu0 0.0
  %3959 = vmatprep.subr.mxu0 0.0
  %3960 = vmatpush1.msra.mxu0 0.0
  %3961 = vmatprep.mubr.f32.mxu0 0.0
  %3962 = vmatmul.mubr.f32.gmra.mrb[0].mxu0 %v3738
  %v3963 = vpop.f32.mrb[0].mxu0
  %v3964 = vadd.f32 0.0, %v3963
  %v3965 = vpop.f32.mrb[0].mxu0
  %v3966 = vadd.f32 0.0, %v3965
  %3967 = vmatprep.mubr.f32.mxu0 0.0
  %3968 = vmatmul.mubr.f32.gmra.mrb[0].mxu0 %v3741
  %v3969 = vpop.f32.mrb[0].mxu0
  %v3970 = vadd.f32 0.0, %v3969
  %v3971 = vpop.f32.mrb[0].mxu0
  %v3972 = vadd.f32 0.0, %v3971
  %3973 = vdwg.mxu0
  %v3974 = vadd.f32 %v3723, %v3810
  %v3975 = vadd.f32 %v3724, %v3812
  %v3976 = vadd.f32 %v3725, %v3887
  %v3977 = vadd.f32 %v3726, %v3889
  %v3978 = vadd.f32 %v3727, %v3964
  %v3979 = vadd.f32 %v3728, %v3966
  %v3980 = vadd.f32 %v3729, %v3816
  %v3981 = vadd.f32 %v3730, %v3818
  %v3982 = vadd.f32 %v3731, %v3893
  %v3983 = vadd.f32 %v3732, %v3895
  %v3984 = vadd.f32 %v3733, %v3970
  %v3985 = vadd.f32 %v3734, %v3972
  %v3986 = vld [vmem:[%s6 + $0x40] sm:$0xff]
  %v3987 = vld [vmem:[%s6 + $0x48] sm:$0xff]
  %v3989 = vsel %vm435, %v3986, 0
  %v3992 = vsel %vm435, %v3987, 0
  %3994 = vmatprep.subr.mxu0 %v2805
  %3995 = vmatpush1.msra.mxu0 %v2804
  %3996 = vmatprep.subr.mxu0 %v2811
  %3997 = vmatpush1.msra.mxu0 %v2810
  %3998 = vmatprep.subr.mxu0 %v2817
  %3999 = vmatpush1.msra.mxu0 %v2816
  %4000 = vmatprep.subr.mxu0 %v2823
  %4001 = vmatpush1.msra.mxu0 %v2822
  %4002 = vmatprep.subr.mxu0 %v2829
  %4003 = vmatpush1.msra.mxu0 %v2828
  %4004 = vmatprep.subr.mxu0 %v2835
  %4005 = vmatpush1.msra.mxu0 %v2834
  %4006 = vmatprep.subr.mxu0 %v2841
  %4007 = vmatpush1.msra.mxu0 %v2840
  %4008 = vmatprep.subr.mxu0 %v2847
  %4009 = vmatpush1.msra.mxu0 %v2846
  %4010 = vmatprep.subr.mxu0 %v2853
  %4011 = vmatpush1.msra.mxu0 %v2852
  %4012 = vmatprep.subr.mxu0 %v2859
  %4013 = vmatpush1.msra.mxu0 %v2858
  %4014 = vmatprep.subr.mxu0 %v2865
  %4015 = vmatpush1.msra.mxu0 %v2864
  %4016 = vmatprep.subr.mxu0 %v2871
  %4017 = vmatpush1.msra.mxu0 %v2870
  %4018 = vmatprep.subr.mxu0 %v2877
  %4019 = vmatpush1.msra.mxu0 %v2876
  %4020 = vmatprep.subr.mxu0 %v2883
  %4021 = vmatpush1.msra.mxu0 %v2882
  %4022 = vmatprep.subr.mxu0 0.0
  %4023 = vmatpush1.msra.mxu0 0.0
  %4024 = vmatprep.subr.mxu0 0.0
  %4025 = vmatpush1.msra.mxu0 0.0
  %4026 = vmatprep.subr.mxu0 0.0
  %4027 = vmatpush1.msra.mxu0 0.0
  %4028 = vmatprep.subr.mxu0 0.0
  %4029 = vmatpush1.msra.mxu0 0.0
  %4030 = vmatprep.subr.mxu0 0.0
  %4031 = vmatpush1.msra.mxu0 0.0
  %4032 = vmatprep.subr.mxu0 0.0
  %4033 = vmatpush1.msra.mxu0 0.0
  %4034 = vmatprep.subr.mxu0 0.0
  %4035 = vmatpush1.msra.mxu0 0.0
  %4036 = vmatprep.subr.mxu0 0.0
  %4037 = vmatpush1.msra.mxu0 0.0
  %4038 = vmatprep.subr.mxu0 0.0
  %4039 = vmatpush1.msra.mxu0 0.0
  %4040 = vmatprep.subr.mxu0 0.0
  %4041 = vmatpush1.msra.mxu0 0.0
  %4042 = vmatprep.subr.mxu0 0.0
  %4043 = vmatpush1.msra.mxu0 0.0
  %4044 = vmatprep.subr.mxu0 0.0
  %4045 = vmatpush1.msra.mxu0 0.0
  %4046 = vmatprep.subr.mxu0 0.0
  %4047 = vmatpush1.msra.mxu0 0.0
  %4048 = vmatprep.subr.mxu0 0.0
  %4049 = vmatpush1.msra.mxu0 0.0
  %4050 = vmatprep.subr.mxu0 0.0
  %4051 = vmatpush1.msra.mxu0 0.0
  %4052 = vmatprep.subr.mxu0 0.0
  %4053 = vmatpush1.msra.mxu0 0.0
  %4054 = vmatprep.subr.mxu0 0.0
  %4055 = vmatpush1.msra.mxu0 0.0
  %4056 = vmatprep.subr.mxu0 0.0
  %4057 = vmatpush1.msra.mxu0 0.0
  %4058 = vmatprep.mubr.f32.mxu0 0.0
  %4059 = vmatmul.mubr.f32.gmra.mrb[0].mxu0 %v3989
  %v4060 = vpop.f32.mrb[0].mxu0
  %v4061 = vadd.f32 0.0, %v4060
  %v4062 = vpop.f32.mrb[0].mxu0
  %v4063 = vadd.f32 0.0, %v4062
  %4064 = vmatprep.mubr.f32.mxu0 0.0
  %4065 = vmatmul.mubr.f32.gmra.mrb[0].mxu0 %v3992
  %v4066 = vpop.f32.mrb[0].mxu0
  %v4067 = vadd.f32 0.0, %v4066
  %v4068 = vpop.f32.mrb[0].mxu0
  %v4069 = vadd.f32 0.0, %v4068
  %4070 = vdwg.mxu0
  %4071 = vmatprep.subr.mxu0 %v2807
  %4072 = vmatpush1.msra.mxu0 %v2806
  %4073 = vmatprep.subr.mxu0 %v2813
  %4074 = vmatpush1.msra.mxu0 %v2812
  %4075 = vmatprep.subr.mxu0 %v2819
  %4076 = vmatpush1.msra.mxu0 %v2818
  %4077 = vmatprep.subr.mxu0 %v2825
  %4078 = vmatpush1.msra.mxu0 %v2824
  %4079 = vmatprep.subr.mxu0 %v2831
  %4080 = vmatpush1.msra.mxu0 %v2830
  %4081 = vmatprep.subr.mxu0 %v2837
  %4082 = vmatpush1.msra.mxu0 %v2836
  %4083 = vmatprep.subr.mxu0 %v2843
  %4084 = vmatpush1.msra.mxu0 %v2842
  %4085 = vmatprep.subr.mxu0 %v2849
  %4086 = vmatpush1.msra.mxu0 %v2848
  %4087 = vmatprep.subr.mxu0 %v2855
  %4088 = vmatpush1.msra.mxu0 %v2854
  %4089 = vmatprep.subr.mxu0 %v2861
  %4090 = vmatpush1.msra.mxu0 %v2860
  %4091 = vmatprep.subr.mxu0 %v2867
  %4092 = vmatpush1.msra.mxu0 %v2866
  %4093 = vmatprep.subr.mxu0 %v2873
  %4094 = vmatpush1.msra.mxu0 %v2872
  %4095 = vmatprep.subr.mxu0 %v2879
  %4096 = vmatpush1.msra.mxu0 %v2878
  %4097 = vmatprep.subr.mxu0 %v2885
  %4098 = vmatpush1.msra.mxu0 %v2884
  %4099 = vmatprep.subr.mxu0 0.0
  %4100 = vmatpush1.msra.mxu0 0.0
  %4101 = vmatprep.subr.mxu0 0.0
  %4102 = vmatpush1.msra.mxu0 0.0
  %4103 = vmatprep.subr.mxu0 0.0
  %4104 = vmatpush1.msra.mxu0 0.0
  %4105 = vmatprep.subr.mxu0 0.0
  %4106 = vmatpush1.msra.mxu0 0.0
  %4107 = vmatprep.subr.mxu0 0.0
  %4108 = vmatpush1.msra.mxu0 0.0
  %4109 = vmatprep.subr.mxu0 0.0
  %4110 = vmatpush1.msra.mxu0 0.0
  %4111 = vmatprep.subr.mxu0 0.0
  %4112 = vmatpush1.msra.mxu0 0.0
  %4113 = vmatprep.subr.mxu0 0.0
  %4114 = vmatpush1.msra.mxu0 0.0
  %4115 = vmatprep.subr.mxu0 0.0
  %4116 = vmatpush1.msra.mxu0 0.0
  %4117 = vmatprep.subr.mxu0 0.0
  %4118 = vmatpush1.msra.mxu0 0.0
  %4119 = vmatprep.subr.mxu0 0.0
  %4120 = vmatpush1.msra.mxu0 0.0
  %4121 = vmatprep.subr.mxu0 0.0
  %4122 = vmatpush1.msra.mxu0 0.0
  %4123 = vmatprep.subr.mxu0 0.0
  %4124 = vmatpush1.msra.mxu0 0.0
  %4125 = vmatprep.subr.mxu0 0.0
  %4126 = vmatpush1.msra.mxu0 0.0
  %4127 = vmatprep.subr.mxu0 0.0
  %4128 = vmatpush1.msra.mxu0 0.0
  %4129 = vmatprep.subr.mxu0 0.0
  %4130 = vmatpush1.msra.mxu0 0.0
  %4131 = vmatprep.subr.mxu0 0.0
  %4132 = vmatpush1.msra.mxu0 0.0
  %4133 = vmatprep.subr.mxu0 0.0
  %4134 = vmatpush1.msra.mxu0 0.0
  %4135 = vmatprep.mubr.f32.mxu0 0.0
  %4136 = vmatmul.mubr.f32.gmra.mrb[0].mxu0 %v3989
  %v4137 = vpop.f32.mrb[0].mxu0
  %v4138 = vadd.f32 0.0, %v4137
  %v4139 = vpop.f32.mrb[0].mxu0
  %v4140 = vadd.f32 0.0, %v4139
  %4141 = vmatprep.mubr.f32.mxu0 0.0
  %4142 = vmatmul.mubr.f32.gmra.mrb[0].mxu0 %v3992
  %v4143 = vpop.f32.mrb[0].mxu0
  %v4144 = vadd.f32 0.0, %v4143
  %v4145 = vpop.f32.mrb[0].mxu0
  %v4146 = vadd.f32 0.0, %v4145
  %4147 = vdwg.mxu0
  %4148 = vmatprep.subr.mxu0 %v2809
  %4149 = vmatpush1.msra.mxu0 %v2808
  %4150 = vmatprep.subr.mxu0 %v2815
  %4151 = vmatpush1.msra.mxu0 %v2814
  %4152 = vmatprep.subr.mxu0 %v2821
  %4153 = vmatpush1.msra.mxu0 %v2820
  %4154 = vmatprep.subr.mxu0 %v2827
  %4155 = vmatpush1.msra.mxu0 %v2826
  %4156 = vmatprep.subr.mxu0 %v2833
  %4157 = vmatpush1.msra.mxu0 %v2832
  %4158 = vmatprep.subr.mxu0 %v2839
  %4159 = vmatpush1.msra.mxu0 %v2838
  %4160 = vmatprep.subr.mxu0 %v2845
  %4161 = vmatpush1.msra.mxu0 %v2844
  %4162 = vmatprep.subr.mxu0 %v2851
  %4163 = vmatpush1.msra.mxu0 %v2850
  %4164 = vmatprep.subr.mxu0 %v2857
  %4165 = vmatpush1.msra.mxu0 %v2856
  %4166 = vmatprep.subr.mxu0 %v2863
  %4167 = vmatpush1.msra.mxu0 %v2862
  %4168 = vmatprep.subr.mxu0 %v2869
  %4169 = vmatpush1.msra.mxu0 %v2868
  %4170 = vmatprep.subr.mxu0 %v2875
  %4171 = vmatpush1.msra.mxu0 %v2874
  %4172 = vmatprep.subr.mxu0 %v2881
  %4173 = vmatpush1.msra.mxu0 %v2880
  %4174 = vmatprep.subr.mxu0 %v2887
  %4175 = vmatpush1.msra.mxu0 %v2886
  %4176 = vmatprep.subr.mxu0 0.0
  %4177 = vmatpush1.msra.mxu0 0.0
  %4178 = vmatprep.subr.mxu0 0.0
  %4179 = vmatpush1.msra.mxu0 0.0
  %4180 = vmatprep.subr.mxu0 0.0
  %4181 = vmatpush1.msra.mxu0 0.0
  %4182 = vmatprep.subr.mxu0 0.0
  %4183 = vmatpush1.msra.mxu0 0.0
  %4184 = vmatprep.subr.mxu0 0.0
  %4185 = vmatpush1.msra.mxu0 0.0
  %4186 = vmatprep.subr.mxu0 0.0
  %4187 = vmatpush1.msra.mxu0 0.0
  %4188 = vmatprep.subr.mxu0 0.0
  %4189 = vmatpush1.msra.mxu0 0.0
  %4190 = vmatprep.subr.mxu0 0.0
  %4191 = vmatpush1.msra.mxu0 0.0
  %4192 = vmatprep.subr.mxu0 0.0
  %4193 = vmatpush1.msra.mxu0 0.0
  %4194 = vmatprep.subr.mxu0 0.0
  %4195 = vmatpush1.msra.mxu0 0.0
  %4196 = vmatprep.subr.mxu0 0.0
  %4197 = vmatpush1.msra.mxu0 0.0
  %4198 = vmatprep.subr.mxu0 0.0
  %4199 = vmatpush1.msra.mxu0 0.0
  %4200 = vmatprep.subr.mxu0 0.0
  %4201 = vmatpush1.msra.mxu0 0.0
  %4202 = vmatprep.subr.mxu0 0.0
  %4203 = vmatpush1.msra.mxu0 0.0
  %4204 = vmatprep.subr.mxu0 0.0
  %4205 = vmatpush1.msra.mxu0 0.0
  %4206 = vmatprep.subr.mxu0 0.0
  %4207 = vmatpush1.msra.mxu0 0.0
  %4208 = vmatprep.subr.mxu0 0.0
  %4209 = vmatpush1.msra.mxu0 0.0
  %4210 = vmatprep.subr.mxu0 0.0
  %4211 = vmatpush1.msra.mxu0 0.0
  %4212 = vmatprep.mubr.f32.mxu0 0.0
  %4213 = vmatmul.mubr.f32.gmra.mrb[0].mxu0 %v3989
  %v4214 = vpop.f32.mrb[0].mxu0
  %v4215 = vadd.f32 0.0, %v4214
  %v4216 = vpop.f32.mrb[0].mxu0
  %v4217 = vadd.f32 0.0, %v4216
  %4218 = vmatprep.mubr.f32.mxu0 0.0
  %4219 = vmatmul.mubr.f32.gmra.mrb[0].mxu0 %v3992
  %v4220 = vpop.f32.mrb[0].mxu0
  %v4221 = vadd.f32 0.0, %v4220
  %v4222 = vpop.f32.mrb[0].mxu0
  %v4223 = vadd.f32 0.0, %v4222
  %4224 = vdwg.mxu0
  %4225 = vrot.lane.b32.xlu0 %v4061, 96
  %v4226 = vpop.permute.xlu0 %4225
  %4227 = vrot.lane.b32.xlu0 %v4067, 96
  %v4228 = vpop.permute.xlu0 %4227
  %4229 = vrot.lane.b32.xlu0 %v4063, 96
  %v4230 = vpop.permute.xlu0 %4229
  %4231 = vrot.lane.b32.xlu0 %v4069, 96
  %v4232 = vpop.permute.xlu0 %4231
  %4233 = vrot.lane.b32.xlu0 %v4138, 96
  %v4234 = vpop.permute.xlu0 %4233
  %4235 = vrot.lane.b32.xlu0 %v4144, 96
  %v4236 = vpop.permute.xlu0 %4235
  %4237 = vrot.lane.b32.xlu0 %v4140, 96
  %v4238 = vpop.permute.xlu0 %4237
  %4239 = vrot.lane.b32.xlu0 %v4146, 96
  %v4240 = vpop.permute.xlu0 %4239
  %4241 = vrot.lane.b32.xlu0 %v4215, 96
  %v4242 = vpop.permute.xlu0 %4241
  %4243 = vrot.lane.b32.xlu0 %v4221, 96
  %v4244 = vpop.permute.xlu0 %4243
  %4245 = vrot.lane.b32.xlu0 %v4217, 96
  %v4246 = vpop.permute.xlu0 %4245
  %4247 = vrot.lane.b32.xlu0 %v4223, 96
  %v4248 = vpop.permute.xlu0 %4247
  %v4249 = vsel %vm697, %v4242, %v4246
  %v4250 = vsel %vm697, %v4244, %v4248
  %v4251 = vsel %vm697, %v4238, %v4242
  %v4252 = vsel %vm697, %v4240, %v4244
  %v4253 = vsel %vm697, %v4234, %v4238
  %v4254 = vsel %vm697, %v4236, %v4240
  %v4255 = vsel %vm697, %v4230, %v4234
  %v4256 = vsel %vm697, %v4232, %v4236
  %v4257 = vsel %vm697, %v4226, %v4230
  %v4258 = vsel %vm697, %v4228, %v4232
  %v4259 = vsel %vm697, %v4246, %v4226
  %v4260 = vsel %vm697, %v4248, %v4228
  %v4261 = vadd.f32 %v3974, %v4257
  %v4262 = vadd.f32 %v3975, %v4255
  %v4263 = vadd.f32 %v3976, %v4253
  %v4264 = vadd.f32 %v3977, %v4251
  %v4265 = vadd.f32 %v3978, %v4249
  %v4266 = vadd.f32 %v3979, %v4259
  %v4267 = vadd.f32 %v3980, %v4258
  %v4268 = vadd.f32 %v3981, %v4256
  %v4269 = vadd.f32 %v3982, %v4254
  %v4270 = vadd.f32 %v3983, %v4252
  %v4271 = vadd.f32 %v3984, %v4250
  %v4272 = vadd.f32 %v3985, %v4260
  %v4273 = vld [vmem:[%s6 + $0x50] sm:$0xff]
  %v4274 = vld [vmem:[%s6 + $0x58] sm:$0xff]
  %v4276 = vsel %vm435, %v4273, 0
  %v4279 = vsel %vm435, %v4274, 0
  %4281 = vmatprep.subr.mxu0 %v2805
  %4282 = vmatpush1.msra.mxu0 %v2804
  %4283 = vmatprep.subr.mxu0 %v2811
  %4284 = vmatpush1.msra.mxu0 %v2810
  %4285 = vmatprep.subr.mxu0 %v2817
  %4286 = vmatpush1.msra.mxu0 %v2816
  %4287 = vmatprep.subr.mxu0 %v2823
  %4288 = vmatpush1.msra.mxu0 %v2822
  %4289 = vmatprep.subr.mxu0 %v2829
  %4290 = vmatpush1.msra.mxu0 %v2828
  %4291 = vmatprep.subr.mxu0 %v2835
  %4292 = vmatpush1.msra.mxu0 %v2834
  %4293 = vmatprep.subr.mxu0 %v2841
  %4294 = vmatpush1.msra.mxu0 %v2840
  %4295 = vmatprep.subr.mxu0 %v2847
  %4296 = vmatpush1.msra.mxu0 %v2846
  %4297 = vmatprep.subr.mxu0 %v2853
  %4298 = vmatpush1.msra.mxu0 %v2852
  %4299 = vmatprep.subr.mxu0 %v2859
  %4300 = vmatpush1.msra.mxu0 %v2858
  %4301 = vmatprep.subr.mxu0 %v2865
  %4302 = vmatpush1.msra.mxu0 %v2864
  %4303 = vmatprep.subr.mxu0 %v2871
  %4304 = vmatpush1.msra.mxu0 %v2870
  %4305 = vmatprep.subr.mxu0 %v2877
  %4306 = vmatpush1.msra.mxu0 %v2876
  %4307 = vmatprep.subr.mxu0 %v2883
  %4308 = vmatpush1.msra.mxu0 %v2882
  %4309 = vmatprep.subr.mxu0 0.0
  %4310 = vmatpush1.msra.mxu0 0.0
  %4311 = vmatprep.subr.mxu0 0.0
  %4312 = vmatpush1.msra.mxu0 0.0
  %4313 = vmatprep.subr.mxu0 0.0
  %4314 = vmatpush1.msra.mxu0 0.0
  %4315 = vmatprep.subr.mxu0 0.0
  %4316 = vmatpush1.msra.mxu0 0.0
  %4317 = vmatprep.subr.mxu0 0.0
  %4318 = vmatpush1.msra.mxu0 0.0
  %4319 = vmatprep.subr.mxu0 0.0
  %4320 = vmatpush1.msra.mxu0 0.0
  %4321 = vmatprep.subr.mxu0 0.0
  %4322 = vmatpush1.msra.mxu0 0.0
  %4323 = vmatprep.subr.mxu0 0.0
  %4324 = vmatpush1.msra.mxu0 0.0
  %4325 = vmatprep.subr.mxu0 0.0
  %4326 = vmatpush1.msra.mxu0 0.0
  %4327 = vmatprep.subr.mxu0 0.0
  %4328 = vmatpush1.msra.mxu0 0.0
  %4329 = vmatprep.subr.mxu0 0.0
  %4330 = vmatpush1.msra.mxu0 0.0
  %4331 = vmatprep.subr.mxu0 0.0
  %4332 = vmatpush1.msra.mxu0 0.0
  %4333 = vmatprep.subr.mxu0 0.0
  %4334 = vmatpush1.msra.mxu0 0.0
  %4335 = vmatprep.subr.mxu0 0.0
  %4336 = vmatpush1.msra.mxu0 0.0
  %4337 = vmatprep.subr.mxu0 0.0
  %4338 = vmatpush1.msra.mxu0 0.0
  %4339 = vmatprep.subr.mxu0 0.0
  %4340 = vmatpush1.msra.mxu0 0.0
  %4341 = vmatprep.subr.mxu0 0.0
  %4342 = vmatpush1.msra.mxu0 0.0
  %4343 = vmatprep.subr.mxu0 0.0
  %4344 = vmatpush1.msra.mxu0 0.0
  %4345 = vmatprep.mubr.f32.mxu0 0.0
  %4346 = vmatmul.mubr.f32.gmra.mrb[0].mxu0 %v4276
  %v4347 = vpop.f32.mrb[0].mxu0
  %v4348 = vadd.f32 0.0, %v4347
  %v4349 = vpop.f32.mrb[0].mxu0
  %v4350 = vadd.f32 0.0, %v4349
  %4351 = vmatprep.mubr.f32.mxu0 0.0
  %4352 = vmatmul.mubr.f32.gmra.mrb[0].mxu0 %v4279
  %v4353 = vpop.f32.mrb[0].mxu0
  %v4354 = vadd.f32 0.0, %v4353
  %v4355 = vpop.f32.mrb[0].mxu0
  %v4356 = vadd.f32 0.0, %v4355
  %4357 = vdwg.mxu0
  %4358 = vmatprep.subr.mxu0 %v2807
  %4359 = vmatpush1.msra.mxu0 %v2806
  %4360 = vmatprep.subr.mxu0 %v2813
  %4361 = vmatpush1.msra.mxu0 %v2812
  %4362 = vmatprep.subr.mxu0 %v2819
  %4363 = vmatpush1.msra.mxu0 %v2818
  %4364 = vmatprep.subr.mxu0 %v2825
  %4365 = vmatpush1.msra.mxu0 %v2824
  %4366 = vmatprep.subr.mxu0 %v2831
  %4367 = vmatpush1.msra.mxu0 %v2830
  %4368 = vmatprep.subr.mxu0 %v2837
  %4369 = vmatpush1.msra.mxu0 %v2836
  %4370 = vmatprep.subr.mxu0 %v2843
  %4371 = vmatpush1.msra.mxu0 %v2842
  %4372 = vmatprep.subr.mxu0 %v2849
  %4373 = vmatpush1.msra.mxu0 %v2848
  %4374 = vmatprep.subr.mxu0 %v2855
  %4375 = vmatpush1.msra.mxu0 %v2854
  %4376 = vmatprep.subr.mxu0 %v2861
  %4377 = vmatpush1.msra.mxu0 %v2860
  %4378 = vmatprep.subr.mxu0 %v2867
  %4379 = vmatpush1.msra.mxu0 %v2866
  %4380 = vmatprep.subr.mxu0 %v2873
  %4381 = vmatpush1.msra.mxu0 %v2872
  %4382 = vmatprep.subr.mxu0 %v2879
  %4383 = vmatpush1.msra.mxu0 %v2878
  %4384 = vmatprep.subr.mxu0 %v2885
  %4385 = vmatpush1.msra.mxu0 %v2884
  %4386 = vmatprep.subr.mxu0 0.0
  %4387 = vmatpush1.msra.mxu0 0.0
  %4388 = vmatprep.subr.mxu0 0.0
  %4389 = vmatpush1.msra.mxu0 0.0
  %4390 = vmatprep.subr.mxu0 0.0
  %4391 = vmatpush1.msra.mxu0 0.0
  %4392 = vmatprep.subr.mxu0 0.0
  %4393 = vmatpush1.msra.mxu0 0.0
  %4394 = vmatprep.subr.mxu0 0.0
  %4395 = vmatpush1.msra.mxu0 0.0
  %4396 = vmatprep.subr.mxu0 0.0
  %4397 = vmatpush1.msra.mxu0 0.0
  %4398 = vmatprep.subr.mxu0 0.0
  %4399 = vmatpush1.msra.mxu0 0.0
  %4400 = vmatprep.subr.mxu0 0.0
  %4401 = vmatpush1.msra.mxu0 0.0
  %4402 = vmatprep.subr.mxu0 0.0
  %4403 = vmatpush1.msra.mxu0 0.0
  %4404 = vmatprep.subr.mxu0 0.0
  %4405 = vmatpush1.msra.mxu0 0.0
  %4406 = vmatprep.subr.mxu0 0.0
  %4407 = vmatpush1.msra.mxu0 0.0
  %4408 = vmatprep.subr.mxu0 0.0
  %4409 = vmatpush1.msra.mxu0 0.0
  %4410 = vmatprep.subr.mxu0 0.0
  %4411 = vmatpush1.msra.mxu0 0.0
  %4412 = vmatprep.subr.mxu0 0.0
  %4413 = vmatpush1.msra.mxu0 0.0
  %4414 = vmatprep.subr.mxu0 0.0
  %4415 = vmatpush1.msra.mxu0 0.0
  %4416 = vmatprep.subr.mxu0 0.0
  %4417 = vmatpush1.msra.mxu0 0.0
  %4418 = vmatprep.subr.mxu0 0.0
  %4419 = vmatpush1.msra.mxu0 0.0
  %4420 = vmatprep.subr.mxu0 0.0
  %4421 = vmatpush1.msra.mxu0 0.0
  %4422 = vmatprep.mubr.f32.mxu0 0.0
  %4423 = vmatmul.mubr.f32.gmra.mrb[0].mxu0 %v4276
  %v4424 = vpop.f32.mrb[0].mxu0
  %v4425 = vadd.f32 0.0, %v4424
  %v4426 = vpop.f32.mrb[0].mxu0
  %v4427 = vadd.f32 0.0, %v4426
  %4428 = vmatprep.mubr.f32.mxu0 0.0
  %4429 = vmatmul.mubr.f32.gmra.mrb[0].mxu0 %v4279
  %v4430 = vpop.f32.mrb[0].mxu0
  %v4431 = vadd.f32 0.0, %v4430
  %v4432 = vpop.f32.mrb[0].mxu0
  %v4433 = vadd.f32 0.0, %v4432
  %4434 = vdwg.mxu0
  %4435 = vmatprep.subr.mxu0 %v2809
  %4436 = vmatpush1.msra.mxu0 %v2808
  %4437 = vmatprep.subr.mxu0 %v2815
  %4438 = vmatpush1.msra.mxu0 %v2814
  %4439 = vmatprep.subr.mxu0 %v2821
  %4440 = vmatpush1.msra.mxu0 %v2820
  %4441 = vmatprep.subr.mxu0 %v2827
  %4442 = vmatpush1.msra.mxu0 %v2826
  %4443 = vmatprep.subr.mxu0 %v2833
  %4444 = vmatpush1.msra.mxu0 %v2832
  %4445 = vmatprep.subr.mxu0 %v2839
  %4446 = vmatpush1.msra.mxu0 %v2838
  %4447 = vmatprep.subr.mxu0 %v2845
  %4448 = vmatpush1.msra.mxu0 %v2844
  %4449 = vmatprep.subr.mxu0 %v2851
  %4450 = vmatpush1.msra.mxu0 %v2850
  %4451 = vmatprep.subr.mxu0 %v2857
  %4452 = vmatpush1.msra.mxu0 %v2856
  %4453 = vmatprep.subr.mxu0 %v2863
  %4454 = vmatpush1.msra.mxu0 %v2862
  %4455 = vmatprep.subr.mxu0 %v2869
  %4456 = vmatpush1.msra.mxu0 %v2868
  %4457 = vmatprep.subr.mxu0 %v2875
  %4458 = vmatpush1.msra.mxu0 %v2874
  %4459 = vmatprep.subr.mxu0 %v2881
  %4460 = vmatpush1.msra.mxu0 %v2880
  %4461 = vmatprep.subr.mxu0 %v2887
  %4462 = vmatpush1.msra.mxu0 %v2886
  %4463 = vmatprep.subr.mxu0 0.0
  %4464 = vmatpush1.msra.mxu0 0.0
  %4465 = vmatprep.subr.mxu0 0.0
  %4466 = vmatpush1.msra.mxu0 0.0
  %4467 = vmatprep.subr.mxu0 0.0
  %4468 = vmatpush1.msra.mxu0 0.0
  %4469 = vmatprep.subr.mxu0 0.0
  %4470 = vmatpush1.msra.mxu0 0.0
  %4471 = vmatprep.subr.mxu0 0.0
  %4472 = vmatpush1.msra.mxu0 0.0
  %4473 = vmatprep.subr.mxu0 0.0
  %4474 = vmatpush1.msra.mxu0 0.0
  %4475 = vmatprep.subr.mxu0 0.0
  %4476 = vmatpush1.msra.mxu0 0.0
  %4477 = vmatprep.subr.mxu0 0.0
  %4478 = vmatpush1.msra.mxu0 0.0
  %4479 = vmatprep.subr.mxu0 0.0
  %4480 = vmatpush1.msra.mxu0 0.0
  %4481 = vmatprep.subr.mxu0 0.0
  %4482 = vmatpush1.msra.mxu0 0.0
  %4483 = vmatprep.subr.mxu0 0.0
  %4484 = vmatpush1.msra.mxu0 0.0
  %4485 = vmatprep.subr.mxu0 0.0
  %4486 = vmatpush1.msra.mxu0 0.0
  %4487 = vmatprep.subr.mxu0 0.0
  %4488 = vmatpush1.msra.mxu0 0.0
  %4489 = vmatprep.subr.mxu0 0.0
  %4490 = vmatpush1.msra.mxu0 0.0
  %4491 = vmatprep.subr.mxu0 0.0
  %4492 = vmatpush1.msra.mxu0 0.0
  %4493 = vmatprep.subr.mxu0 0.0
  %4494 = vmatpush1.msra.mxu0 0.0
  %4495 = vmatprep.subr.mxu0 0.0
  %4496 = vmatpush1.msra.mxu0 0.0
  %4497 = vmatprep.subr.mxu0 0.0
  %4498 = vmatpush1.msra.mxu0 0.0
  %4499 = vmatprep.mubr.f32.mxu0 0.0
  %4500 = vmatmul.mubr.f32.gmra.mrb[0].mxu0 %v4276
  %v4501 = vpop.f32.mrb[0].mxu0
  %v4502 = vadd.f32 0.0, %v4501
  %v4503 = vpop.f32.mrb[0].mxu0
  %v4504 = vadd.f32 0.0, %v4503
  %4505 = vmatprep.mubr.f32.mxu0 0.0
  %4506 = vmatmul.mubr.f32.gmra.mrb[0].mxu0 %v4279
  %v4507 = vpop.f32.mrb[0].mxu0
  %v4508 = vadd.f32 0.0, %v4507
  %v4509 = vpop.f32.mrb[0].mxu0
  %v4510 = vadd.f32 0.0, %v4509
  %4511 = vdwg.mxu0
  %4512 = vrot.lane.b32.xlu0 %v4348, 64
  %v4513 = vpop.permute.xlu0 %4512
  %4514 = vrot.lane.b32.xlu0 %v4354, 64
  %v4515 = vpop.permute.xlu0 %4514
  %4516 = vrot.lane.b32.xlu0 %v4350, 64
  %v4517 = vpop.permute.xlu0 %4516
  %4518 = vrot.lane.b32.xlu0 %v4356, 64
  %v4519 = vpop.permute.xlu0 %4518
  %4520 = vrot.lane.b32.xlu0 %v4425, 64
  %v4521 = vpop.permute.xlu0 %4520
  %4522 = vrot.lane.b32.xlu0 %v4431, 64
  %v4523 = vpop.permute.xlu0 %4522
  %4524 = vrot.lane.b32.xlu0 %v4427, 64
  %v4525 = vpop.permute.xlu0 %4524
  %4526 = vrot.lane.b32.xlu0 %v4433, 64
  %v4527 = vpop.permute.xlu0 %4526
  %4528 = vrot.lane.b32.xlu0 %v4502, 64
  %v4529 = vpop.permute.xlu0 %4528
  %4530 = vrot.lane.b32.xlu0 %v4508, 64
  %v4531 = vpop.permute.xlu0 %4530
  %4532 = vrot.lane.b32.xlu0 %v4504, 64
  %v4533 = vpop.permute.xlu0 %4532
  %4534 = vrot.lane.b32.xlu0 %v4510, 64
  %v4535 = vpop.permute.xlu0 %4534
  %v4536 = vsel %vm973, %v4529, %v4533
  %v4537 = vsel %vm973, %v4531, %v4535
  %v4538 = vsel %vm973, %v4525, %v4529
  %v4539 = vsel %vm973, %v4527, %v4531
  %v4540 = vsel %vm973, %v4521, %v4525
  %v4541 = vsel %vm973, %v4523, %v4527
  %v4542 = vsel %vm973, %v4517, %v4521
  %v4543 = vsel %vm973, %v4519, %v4523
  %v4544 = vsel %vm973, %v4513, %v4517
  %v4545 = vsel %vm973, %v4515, %v4519
  %v4546 = vsel %vm973, %v4533, %v4513
  %v4547 = vsel %vm973, %v4535, %v4515
  %v4548 = vadd.f32 %v4261, %v4544
  %v4549 = vadd.f32 %v4262, %v4542
  %v4550 = vadd.f32 %v4263, %v4540
  %v4551 = vadd.f32 %v4264, %v4538
  %v4552 = vadd.f32 %v4265, %v4536
  %v4553 = vadd.f32 %v4266, %v4546
  %v4554 = vadd.f32 %v4267, %v4545
  %v4555 = vadd.f32 %v4268, %v4543
  %v4556 = vadd.f32 %v4269, %v4541
  %v4557 = vadd.f32 %v4270, %v4539
  %v4558 = vadd.f32 %v4271, %v4537
  %v4559 = vadd.f32 %v4272, %v4547
  %v4560 = vld [vmem:[%s6 + $0x60] sm:$0xff]
  %v4561 = vld [vmem:[%s6 + $0x68] sm:$0xff]
  %v4563 = vsel %vm435, %v4560, 0
  %v4566 = vsel %vm435, %v4561, 0
  %4568 = vmatprep.subr.mxu0 %v2805
  %4569 = vmatpush1.msra.mxu0 %v2804
  %4570 = vmatprep.subr.mxu0 %v2811
  %4571 = vmatpush1.msra.mxu0 %v2810
  %4572 = vmatprep.subr.mxu0 %v2817
  %4573 = vmatpush1.msra.mxu0 %v2816
  %4574 = vmatprep.subr.mxu0 %v2823
  %4575 = vmatpush1.msra.mxu0 %v2822
  %4576 = vmatprep.subr.mxu0 %v2829
  %4577 = vmatpush1.msra.mxu0 %v2828
  %4578 = vmatprep.subr.mxu0 %v2835
  %4579 = vmatpush1.msra.mxu0 %v2834
  %4580 = vmatprep.subr.mxu0 %v2841
  %4581 = vmatpush1.msra.mxu0 %v2840
  %4582 = vmatprep.subr.mxu0 %v2847
  %4583 = vmatpush1.msra.mxu0 %v2846
  %4584 = vmatprep.subr.mxu0 %v2853
  %4585 = vmatpush1.msra.mxu0 %v2852
  %4586 = vmatprep.subr.mxu0 %v2859
  %4587 = vmatpush1.msra.mxu0 %v2858
  %4588 = vmatprep.subr.mxu0 %v2865
  %4589 = vmatpush1.msra.mxu0 %v2864
  %4590 = vmatprep.subr.mxu0 %v2871
  %4591 = vmatpush1.msra.mxu0 %v2870
  %4592 = vmatprep.subr.mxu0 %v2877
  %4593 = vmatpush1.msra.mxu0 %v2876
  %4594 = vmatprep.subr.mxu0 %v2883
  %4595 = vmatpush1.msra.mxu0 %v2882
  %4596 = vmatprep.subr.mxu0 0.0
  %4597 = vmatpush1.msra.mxu0 0.0
  %4598 = vmatprep.subr.mxu0 0.0
  %4599 = vmatpush1.msra.mxu0 0.0
  %4600 = vmatprep.subr.mxu0 0.0
  %4601 = vmatpush1.msra.mxu0 0.0
  %4602 = vmatprep.subr.mxu0 0.0
  %4603 = vmatpush1.msra.mxu0 0.0
  %4604 = vmatprep.subr.mxu0 0.0
  %4605 = vmatpush1.msra.mxu0 0.0
  %4606 = vmatprep.subr.mxu0 0.0
  %4607 = vmatpush1.msra.mxu0 0.0
  %4608 = vmatprep.subr.mxu0 0.0
  %4609 = vmatpush1.msra.mxu0 0.0
  %4610 = vmatprep.subr.mxu0 0.0
  %4611 = vmatpush1.msra.mxu0 0.0
  %4612 = vmatprep.subr.mxu0 0.0
  %4613 = vmatpush1.msra.mxu0 0.0
  %4614 = vmatprep.subr.mxu0 0.0
  %4615 = vmatpush1.msra.mxu0 0.0
  %4616 = vmatprep.subr.mxu0 0.0
  %4617 = vmatpush1.msra.mxu0 0.0
  %4618 = vmatprep.subr.mxu0 0.0
  %4619 = vmatpush1.msra.mxu0 0.0
  %4620 = vmatprep.subr.mxu0 0.0
  %4621 = vmatpush1.msra.mxu0 0.0
  %4622 = vmatprep.subr.mxu0 0.0
  %4623 = vmatpush1.msra.mxu0 0.0
  %4624 = vmatprep.subr.mxu0 0.0
  %4625 = vmatpush1.msra.mxu0 0.0
  %4626 = vmatprep.subr.mxu0 0.0
  %4627 = vmatpush1.msra.mxu0 0.0
  %4628 = vmatprep.subr.mxu0 0.0
  %4629 = vmatpush1.msra.mxu0 0.0
  %4630 = vmatprep.subr.mxu0 0.0
  %4631 = vmatpush1.msra.mxu0 0.0
  %4632 = vmatprep.mubr.f32.mxu0 0.0
  %4633 = vmatmul.mubr.f32.gmra.mrb[0].mxu0 %v4563
  %v4634 = vpop.f32.mrb[0].mxu0
  %v4635 = vadd.f32 0.0, %v4634
  %v4636 = vpop.f32.mrb[0].mxu0
  %v4637 = vadd.f32 0.0, %v4636
  %4638 = vmatprep.mubr.f32.mxu0 0.0
  %4639 = vmatmul.mubr.f32.gmra.mrb[0].mxu0 %v4566
  %v4640 = vpop.f32.mrb[0].mxu0
  %v4641 = vadd.f32 0.0, %v4640
  %v4642 = vpop.f32.mrb[0].mxu0
  %v4643 = vadd.f32 0.0, %v4642
  %4644 = vdwg.mxu0
  %4645 = vmatprep.subr.mxu0 %v2807
  %4646 = vmatpush1.msra.mxu0 %v2806
  %4647 = vmatprep.subr.mxu0 %v2813
  %4648 = vmatpush1.msra.mxu0 %v2812
  %4649 = vmatprep.subr.mxu0 %v2819
  %4650 = vmatpush1.msra.mxu0 %v2818
  %4651 = vmatprep.subr.mxu0 %v2825
  %4652 = vmatpush1.msra.mxu0 %v2824
  %4653 = vmatprep.subr.mxu0 %v2831
  %4654 = vmatpush1.msra.mxu0 %v2830
  %4655 = vmatprep.subr.mxu0 %v2837
  %4656 = vmatpush1.msra.mxu0 %v2836
  %4657 = vmatprep.subr.mxu0 %v2843
  %4658 = vmatpush1.msra.mxu0 %v2842
  %4659 = vmatprep.subr.mxu0 %v2849
  %4660 = vmatpush1.msra.mxu0 %v2848
  %4661 = vmatprep.subr.mxu0 %v2855
  %4662 = vmatpush1.msra.mxu0 %v2854
  %4663 = vmatprep.subr.mxu0 %v2861
  %4664 = vmatpush1.msra.mxu0 %v2860
  %4665 = vmatprep.subr.mxu0 %v2867
  %4666 = vmatpush1.msra.mxu0 %v2866
  %4667 = vmatprep.subr.mxu0 %v2873
  %4668 = vmatpush1.msra.mxu0 %v2872
  %4669 = vmatprep.subr.mxu0 %v2879
  %4670 = vmatpush1.msra.mxu0 %v2878
  %4671 = vmatprep.subr.mxu0 %v2885
  %4672 = vmatpush1.msra.mxu0 %v2884
  %4673 = vmatprep.subr.mxu0 0.0
  %4674 = vmatpush1.msra.mxu0 0.0
  %4675 = vmatprep.subr.mxu0 0.0
  %4676 = vmatpush1.msra.mxu0 0.0
  %4677 = vmatprep.subr.mxu0 0.0
  %4678 = vmatpush1.msra.mxu0 0.0
  %4679 = vmatprep.subr.mxu0 0.0
  %4680 = vmatpush1.msra.mxu0 0.0
  %4681 = vmatprep.subr.mxu0 0.0
  %4682 = vmatpush1.msra.mxu0 0.0
  %4683 = vmatprep.subr.mxu0 0.0
  %4684 = vmatpush1.msra.mxu0 0.0
  %4685 = vmatprep.subr.mxu0 0.0
  %4686 = vmatpush1.msra.mxu0 0.0
  %4687 = vmatprep.subr.mxu0 0.0
  %4688 = vmatpush1.msra.mxu0 0.0
  %4689 = vmatprep.subr.mxu0 0.0
  %4690 = vmatpush1.msra.mxu0 0.0
  %4691 = vmatprep.subr.mxu0 0.0
  %4692 = vmatpush1.msra.mxu0 0.0
  %4693 = vmatprep.subr.mxu0 0.0
  %4694 = vmatpush1.msra.mxu0 0.0
  %4695 = vmatprep.subr.mxu0 0.0
  %4696 = vmatpush1.msra.mxu0 0.0
  %4697 = vmatprep.subr.mxu0 0.0
  %4698 = vmatpush1.msra.mxu0 0.0
  %4699 = vmatprep.subr.mxu0 0.0
  %4700 = vmatpush1.msra.mxu0 0.0
  %4701 = vmatprep.subr.mxu0 0.0
  %4702 = vmatpush1.msra.mxu0 0.0
  %4703 = vmatprep.subr.mxu0 0.0
  %4704 = vmatpush1.msra.mxu0 0.0
  %4705 = vmatprep.subr.mxu0 0.0
  %4706 = vmatpush1.msra.mxu0 0.0
  %4707 = vmatprep.subr.mxu0 0.0
  %4708 = vmatpush1.msra.mxu0 0.0
  %4709 = vmatprep.mubr.f32.mxu0 0.0
  %4710 = vmatmul.mubr.f32.gmra.mrb[0].mxu0 %v4563
  %v4711 = vpop.f32.mrb[0].mxu0
  %v4712 = vadd.f32 0.0, %v4711
  %v4713 = vpop.f32.mrb[0].mxu0
  %v4714 = vadd.f32 0.0, %v4713
  %4715 = vmatprep.mubr.f32.mxu0 0.0
  %4716 = vmatmul.mubr.f32.gmra.mrb[0].mxu0 %v4566
  %v4717 = vpop.f32.mrb[0].mxu0
  %v4718 = vadd.f32 0.0, %v4717
  %v4719 = vpop.f32.mrb[0].mxu0
  %v4720 = vadd.f32 0.0, %v4719
  %4721 = vdwg.mxu0
  %4722 = vmatprep.subr.mxu0 %v2809
  %4723 = vmatpush1.msra.mxu0 %v2808
  %4724 = vmatprep.subr.mxu0 %v2815
  %4725 = vmatpush1.msra.mxu0 %v2814
  %4726 = vmatprep.subr.mxu0 %v2821
  %4727 = vmatpush1.msra.mxu0 %v2820
  %4728 = vmatprep.subr.mxu0 %v2827
  %4729 = vmatpush1.msra.mxu0 %v2826
  %4730 = vmatprep.subr.mxu0 %v2833
  %4731 = vmatpush1.msra.mxu0 %v2832
  %4732 = vmatprep.subr.mxu0 %v2839
  %4733 = vmatpush1.msra.mxu0 %v2838
  %4734 = vmatprep.subr.mxu0 %v2845
  %4735 = vmatpush1.msra.mxu0 %v2844
  %4736 = vmatprep.subr.mxu0 %v2851
  %4737 = vmatpush1.msra.mxu0 %v2850
  %4738 = vmatprep.subr.mxu0 %v2857
  %4739 = vmatpush1.msra.mxu0 %v2856
  %4740 = vmatprep.subr.mxu0 %v2863
  %4741 = vmatpush1.msra.mxu0 %v2862
  %4742 = vmatprep.subr.mxu0 %v2869
  %4743 = vmatpush1.msra.mxu0 %v2868
  %4744 = vmatprep.subr.mxu0 %v2875
  %4745 = vmatpush1.msra.mxu0 %v2874
  %4746 = vmatprep.subr.mxu0 %v2881
  %4747 = vmatpush1.msra.mxu0 %v2880
  %4748 = vmatprep.subr.mxu0 %v2887
  %4749 = vmatpush1.msra.mxu0 %v2886
  %4750 = vmatprep.subr.mxu0 0.0
  %4751 = vmatpush1.msra.mxu0 0.0
  %4752 = vmatprep.subr.mxu0 0.0
  %4753 = vmatpush1.msra.mxu0 0.0
  %4754 = vmatprep.subr.mxu0 0.0
  %4755 = vmatpush1.msra.mxu0 0.0
  %4756 = vmatprep.subr.mxu0 0.0
  %4757 = vmatpush1.msra.mxu0 0.0
  %4758 = vmatprep.subr.mxu0 0.0
  %4759 = vmatpush1.msra.mxu0 0.0
  %4760 = vmatprep.subr.mxu0 0.0
  %4761 = vmatpush1.msra.mxu0 0.0
  %4762 = vmatprep.subr.mxu0 0.0
  %4763 = vmatpush1.msra.mxu0 0.0
  %4764 = vmatprep.subr.mxu0 0.0
  %4765 = vmatpush1.msra.mxu0 0.0
  %4766 = vmatprep.subr.mxu0 0.0
  %4767 = vmatpush1.msra.mxu0 0.0
  %4768 = vmatprep.subr.mxu0 0.0
  %4769 = vmatpush1.msra.mxu0 0.0
  %4770 = vmatprep.subr.mxu0 0.0
  %4771 = vmatpush1.msra.mxu0 0.0
  %4772 = vmatprep.subr.mxu0 0.0
  %4773 = vmatpush1.msra.mxu0 0.0
  %4774 = vmatprep.subr.mxu0 0.0
  %4775 = vmatpush1.msra.mxu0 0.0
  %4776 = vmatprep.subr.mxu0 0.0
  %4777 = vmatpush1.msra.mxu0 0.0
  %4778 = vmatprep.subr.mxu0 0.0
  %4779 = vmatpush1.msra.mxu0 0.0
  %4780 = vmatprep.subr.mxu0 0.0
  %4781 = vmatpush1.msra.mxu0 0.0
  %4782 = vmatprep.subr.mxu0 0.0
  %4783 = vmatpush1.msra.mxu0 0.0
  %4784 = vmatprep.subr.mxu0 0.0
  %4785 = vmatpush1.msra.mxu0 0.0
  %4786 = vmatprep.mubr.f32.mxu0 0.0
  %4787 = vmatmul.mubr.f32.gmra.mrb[0].mxu0 %v4563
  %v4788 = vpop.f32.mrb[0].mxu0
  %v4789 = vadd.f32 0.0, %v4788
  %v4790 = vpop.f32.mrb[0].mxu0
  %v4791 = vadd.f32 0.0, %v4790
  %4792 = vmatprep.mubr.f32.mxu0 0.0
  %4793 = vmatmul.mubr.f32.gmra.mrb[0].mxu0 %v4566
  %v4794 = vpop.f32.mrb[0].mxu0
  %v4795 = vadd.f32 0.0, %v4794
  %v4796 = vpop.f32.mrb[0].mxu0
  %v4797 = vadd.f32 0.0, %v4796
  %4798 = vdwg.mxu0
  %4799 = vrot.lane.b32.xlu0 %v4635, 32
  %v4800 = vpop.permute.xlu0 %4799
  %4801 = vrot.lane.b32.xlu0 %v4641, 32
  %v4802 = vpop.permute.xlu0 %4801
  %4803 = vrot.lane.b32.xlu0 %v4637, 32
  %v4804 = vpop.permute.xlu0 %4803
  %4805 = vrot.lane.b32.xlu0 %v4643, 32
  %v4806 = vpop.permute.xlu0 %4805
  %4807 = vrot.lane.b32.xlu0 %v4712, 32
  %v4808 = vpop.permute.xlu0 %4807
  %4809 = vrot.lane.b32.xlu0 %v4718, 32
  %v4810 = vpop.permute.xlu0 %4809
  %4811 = vrot.lane.b32.xlu0 %v4714, 32
  %v4812 = vpop.permute.xlu0 %4811
  %4813 = vrot.lane.b32.xlu0 %v4720, 32
  %v4814 = vpop.permute.xlu0 %4813
  %4815 = vrot.lane.b32.xlu0 %v4789, 32
  %v4816 = vpop.permute.xlu0 %4815
  %4817 = vrot.lane.b32.xlu0 %v4795, 32
  %v4818 = vpop.permute.xlu0 %4817
  %4819 = vrot.lane.b32.xlu0 %v4791, 32
  %v4820 = vpop.permute.xlu0 %4819
  %4821 = vrot.lane.b32.xlu0 %v4797, 32
  %v4822 = vpop.permute.xlu0 %4821
  %v4823 = vsel %vm1261, %v4816, %v4820
  %v4824 = vsel %vm1261, %v4818, %v4822
  %v4825 = vsel %vm1261, %v4812, %v4816
  %v4826 = vsel %vm1261, %v4814, %v4818
  %v4827 = vsel %vm1261, %v4808, %v4812
  %v4828 = vsel %vm1261, %v4810, %v4814
  %v4829 = vsel %vm1261, %v4804, %v4808
  %v4830 = vsel %vm1261, %v4806, %v4810
  %v4831 = vsel %vm1261, %v4800, %v4804
  %v4832 = vsel %vm1261, %v4802, %v4806
  %v4833 = vsel %vm1261, %v4820, %v4800
  %v4834 = vsel %vm1261, %v4822, %v4802
  %v4835 = vadd.f32 %v4548, %v4831
  %v4836 = vadd.f32 %v4549, %v4829
  %v4837 = vadd.f32 %v4550, %v4827
  %v4838 = vadd.f32 %v4551, %v4825
  %v4839 = vadd.f32 %v4552, %v4823
  %v4840 = vadd.f32 %v4553, %v4833
  %v4841 = vadd.f32 %v4554, %v4832
  %v4842 = vadd.f32 %v4555, %v4830
  %v4843 = vadd.f32 %v4556, %v4828
  %v4844 = vadd.f32 %v4557, %v4826
  %v4845 = vadd.f32 %v4558, %v4824
  %v4846 = vadd.f32 %v4559, %v4834
  %v4847 = vld [vmem:[%s7] sm:$0xff]
  %v4848 = vld [vmem:[%s7 + $0x8] sm:$0xff]
  %4850 = vset.pattern.permute.xlu0 0
  %4851 = vperm.xlu0 %4850, %v4847
  %v4852 = vpop.permute.xlu0 %4851
  %4855 = vset.pattern.permute.xlu0 0
  %4856 = vperm.xlu0 %4855, %v4848
  %v4857 = vpop.permute.xlu0 %4856
  %v4859 = vadd.f32 %v4835, %v4852
  %v4860 = vadd.f32 %v4836, %v4852
  %v4861 = vadd.f32 %v4837, %v4852
  %v4862 = vadd.f32 %v4838, %v4852
  %v4863 = vadd.f32 %v4839, %v4852
  %v4864 = vadd.f32 %v4840, %v4852
  %v4865 = vadd.f32 %v4841, %v4857
  %v4866 = vadd.f32 %v4842, %v4857
  %v4867 = vadd.f32 %v4843, %v4857
  %v4868 = vadd.f32 %v4844, %v4857
  %v4869 = vadd.f32 %v4845, %v4857
  %v4870 = vadd.f32 %v4846, %v4857
  %v4871 = vld [vmem:[%s2] sm:$0xff]
  %v4872 = vld [vmem:[%s2 + $0x8] sm:$0xff]
  %v4873 = vld [vmem:[%s2 + $0x10] sm:$0xff]
  %v4874 = vld [vmem:[%s2 + $0x18] sm:$0xff]
  %v4875 = vld [vmem:[%s2 + $0x20] sm:$0xff]
  %v4876 = vld [vmem:[%s2 + $0x28] sm:$0xff]
  %v4877 = vld [vmem:[%s2 + $0x30] sm:$0xff]
  %v4878 = vld [vmem:[%s2 + $0x38] sm:$0xff]
  %v4879 = vld [vmem:[%s2 + $0x40] sm:$0xff]
  %v4880 = vld [vmem:[%s2 + $0x48] sm:$0xff]
  %v4881 = vld [vmem:[%s2 + $0x50] sm:$0xff]
  %v4882 = vld [vmem:[%s2 + $0x58] sm:$0xff]
  %v4883 = vadd.f32 %v4859, %v4871
  %v4884 = vadd.f32 %v4860, %v4872
  %v4885 = vadd.f32 %v4861, %v4873
  %v4886 = vadd.f32 %v4862, %v4874
  %v4887 = vadd.f32 %v4863, %v4875
  %v4888 = vadd.f32 %v4864, %v4876
  %v4889 = vadd.f32 %v4865, %v4877
  %v4890 = vadd.f32 %v4866, %v4878
  %v4891 = vadd.f32 %v4867, %v4879
  %v4892 = vadd.f32 %v4868, %v4880
  %v4893 = vadd.f32 %v4869, %v4881
  %v4894 = vadd.f32 %v4870, %v4882
  %4895 = vst [vmem:[%s8] sm:$0xff] %v4883
  %4896 = vst [vmem:[%s8 + $0x8] sm:$0xff] %v4884
  %4897 = vst [vmem:[%s8 + $0x10] sm:$0xff] %v4885
  %4898 = vst [vmem:[%s8 + $0x18] sm:$0xff] %v4886
  %4899 = vst [vmem:[%s8 + $0x20] sm:$0xff] %v4887
  %4900 = vst [vmem:[%s8 + $0x28] sm:$0xff] %v4888
  %4901 = vst [vmem:[%s8 + $0x30] sm:$0xff] %v4889
  %4902 = vst [vmem:[%s8 + $0x38] sm:$0xff] %v4890
  %4903 = vst [vmem:[%s8 + $0x40] sm:$0xff] %v4891
  %4904 = vst [vmem:[%s8 + $0x48] sm:$0xff] %v4892
  %4905 = vst [vmem:[%s8 + $0x50] sm:$0xff] %v4893
  %4906 = vst [vmem:[%s8 + $0x58] sm:$0xff] %v4894
  // Predicated region
  $region34: #{model_forward.1} parent=0 // pred_check
    _
  $region35: #{model_forward.1} parent=0 // pred_check_branch
    %4908 = sbr.rel (0) target = $region37
  $region36: #{model_forward.1} parent=0 // pred_region
    _
  $region37: #{model_forward.1} parent=0 // pred_fallthru
    _
  // Predicated region
  $region38: #{model_forward.1} parent=0 // pred_check
    _
  $region39: #{model_forward.1} parent=0 // pred_check_branch
    %4910 = sbr.rel (0) target = $region41
  $region40: #{model_forward.1} parent=0 // pred_region
    _
  $region41: #{model_forward.1} parent=0 // pred_fallthru
    _

</llo_original>
